<compile_context>
chip_gen: v6e
topology: v6e:2x2x1
jax: 0.10.0
libtpu: 0.0.40
codegen_flags: <defaults>
</compile_context>

<pallas_src>
import numpy as np
import jax
import jax.numpy as jnp
from jax.experimental import pallas as pl
from jax.experimental.pallas import tpu as pltpu


# --------------------------------------------------------------------------
# helpers
# --------------------------------------------------------------------------
def _pick_tile(n, cap=8):
    """Largest divisor of n that is <= cap."""
    for t in range(min(cap, n), 0, -1):
        if n % t == 0:
            return t
    return 1


def _lerp_taps_np(n_in, n_out):
    """align_corners=True source taps (== nn.UpsamplingBilinear2d)."""
    if n_out == 1:
        src = np.zeros((1,), np.float64)
    else:
        src = np.arange(n_out, dtype=np.float64) * (n_in - 1) / (n_out - 1)
    i0 = np.clip(np.floor(src).astype(np.int32), 0, n_in - 1)
    i1 = np.minimum(i0 + 1, n_in - 1).astype(np.int32)
    frac = (src - i0).astype(np.float32)
    return i0, i1, frac


def _interp_matrix_np(n_in, n_out):
    i0, i1, frac = _lerp_taps_np(n_in, n_out)
    A = np.zeros((n_out, n_in), np.float32)
    A[np.arange(n_out), i0] += 1.0 - frac
    A[np.arange(n_out), i1] += frac
    return A


# --------------------------------------------------------------------------
# Fused [2x bilinear upsample] + [skip concat] + 3x3 conv + folded BN + ReLU
# --------------------------------------------------------------------------
def conv3x3_bn_relu(x, skip, w9, bias, *, upsample=False, tile_cap=8):
    B, H, W, Cx = x.shape
    cout = w9.shape[-1]
    has_skip = skip is not None and skip.shape[-1] > 0
    Cs = skip.shape[-1] if has_skip else 0
    assert w9.shape[1] == Cx + Cs

    Hout, Wout = (2 * H, 2 * W) if upsample else (H, W)
    if has_skip:
        assert skip.shape == (B, Hout, Wout, Cs)

    # Split the weight slab along cin: rows [0, Cx) act on x (channels-first in
    # torch.cat([x, skip], dim=1)), rows [Cx, Cx+Cs) act on the skip feature.
    wx = w9[:, :Cx, :]
    ws = w9[:, Cx:, :] if has_skip else None

    TILE_H = _pick_tile(Hout, tile_cap)
    nT = Hout // TILE_H
    Wp = Wout + 2                       # padded row width
    MM = TILE_H * Wp                    # matmul M (includes 2 junk columns / row)
    SPAD = (TILE_H + 2) * Wp + 2        # flat staging rows (+2 keeps tap slices in-bounds)
    cdt = jnp.bfloat16                  # staging / activation compute dtype

    if upsample:
        i0np, i1np, frnp = _lerp_taps_np(H, Hout)
        i0 = jnp.asarray(i0np)
        i1 = jnp.asarray(i1np)
        fr = jnp.asarray(frnp, jnp.float32)
        aw = jnp.asarray(_interp_matrix_np(W, Wout), jnp.float32)   # (Wout, W)

    def kernel(*refs):
        it = iter(refs)
        if upsample:
            i0_ref, i1_ref, fr_ref = next(it), next(it), next(it)
        x_ref = next(it)
        aw_ref = next(it) if upsample else None
        s_ref = next(it) if has_skip else None
        wx_ref = next(it)
        ws_ref = next(it) if has_skip else None
        b_ref = next(it)
        o_ref = next(it)
        xs_ref = next(it)
        ss_ref = next(it) if has_skip else None
        acc_ref = next(it)

        t = pl.program_id(1)
        r0 = t * TILE_H

        # ---- stage TILE_H + 2 zero-padded rows into the flat scratch -------
        for k in range(TILE_H + 2):                 # static unroll
            src = r0 + (k - 1)                      # output-space row index
            valid = jnp.logical_and(src >= 0, src < Hout)
            sc = jnp.clip(src, 0, Hout - 1)
            base = k * Wp
            if upsample:
                a0 = i0_ref[sc]
                a1 = i1_ref[sc]
                f = fr_ref[sc]
                ra = x_ref[0, a0, :, :].astype(jnp.float32)
                rb = x_ref[0, a1, :, :].astype(jnp.float32)
                lerp = ra + f * (rb - ra)                                 # (W, Cx)
                rowx = jnp.dot(aw_ref[...], lerp,
                               preferred_element_type=jnp.float32)        # (Wout, Cx)
                rowx = (rowx * valid.astype(jnp.float32)).astype(cdt)
            else:
                rowx = (x_ref[0, sc, :, :] * valid.astype(x_ref.dtype)).astype(cdt)
            xs_ref[pl.ds(base, 1), :] = jnp.zeros((1, Cx), cdt)            # left pad
            xs_ref[pl.ds(base + Wout + 1, 1), :] = jnp.zeros((1, Cx), cdt)  # right pad
            xs_ref[pl.ds(base + 1, Wout), :] = rowx
            if has_skip:
                rows = (s_ref[0, sc, :, :] * valid.astype(s_ref.dtype)).astype(cdt)
                ss_ref[pl.ds(base, 1), :] = jnp.zeros((1, Cs), cdt)
                ss_ref[pl.ds(base + Wout + 1, 1), :] = jnp.zeros((1, Cs), cdt)
                ss_ref[pl.ds(base + 1, Wout), :] = rows
        # keep the 2 overrun rows (read by the largest tap offsets) deterministic
        xs_ref[pl.ds((TILE_H + 2) * Wp, 2), :] = jnp.zeros((2, Cx), cdt)
        if has_skip:
            ss_ref[pl.ds((TILE_H + 2) * Wp, 2), :] = jnp.zeros((2, Cs), cdt)

        # ---- 9 (18 with skip) conv taps as big-M MXU matmuls ---------------
        acc_ref[...] = jnp.zeros_like(acc_ref)
        for dy in range(3):
            for dx in range(3):
                off = dy * Wp + dx
                j = dy * 3 + dx
                lhs = xs_ref[pl.ds(off, MM), :]
                acc_ref[...] += jnp.dot(lhs, wx_ref[j],
                                        preferred_element_type=jnp.float32)
                if has_skip:
                    lhs_s = ss_ref[pl.ds(off, MM), :]
                    acc_ref[...] += jnp.dot(lhs_s, ws_ref[j],
                                            preferred_element_type=jnp.float32)

        # ---- bias + ReLU epilogue, per output row (drop the junk columns) --
        for r in range(TILE_H):
            seg = acc_ref[pl.ds(r * Wp, Wout), :]
            o_ref[0, r, :, :] = jnp.maximum(seg + b_ref[...], 0.0).astype(o_ref.dtype)

    in_specs = []
    args = []
    if upsample:
        in_specs += [pl.BlockSpec(memory_space=pltpu.MemorySpace.SMEM)] * 3
        args += [i0, i1, fr]
    in_specs.append(pl.BlockSpec((1, H, W, Cx), lambda b, t: (b, 0, 0, 0)))
    args.append(x)
    if upsample:
        in_specs.append(pl.BlockSpec((Wout, W), lambda b, t: (0, 0)))
        args.append(aw)
    if has_skip:
        in_specs.append(pl.BlockSpec((1, Hout, Wout, Cs), lambda b, t: (b, 0, 0, 0)))
        args.append(skip)
    in_specs.append(pl.BlockSpec((9, Cx, cout), lambda b, t: (0, 0, 0)))
    args.append(wx)
    if has_skip:
        in_specs.append(pl.BlockSpec((9, Cs, cout), lambda b, t: (0, 0, 0)))
        args.append(ws)
    in_specs.append(pl.BlockSpec((1, cout), lambda b, t: (0, 0)))
    args.append(bias)

    scratch = [pltpu.VMEM((SPAD, Cx), cdt)]
    if has_skip:
        scratch.append(pltpu.VMEM((SPAD, Cs), cdt))
    scratch.append(pltpu.VMEM((MM, cout), jnp.float32))

    return pl.pallas_call(
        kernel,
        out_shape=jax.ShapeDtypeStruct((B, Hout, Wout, cout), cdt),
        grid=(B, nT),
        in_specs=in_specs,
        out_specs=pl.BlockSpec((1, TILE_H, Wout, cout), lambda b, t: (b, t, 0, 0)),
        scratch_shapes=scratch,
        compiler_params=pltpu.CompilerParams(
            dimension_semantics=("parallel", "parallel")),
    )(*args)


# --------------------------------------------------------------------------
# Parameter init: Conv2d(no bias) + BatchNorm folded (scale into weights).
# --------------------------------------------------------------------------
def init_conv_bn(key, cin, cout, eps=1e-5):
    kw, kg, kb = jax.random.split(key, 3)
    w = jax.random.normal(kw, (cout, cin, 3, 3), jnp.float32) * np.sqrt(2.0 / (cin * 9))
    gamma = 1.0 + 0.1 * jax.random.normal(kg, (cout,), jnp.float32)
    beta = 0.1 * jax.random.normal(kb, (cout,), jnp.float32)
    running_mean = jnp.zeros((cout,), jnp.float32)
    running_var = jnp.ones((cout,), jnp.float32)
    scale = gamma / jnp.sqrt(running_var + eps)
    bias = beta - running_mean * scale
    # (Cout, Cin, 3, 3) -> (ky, kx, Cin, Cout) -> (9, Cin, Cout); fold BN scale.
    w9 = jnp.transpose(w, (2, 3, 1, 0)).reshape(9, cin, cout) * scale[None, None, :]
    return dict(w9=w9.astype(jnp.bfloat16),
                bias=bias.reshape(1, -1).astype(jnp.float32))


def init_decoder_cup(key, hidden_size, decoder_channels,
                     head_channels=512, skip_channels=(512, 256, 64, 0)):
    n_blocks = len(decoder_channels)
    keys = jax.random.split(key, 1 + 2 * n_blocks)
    conv_more = init_conv_bn(keys[0], hidden_size, head_channels)
    in_channels = [head_channels] + list(decoder_channels[:-1])
    blocks = []
    for i, (ic, oc, sc) in enumerate(zip(in_channels, decoder_channels, skip_channels)):
        conv1 = init_conv_bn(keys[1 + 2 * i], ic + sc, oc)
        conv2 = init_conv_bn(keys[2 + 2 * i], oc, oc)
        blocks.append((conv1, conv2))
    return conv_more, blocks


# --------------------------------------------------------------------------
# DecoderCup forward.
# --------------------------------------------------------------------------
def decoder_cup_forward(params, hidden_states, features):
    conv_more, blocks = params
    B, n_patch, hidden = hidden_states.shape
    h = w = int(np.sqrt(n_patch))
    # == hidden_states.permute(0,2,1).view(B, hidden, h, w), expressed in NHWC.
    x = hidden_states.reshape(B, h, w, hidden).astype(jnp.bfloat16)
    x = conv3x3_bn_relu(x, None, conv_more["w9"], conv_more["bias"], upsample=False)
    feats = [f.astype(jnp.bfloat16) for f in features]
    for i, (c1, c2) in enumerate(blocks):
        skip = feats[i] if i < 3 else None
        # up(2x) + cat(skip) + conv1 + BN + ReLU, fully fused in one kernel
        x = conv3x3_bn_relu(x, skip, c1["w9"], c1["bias"], upsample=True)
        # conv2 + BN + ReLU
        x = conv3x3_bn_relu(x, None, c2["w9"], c2["bias"], upsample=False)
    return x


if __name__ == "__main__":
    key = jax.random.PRNGKey(0)
    B, n_patch, hidden = 2, 16, 32             # h = w = 4
    h = w = int(np.sqrt(n_patch))
    head_channels = 512                        # hardcoded in DecoderCup
    skip_channels = (512, 256, 64, 0)          # hardcoded in DecoderCup
    decoder_channels = (64, 32, 32, 16)        # small config.decoder_channels

    k_hs, k_f0, k_f1, k_f2, k_p = jax.random.split(key, 5)
    hidden_states = jax.random.normal(k_hs, (B, n_patch, hidden), jnp.float32)
    # skip features, already in NHWC (equivalent of NCHW features transposed)
    features = [
        jax.random.normal(k_f0, (B, 2 * h, 2 * w, skip_channels[0]), jnp.float32),
        jax.random.normal(k_f1, (B, 4 * h, 4 * w, skip_channels[1]), jnp.float32),
        jax.random.normal(k_f2, (B, 8 * h, 8 * w, skip_channels[2]), jnp.float32),
    ]

    params = init_decoder_cup(k_p, hidden, decoder_channels,
                              head_channels, skip_channels)

    out = decoder_cup_forward(params, hidden_states, features)
    out = jax.block_until_ready(out)

    assert out.shape == (B, 16 * h, 16 * w, decoder_channels[-1]), out.shape
    assert bool(jnp.isfinite(out.astype(jnp.float32)).all())
    print("KERNEL_OK")
</pallas_src>

<mosaic_0001>
module attributes {stable_mosaic.version = 11 : i64} {
  func.func @kernel(%arg0: i32, %arg1: i32, %arg2: memref<1x4x4x32xbf16, #tpu.memory_space<vmem>>, %arg3: memref<9x32x512xbf16, #tpu.memory_space<vmem>>, %arg4: memref<1x512xf32, #tpu.memory_space<vmem>>, %arg5: memref<1x4x4x512xbf16, #tpu.memory_space<vmem>>, %arg6: memref<38x32xbf16, #tpu.memory_space<vmem>>, %arg7: memref<24x512xf32, #tpu.memory_space<vmem>>) attributes {dimension_semantics = [#tpu.dimension_semantics<parallel>, #tpu.dimension_semantics<parallel>], iteration_bounds = array<i64: 2, 1>, scalar_prefetch = 0 : i64, scratch_operands = 2 : i64, tpu.core_type = #tpu.core_type<tc>, window_params = [{transform_indices = @transform_0, window_bounds = array<i64: 1, 4, 4, 32>}, {pipeline_mode = #tpu.pipeline_mode<synchronous>, transform_indices = @transform_1, window_bounds = array<i64: 9, 32, 512>}, {pipeline_mode = #tpu.pipeline_mode<synchronous>, transform_indices = @transform_2, window_bounds = array<i64: 1, 512>}, {transform_indices = @transform_3, window_bounds = array<i64: 1, 4, 4, 512>}]} {
    %c4_i32 = arith.constant 4 : i32
    %0 = arith.muli %arg1, %c4_i32 : i32
    %c-1_i32 = arith.constant -1 : i32
    %1 = arith.addi %0, %c-1_i32 : i32
    %c0_i32 = arith.constant 0 : i32
    %2 = arith.cmpi sge, %1, %c0_i32 : i32
    %c4_i32_0 = arith.constant 4 : i32
    %3 = arith.cmpi slt, %1, %c4_i32_0 : i32
    %4 = arith.andi %2, %3 : i1
    %c0_i32_1 = arith.constant 0 : i32
    %c3_i32 = arith.constant 3 : i32
    %5 = arith.maxsi %c0_i32_1, %1 : i32
    %6 = arith.minsi %c3_i32, %5 : i32
    %c0 = arith.constant 0 : index
    %7 = arith.index_cast %6 : i32 to index
    %c0_2 = arith.constant 0 : index
    %c0_3 = arith.constant 0 : index
    %8 = vector.load %arg2[%c0, %7, %c0_2, %c0_3] : memref<1x4x4x32xbf16, #tpu.memory_space<vmem>>, vector<1x1x4x32xbf16>
    %9 = vector.shape_cast %8 : vector<1x1x4x32xbf16> to vector<4x32xbf16>
    %10 = arith.extui %4 : i1 to i32
    %11 = arith.sitofp %10 : i32 to f32
    %12 = arith.truncf %11 : f32 to bf16
    %13 = vector.broadcast %12 : bf16 to vector<4x32xbf16>
    %14 = arith.mulf %9, %13 : vector<4x32xbf16>
    %cst = arith.constant 0.000000e+00 : bf16
    %15 = vector.broadcast %cst : bf16 to vector<1x32xbf16>
    %c0_4 = arith.constant 0 : index
    %c0_5 = arith.constant 0 : index
    %16 = vector.load %arg6[%c0_4, %c0_5] : memref<38x32xbf16, #tpu.memory_space<vmem>>, vector<1x32xbf16>
    tpu.vector_store %arg6[%c0_4, %c0_5], %15 {strides = array<i32>} : memref<38x32xbf16, #tpu.memory_space<vmem>>, vector<1x32xbf16>,
    %cst_6 = arith.constant 0.000000e+00 : bf16
    %17 = vector.broadcast %cst_6 : bf16 to vector<1x32xbf16>
    %c5 = arith.constant 5 : index
    %c0_7 = arith.constant 0 : index
    %18 = vector.load %arg6[%c5, %c0_7] : memref<38x32xbf16, #tpu.memory_space<vmem>>, vector<1x32xbf16>
    tpu.vector_store %arg6[%c5, %c0_7], %17 {strides = array<i32>} : memref<38x32xbf16, #tpu.memory_space<vmem>>, vector<1x32xbf16>,
    %c1 = arith.constant 1 : index
    %c0_8 = arith.constant 0 : index
    %19 = vector.load %arg6[%c1, %c0_8] : memref<38x32xbf16, #tpu.memory_space<vmem>>, vector<4x32xbf16>
    tpu.vector_store %arg6[%c1, %c0_8], %14 {strides = array<i32>} : memref<38x32xbf16, #tpu.memory_space<vmem>>, vector<4x32xbf16>,
    %c0_i32_9 = arith.constant 0 : i32
    %20 = arith.addi %0, %c0_i32_9 : i32
    %c0_i32_10 = arith.constant 0 : i32
    %21 = arith.cmpi sge, %20, %c0_i32_10 : i32
    %c4_i32_11 = arith.constant 4 : i32
    %22 = arith.cmpi slt, %20, %c4_i32_11 : i32
    %23 = arith.andi %21, %22 : i1
    %c0_i32_12 = arith.constant 0 : i32
    %c3_i32_13 = arith.constant 3 : i32
    %24 = arith.maxsi %c0_i32_12, %20 : i32
    %25 = arith.minsi %c3_i32_13, %24 : i32
    %c0_14 = arith.constant 0 : index
    %26 = arith.index_cast %25 : i32 to index
    %c0_15 = arith.constant 0 : index
    %c0_16 = arith.constant 0 : index
    %27 = vector.load %arg2[%c0_14, %26, %c0_15, %c0_16] : memref<1x4x4x32xbf16, #tpu.memory_space<vmem>>, vector<1x1x4x32xbf16>
    %28 = vector.shape_cast %27 : vector<1x1x4x32xbf16> to vector<4x32xbf16>
    %29 = arith.extui %23 : i1 to i32
    %30 = arith.sitofp %29 : i32 to f32
    %31 = arith.truncf %30 : f32 to bf16
    %32 = vector.broadcast %31 : bf16 to vector<4x32xbf16>
    %33 = arith.mulf %28, %32 : vector<4x32xbf16>
    %cst_17 = arith.constant 0.000000e+00 : bf16
    %34 = vector.broadcast %cst_17 : bf16 to vector<1x32xbf16>
    %c6 = arith.constant 6 : index
    %c0_18 = arith.constant 0 : index
    %35 = vector.load %arg6[%c6, %c0_18] : memref<38x32xbf16, #tpu.memory_space<vmem>>, vector<1x32xbf16>
    tpu.vector_store %arg6[%c6, %c0_18], %34 {strides = array<i32>} : memref<38x32xbf16, #tpu.memory_space<vmem>>, vector<1x32xbf16>,
    %cst_19 = arith.constant 0.000000e+00 : bf16
    %36 = vector.broadcast %cst_19 : bf16 to vector<1x32xbf16>
    %c11 = arith.constant 11 : index
    %c0_20 = arith.constant 0 : index
    %37 = vector.load %arg6[%c11, %c0_20] : memref<38x32xbf16, #tpu.memory_space<vmem>>, vector<1x32xbf16>
    tpu.vector_store %arg6[%c11, %c0_20], %36 {strides = array<i32>} : memref<38x32xbf16, #tpu.memory_space<vmem>>, vector<1x32xbf16>,
    %c7 = arith.constant 7 : index
    %c0_21 = arith.constant 0 : index
    %38 = vector.load %arg6[%c7, %c0_21] : memref<38x32xbf16, #tpu.memory_space<vmem>>, vector<4x32xbf16>
    tpu.vector_store %arg6[%c7, %c0_21], %33 {strides = array<i32>} : memref<38x32xbf16, #tpu.memory_space<vmem>>, vector<4x32xbf16>,
    %c1_i32 = arith.constant 1 : i32
    %39 = arith.addi %0, %c1_i32 : i32
    %c0_i32_22 = arith.constant 0 : i32
    %40 = arith.cmpi sge, %39, %c0_i32_22 : i32
    %c4_i32_23 = arith.constant 4 : i32
    %41 = arith.cmpi slt, %39, %c4_i32_23 : i32
    %42 = arith.andi %40, %41 : i1
    %c0_i32_24 = arith.constant 0 : i32
    %c3_i32_25 = arith.constant 3 : i32
    %43 = arith.maxsi %c0_i32_24, %39 : i32
    %44 = arith.minsi %c3_i32_25, %43 : i32
    %c0_26 = arith.constant 0 : index
    %45 = arith.index_cast %44 : i32 to index
    %c0_27 = arith.constant 0 : index
    %c0_28 = arith.constant 0 : index
    %46 = vector.load %arg2[%c0_26, %45, %c0_27, %c0_28] : memref<1x4x4x32xbf16, #tpu.memory_space<vmem>>, vector<1x1x4x32xbf16>
    %47 = vector.shape_cast %46 : vector<1x1x4x32xbf16> to vector<4x32xbf16>
    %48 = arith.extui %42 : i1 to i32
    %49 = arith.sitofp %48 : i32 to f32
    %50 = arith.truncf %49 : f32 to bf16
    %51 = vector.broadcast %50 : bf16 to vector<4x32xbf16>
    %52 = arith.mulf %47, %51 : vector<4x32xbf16>
    %cst_29 = arith.constant 0.000000e+00 : bf16
    %53 = vector.broadcast %cst_29 : bf16 to vector<1x32xbf16>
    %c12 = arith.constant 12 : index
    %c0_30 = arith.constant 0 : index
    %54 = vector.load %arg6[%c12, %c0_30] : memref<38x32xbf16, #tpu.memory_space<vmem>>, vector<1x32xbf16>
    tpu.vector_store %arg6[%c12, %c0_30], %53 {strides = array<i32>} : memref<38x32xbf16, #tpu.memory_space<vmem>>, vector<1x32xbf16>,
    %cst_31 = arith.constant 0.000000e+00 : bf16
    %55 = vector.broadcast %cst_31 : bf16 to vector<1x32xbf16>
    %c17 = arith.constant 17 : index
    %c0_32 = arith.constant 0 : index
    %56 = vector.load %arg6[%c17, %c0_32] : memref<38x32xbf16, #tpu.memory_space<vmem>>, vector<1x32xbf16>
    tpu.vector_store %arg6[%c17, %c0_32], %55 {strides = array<i32>} : memref<38x32xbf16, #tpu.memory_space<vmem>>, vector<1x32xbf16>,
    %c13 = arith.constant 13 : index
    %c0_33 = arith.constant 0 : index
    %57 = vector.load %arg6[%c13, %c0_33] : memref<38x32xbf16, #tpu.memory_space<vmem>>, vector<4x32xbf16>
    tpu.vector_store %arg6[%c13, %c0_33], %52 {strides = array<i32>} : memref<38x32xbf16, #tpu.memory_space<vmem>>, vector<4x32xbf16>,
    %c2_i32 = arith.constant 2 : i32
    %58 = arith.addi %0, %c2_i32 : i32
    %c0_i32_34 = arith.constant 0 : i32
    %59 = arith.cmpi sge, %58, %c0_i32_34 : i32
    %c4_i32_35 = arith.constant 4 : i32
    %60 = arith.cmpi slt, %58, %c4_i32_35 : i32
    %61 = arith.andi %59, %60 : i1
    %c0_i32_36 = arith.constant 0 : i32
    %c3_i32_37 = arith.constant 3 : i32
    %62 = arith.maxsi %c0_i32_36, %58 : i32
    %63 = arith.minsi %c3_i32_37, %62 : i32
    %c0_38 = arith.constant 0 : index
    %64 = arith.index_cast %63 : i32 to index
    %c0_39 = arith.constant 0 : index
    %c0_40 = arith.constant 0 : index
    %65 = vector.load %arg2[%c0_38, %64, %c0_39, %c0_40] : memref<1x4x4x32xbf16, #tpu.memory_space<vmem>>, vector<1x1x4x32xbf16>
    %66 = vector.shape_cast %65 : vector<1x1x4x32xbf16> to vector<4x32xbf16>
    %67 = arith.extui %61 : i1 to i32
    %68 = arith.sitofp %67 : i32 to f32
    %69 = arith.truncf %68 : f32 to bf16
    %70 = vector.broadcast %69 : bf16 to vector<4x32xbf16>
    %71 = arith.mulf %66, %70 : vector<4x32xbf16>
    %cst_41 = arith.constant 0.000000e+00 : bf16
    %72 = vector.broadcast %cst_41 : bf16 to vector<1x32xbf16>
    %c18 = arith.constant 18 : index
    %c0_42 = arith.constant 0 : index
    %73 = vector.load %arg6[%c18, %c0_42] : memref<38x32xbf16, #tpu.memory_space<vmem>>, vector<1x32xbf16>
    tpu.vector_store %arg6[%c18, %c0_42], %72 {strides = array<i32>} : memref<38x32xbf16, #tpu.memory_space<vmem>>, vector<1x32xbf16>,
    %cst_43 = arith.constant 0.000000e+00 : bf16
    %74 = vector.broadcast %cst_43 : bf16 to vector<1x32xbf16>
    %c23 = arith.constant 23 : index
    %c0_44 = arith.constant 0 : index
    %75 = vector.load %arg6[%c23, %c0_44] : memref<38x32xbf16, #tpu.memory_space<vmem>>, vector<1x32xbf16>
    tpu.vector_store %arg6[%c23, %c0_44], %74 {strides = array<i32>} : memref<38x32xbf16, #tpu.memory_space<vmem>>, vector<1x32xbf16>,
    %c19 = arith.constant 19 : index
    %c0_45 = arith.constant 0 : index
    %76 = vector.load %arg6[%c19, %c0_45] : memref<38x32xbf16, #tpu.memory_space<vmem>>, vector<4x32xbf16>
    tpu.vector_store %arg6[%c19, %c0_45], %71 {strides = array<i32>} : memref<38x32xbf16, #tpu.memory_space<vmem>>, vector<4x32xbf16>,
    %c3_i32_46 = arith.constant 3 : i32
    %77 = arith.addi %0, %c3_i32_46 : i32
    %c0_i32_47 = arith.constant 0 : i32
    %78 = arith.cmpi sge, %77, %c0_i32_47 : i32
    %c4_i32_48 = arith.constant 4 : i32
    %79 = arith.cmpi slt, %77, %c4_i32_48 : i32
    %80 = arith.andi %78, %79 : i1
    %c0_i32_49 = arith.constant 0 : i32
    %c3_i32_50 = arith.constant 3 : i32
    %81 = arith.maxsi %c0_i32_49, %77 : i32
    %82 = arith.minsi %c3_i32_50, %81 : i32
    %c0_51 = arith.constant 0 : index
    %83 = arith.index_cast %82 : i32 to index
    %c0_52 = arith.constant 0 : index
    %c0_53 = arith.constant 0 : index
    %84 = vector.load %arg2[%c0_51, %83, %c0_52, %c0_53] : memref<1x4x4x32xbf16, #tpu.memory_space<vmem>>, vector<1x1x4x32xbf16>
    %85 = vector.shape_cast %84 : vector<1x1x4x32xbf16> to vector<4x32xbf16>
    %86 = arith.extui %80 : i1 to i32
    %87 = arith.sitofp %86 : i32 to f32
    %88 = arith.truncf %87 : f32 to bf16
    %89 = vector.broadcast %88 : bf16 to vector<4x32xbf16>
    %90 = arith.mulf %85, %89 : vector<4x32xbf16>
    %cst_54 = arith.constant 0.000000e+00 : bf16
    %91 = vector.broadcast %cst_54 : bf16 to vector<1x32xbf16>
    %c24 = arith.constant 24 : index
    %c0_55 = arith.constant 0 : index
    %92 = vector.load %arg6[%c24, %c0_55] : memref<38x32xbf16, #tpu.memory_space<vmem>>, vector<1x32xbf16>
    tpu.vector_store %arg6[%c24, %c0_55], %91 {strides = array<i32>} : memref<38x32xbf16, #tpu.memory_space<vmem>>, vector<1x32xbf16>,
    %cst_56 = arith.constant 0.000000e+00 : bf16
    %93 = vector.broadcast %cst_56 : bf16 to vector<1x32xbf16>
    %c29 = arith.constant 29 : index
    %c0_57 = arith.constant 0 : index
    %94 = vector.load %arg6[%c29, %c0_57] : memref<38x32xbf16, #tpu.memory_space<vmem>>, vector<1x32xbf16>
    tpu.vector_store %arg6[%c29, %c0_57], %93 {strides = array<i32>} : memref<38x32xbf16, #tpu.memory_space<vmem>>, vector<1x32xbf16>,
    %c25 = arith.constant 25 : index
    %c0_58 = arith.constant 0 : index
    %95 = vector.load %arg6[%c25, %c0_58] : memref<38x32xbf16, #tpu.memory_space<vmem>>, vector<4x32xbf16>
    tpu.vector_store %arg6[%c25, %c0_58], %90 {strides = array<i32>} : memref<38x32xbf16, #tpu.memory_space<vmem>>, vector<4x32xbf16>,
    %c4_i32_59 = arith.constant 4 : i32
    %96 = arith.addi %0, %c4_i32_59 : i32
    %c0_i32_60 = arith.constant 0 : i32
    %97 = arith.cmpi sge, %96, %c0_i32_60 : i32
    %c4_i32_61 = arith.constant 4 : i32
    %98 = arith.cmpi slt, %96, %c4_i32_61 : i32
    %99 = arith.andi %97, %98 : i1
    %c0_i32_62 = arith.constant 0 : i32
    %c3_i32_63 = arith.constant 3 : i32
    %100 = arith.maxsi %c0_i32_62, %96 : i32
    %101 = arith.minsi %c3_i32_63, %100 : i32
    %c0_64 = arith.constant 0 : index
    %102 = arith.index_cast %101 : i32 to index
    %c0_65 = arith.constant 0 : index
    %c0_66 = arith.constant 0 : index
    %103 = vector.load %arg2[%c0_64, %102, %c0_65, %c0_66] : memref<1x4x4x32xbf16, #tpu.memory_space<vmem>>, vector<1x1x4x32xbf16>
    %104 = vector.shape_cast %103 : vector<1x1x4x32xbf16> to vector<4x32xbf16>
    %105 = arith.extui %99 : i1 to i32
    %106 = arith.sitofp %105 : i32 to f32
    %107 = arith.truncf %106 : f32 to bf16
    %108 = vector.broadcast %107 : bf16 to vector<4x32xbf16>
    %109 = arith.mulf %104, %108 : vector<4x32xbf16>
    %cst_67 = arith.constant 0.000000e+00 : bf16
    %110 = vector.broadcast %cst_67 : bf16 to vector<1x32xbf16>
    %c30 = arith.constant 30 : index
    %c0_68 = arith.constant 0 : index
    %111 = vector.load %arg6[%c30, %c0_68] : memref<38x32xbf16, #tpu.memory_space<vmem>>, vector<1x32xbf16>
    tpu.vector_store %arg6[%c30, %c0_68], %110 {strides = array<i32>} : memref<38x32xbf16, #tpu.memory_space<vmem>>, vector<1x32xbf16>,
    %cst_69 = arith.constant 0.000000e+00 : bf16
    %112 = vector.broadcast %cst_69 : bf16 to vector<1x32xbf16>
    %c35 = arith.constant 35 : index
    %c0_70 = arith.constant 0 : index
    %113 = vector.load %arg6[%c35, %c0_70] : memref<38x32xbf16, #tpu.memory_space<vmem>>, vector<1x32xbf16>
    tpu.vector_store %arg6[%c35, %c0_70], %112 {strides = array<i32>} : memref<38x32xbf16, #tpu.memory_space<vmem>>, vector<1x32xbf16>,
    %c31 = arith.constant 31 : index
    %c0_71 = arith.constant 0 : index
    %114 = vector.load %arg6[%c31, %c0_71] : memref<38x32xbf16, #tpu.memory_space<vmem>>, vector<4x32xbf16>
    tpu.vector_store %arg6[%c31, %c0_71], %109 {strides = array<i32>} : memref<38x32xbf16, #tpu.memory_space<vmem>>, vector<4x32xbf16>,
    %cst_72 = arith.constant 0.000000e+00 : bf16
    %115 = vector.broadcast %cst_72 : bf16 to vector<2x32xbf16>
    %c36 = arith.constant 36 : index
    %c0_73 = arith.constant 0 : index
    %116 = vector.load %arg6[%c36, %c0_73] : memref<38x32xbf16, #tpu.memory_space<vmem>>, vector<2x32xbf16>
    tpu.vector_store %arg6[%c36, %c0_73], %115 {strides = array<i32>} : memref<38x32xbf16, #tpu.memory_space<vmem>>, vector<2x32xbf16>,
    %cst_74 = arith.constant 0.000000e+00 : f32
    %117 = vector.broadcast %cst_74 : f32 to vector<24x512xf32>
    %c0_75 = arith.constant 0 : index
    %c0_76 = arith.constant 0 : index
    %118 = vector.load %arg7[%c0_75, %c0_76] : memref<24x512xf32, #tpu.memory_space<vmem>>, vector<24x512xf32>
    tpu.vector_store %arg7[%c0_75, %c0_76], %117 {strides = array<i32>} : memref<24x512xf32, #tpu.memory_space<vmem>>, vector<24x512xf32>,
    %c0_77 = arith.constant 0 : index
    %c0_78 = arith.constant 0 : index
    %119 = vector.load %arg6[%c0_77, %c0_78] : memref<38x32xbf16, #tpu.memory_space<vmem>>, vector<24x32xbf16>
    %c0_79 = arith.constant 0 : index
    %c0_80 = arith.constant 0 : index
    %120 = vector.load %arg7[%c0_79, %c0_80] : memref<24x512xf32, #tpu.memory_space<vmem>>, vector<24x512xf32>
    %c0_81 = arith.constant 0 : index
    %c0_82 = arith.constant 0 : index
    %c0_83 = arith.constant 0 : index
    %121 = vector.load %arg3[%c0_81, %c0_82, %c0_83] : memref<9x32x512xbf16, #tpu.memory_space<vmem>>, vector<1x32x512xbf16>
    %122 = vector.shape_cast %121 : vector<1x32x512xbf16> to vector<32x512xbf16>
    %cst_84 = arith.constant dense<0.000000e+00> : vector<24x512xf32>
    %123 = tpu.matmul %119, %122, %cst_84 {dimension_numbers = #tpu.dot_dimension_numbers<[1], [0], [0], [1], [0, 0, 1, 1], [], []>} : vector<24x32xbf16>, vector<32x512xbf16>, vector<24x512xf32> -> vector<24x512xf32>
    %124 = arith.addf %120, %123 : vector<24x512xf32>
    %c0_85 = arith.constant 0 : index
    %c0_86 = arith.constant 0 : index
    %125 = vector.load %arg7[%c0_85, %c0_86] : memref<24x512xf32, #tpu.memory_space<vmem>>, vector<24x512xf32>
    tpu.vector_store %arg7[%c0_85, %c0_86], %124 {strides = array<i32>} : memref<24x512xf32, #tpu.memory_space<vmem>>, vector<24x512xf32>,
    %c1_87 = arith.constant 1 : index
    %c0_88 = arith.constant 0 : index
    %126 = vector.load %arg6[%c1_87, %c0_88] : memref<38x32xbf16, #tpu.memory_space<vmem>>, vector<24x32xbf16>
    %c0_89 = arith.constant 0 : index
    %c0_90 = arith.constant 0 : index
    %127 = vector.load %arg7[%c0_89, %c0_90] : memref<24x512xf32, #tpu.memory_space<vmem>>, vector<24x512xf32>
    %c1_91 = arith.constant 1 : index
    %c0_92 = arith.constant 0 : index
    %c0_93 = arith.constant 0 : index
    %128 = vector.load %arg3[%c1_91, %c0_92, %c0_93] : memref<9x32x512xbf16, #tpu.memory_space<vmem>>, vector<1x32x512xbf16>
    %129 = vector.shape_cast %128 : vector<1x32x512xbf16> to vector<32x512xbf16>
    %cst_94 = arith.constant dense<0.000000e+00> : vector<24x512xf32>
    %130 = tpu.matmul %126, %129, %cst_94 {dimension_numbers = #tpu.dot_dimension_numbers<[1], [0], [0], [1], [0, 0, 1, 1], [], []>} : vector<24x32xbf16>, vector<32x512xbf16>, vector<24x512xf32> -> vector<24x512xf32>
    %131 = arith.addf %127, %130 : vector<24x512xf32>
    %c0_95 = arith.constant 0 : index
    %c0_96 = arith.constant 0 : index
    %132 = vector.load %arg7[%c0_95, %c0_96] : memref<24x512xf32, #tpu.memory_space<vmem>>, vector<24x512xf32>
    tpu.vector_store %arg7[%c0_95, %c0_96], %131 {strides = array<i32>} : memref<24x512xf32, #tpu.memory_space<vmem>>, vector<24x512xf32>,
    %c2 = arith.constant 2 : index
    %c0_97 = arith.constant 0 : index
    %133 = vector.load %arg6[%c2, %c0_97] : memref<38x32xbf16, #tpu.memory_space<vmem>>, vector<24x32xbf16>
    %c0_98 = arith.constant 0 : index
    %c0_99 = arith.constant 0 : index
    %134 = vector.load %arg7[%c0_98, %c0_99] : memref<24x512xf32, #tpu.memory_space<vmem>>, vector<24x512xf32>
    %c2_100 = arith.constant 2 : index
    %c0_101 = arith.constant 0 : index
    %c0_102 = arith.constant 0 : index
    %135 = vector.load %arg3[%c2_100, %c0_101, %c0_102] : memref<9x32x512xbf16, #tpu.memory_space<vmem>>, vector<1x32x512xbf16>
    %136 = vector.shape_cast %135 : vector<1x32x512xbf16> to vector<32x512xbf16>
    %cst_103 = arith.constant dense<0.000000e+00> : vector<24x512xf32>
    %137 = tpu.matmul %133, %136, %cst_103 {dimension_numbers = #tpu.dot_dimension_numbers<[1], [0], [0], [1], [0, 0, 1, 1], [], []>} : vector<24x32xbf16>, vector<32x512xbf16>, vector<24x512xf32> -> vector<24x512xf32>
    %138 = arith.addf %134, %137 : vector<24x512xf32>
    %c0_104 = arith.constant 0 : index
    %c0_105 = arith.constant 0 : index
    %139 = vector.load %arg7[%c0_104, %c0_105] : memref<24x512xf32, #tpu.memory_space<vmem>>, vector<24x512xf32>
    tpu.vector_store %arg7[%c0_104, %c0_105], %138 {strides = array<i32>} : memref<24x512xf32, #tpu.memory_space<vmem>>, vector<24x512xf32>,
    %c6_106 = arith.constant 6 : index
    %c0_107 = arith.constant 0 : index
    %140 = vector.load %arg6[%c6_106, %c0_107] : memref<38x32xbf16, #tpu.memory_space<vmem>>, vector<24x32xbf16>
    %c0_108 = arith.constant 0 : index
    %c0_109 = arith.constant 0 : index
    %141 = vector.load %arg7[%c0_108, %c0_109] : memref<24x512xf32, #tpu.memory_space<vmem>>, vector<24x512xf32>
    %c3 = arith.constant 3 : index
    %c0_110 = arith.constant 0 : index
    %c0_111 = arith.constant 0 : index
    %142 = vector.load %arg3[%c3, %c0_110, %c0_111] : memref<9x32x512xbf16, #tpu.memory_space<vmem>>, vector<1x32x512xbf16>
    %143 = vector.shape_cast %142 : vector<1x32x512xbf16> to vector<32x512xbf16>
    %cst_112 = arith.constant dense<0.000000e+00> : vector<24x512xf32>
    %144 = tpu.matmul %140, %143, %cst_112 {dimension_numbers = #tpu.dot_dimension_numbers<[1], [0], [0], [1], [0, 0, 1, 1], [], []>} : vector<24x32xbf16>, vector<32x512xbf16>, vector<24x512xf32> -> vector<24x512xf32>
    %145 = arith.addf %141, %144 : vector<24x512xf32>
    %c0_113 = arith.constant 0 : index
    %c0_114 = arith.constant 0 : index
    %146 = vector.load %arg7[%c0_113, %c0_114] : memref<24x512xf32, #tpu.memory_space<vmem>>, vector<24x512xf32>
    tpu.vector_store %arg7[%c0_113, %c0_114], %145 {strides = array<i32>} : memref<24x512xf32, #tpu.memory_space<vmem>>, vector<24x512xf32>,
    %c7_115 = arith.constant 7 : index
    %c0_116 = arith.constant 0 : index
    %147 = vector.load %arg6[%c7_115, %c0_116] : memref<38x32xbf16, #tpu.memory_space<vmem>>, vector<24x32xbf16>
    %c0_117 = arith.constant 0 : index
    %c0_118 = arith.constant 0 : index
    %148 = vector.load %arg7[%c0_117, %c0_118] : memref<24x512xf32, #tpu.memory_space<vmem>>, vector<24x512xf32>
    %c4 = arith.constant 4 : index
    %c0_119 = arith.constant 0 : index
    %c0_120 = arith.constant 0 : index
    %149 = vector.load %arg3[%c4, %c0_119, %c0_120] : memref<9x32x512xbf16, #tpu.memory_space<vmem>>, vector<1x32x512xbf16>
    %150 = vector.shape_cast %149 : vector<1x32x512xbf16> to vector<32x512xbf16>
    %cst_121 = arith.constant dense<0.000000e+00> : vector<24x512xf32>
    %151 = tpu.matmul %147, %150, %cst_121 {dimension_numbers = #tpu.dot_dimension_numbers<[1], [0], [0], [1], [0, 0, 1, 1], [], []>} : vector<24x32xbf16>, vector<32x512xbf16>, vector<24x512xf32> -> vector<24x512xf32>
    %152 = arith.addf %148, %151 : vector<24x512xf32>
    %c0_122 = arith.constant 0 : index
    %c0_123 = arith.constant 0 : index
    %153 = vector.load %arg7[%c0_122, %c0_123] : memref<24x512xf32, #tpu.memory_space<vmem>>, vector<24x512xf32>
    tpu.vector_store %arg7[%c0_122, %c0_123], %152 {strides = array<i32>} : memref<24x512xf32, #tpu.memory_space<vmem>>, vector<24x512xf32>,
    %c8 = arith.constant 8 : index
    %c0_124 = arith.constant 0 : index
    %154 = vector.load %arg6[%c8, %c0_124] : memref<38x32xbf16, #tpu.memory_space<vmem>>, vector<24x32xbf16>
    %c0_125 = arith.constant 0 : index
    %c0_126 = arith.constant 0 : index
    %155 = vector.load %arg7[%c0_125, %c0_126] : memref<24x512xf32, #tpu.memory_space<vmem>>, vector<24x512xf32>
    %c5_127 = arith.constant 5 : index
    %c0_128 = arith.constant 0 : index
    %c0_129 = arith.constant 0 : index
    %156 = vector.load %arg3[%c5_127, %c0_128, %c0_129] : memref<9x32x512xbf16, #tpu.memory_space<vmem>>, vector<1x32x512xbf16>
    %157 = vector.shape_cast %156 : vector<1x32x512xbf16> to vector<32x512xbf16>
    %cst_130 = arith.constant dense<0.000000e+00> : vector<24x512xf32>
    %158 = tpu.matmul %154, %157, %cst_130 {dimension_numbers = #tpu.dot_dimension_numbers<[1], [0], [0], [1], [0, 0, 1, 1], [], []>} : vector<24x32xbf16>, vector<32x512xbf16>, vector<24x512xf32> -> vector<24x512xf32>
    %159 = arith.addf %155, %158 : vector<24x512xf32>
    %c0_131 = arith.constant 0 : index
    %c0_132 = arith.constant 0 : index
    %160 = vector.load %arg7[%c0_131, %c0_132] : memref<24x512xf32, #tpu.memory_space<vmem>>, vector<24x512xf32>
    tpu.vector_store %arg7[%c0_131, %c0_132], %159 {strides = array<i32>} : memref<24x512xf32, #tpu.memory_space<vmem>>, vector<24x512xf32>,
    %c12_133 = arith.constant 12 : index
    %c0_134 = arith.constant 0 : index
    %161 = vector.load %arg6[%c12_133, %c0_134] : memref<38x32xbf16, #tpu.memory_space<vmem>>, vector<24x32xbf16>
    %c0_135 = arith.constant 0 : index
    %c0_136 = arith.constant 0 : index
    %162 = vector.load %arg7[%c0_135, %c0_136] : memref<24x512xf32, #tpu.memory_space<vmem>>, vector<24x512xf32>
    %c6_137 = arith.constant 6 : index
    %c0_138 = arith.constant 0 : index
    %c0_139 = arith.constant 0 : index
    %163 = vector.load %arg3[%c6_137, %c0_138, %c0_139] : memref<9x32x512xbf16, #tpu.memory_space<vmem>>, vector<1x32x512xbf16>
    %164 = vector.shape_cast %163 : vector<1x32x512xbf16> to vector<32x512xbf16>
    %cst_140 = arith.constant dense<0.000000e+00> : vector<24x512xf32>
    %165 = tpu.matmul %161, %164, %cst_140 {dimension_numbers = #tpu.dot_dimension_numbers<[1], [0], [0], [1], [0, 0, 1, 1], [], []>} : vector<24x32xbf16>, vector<32x512xbf16>, vector<24x512xf32> -> vector<24x512xf32>
    %166 = arith.addf %162, %165 : vector<24x512xf32>
    %c0_141 = arith.constant 0 : index
    %c0_142 = arith.constant 0 : index
    %167 = vector.load %arg7[%c0_141, %c0_142] : memref<24x512xf32, #tpu.memory_space<vmem>>, vector<24x512xf32>
    tpu.vector_store %arg7[%c0_141, %c0_142], %166 {strides = array<i32>} : memref<24x512xf32, #tpu.memory_space<vmem>>, vector<24x512xf32>,
    %c13_143 = arith.constant 13 : index
    %c0_144 = arith.constant 0 : index
    %168 = vector.load %arg6[%c13_143, %c0_144] : memref<38x32xbf16, #tpu.memory_space<vmem>>, vector<24x32xbf16>
    %c0_145 = arith.constant 0 : index
    %c0_146 = arith.constant 0 : index
    %169 = vector.load %arg7[%c0_145, %c0_146] : memref<24x512xf32, #tpu.memory_space<vmem>>, vector<24x512xf32>
    %c7_147 = arith.constant 7 : index
    %c0_148 = arith.constant 0 : index
    %c0_149 = arith.constant 0 : index
    %170 = vector.load %arg3[%c7_147, %c0_148, %c0_149] : memref<9x32x512xbf16, #tpu.memory_space<vmem>>, vector<1x32x512xbf16>
    %171 = vector.shape_cast %170 : vector<1x32x512xbf16> to vector<32x512xbf16>
    %cst_150 = arith.constant dense<0.000000e+00> : vector<24x512xf32>
    %172 = tpu.matmul %168, %171, %cst_150 {dimension_numbers = #tpu.dot_dimension_numbers<[1], [0], [0], [1], [0, 0, 1, 1], [], []>} : vector<24x32xbf16>, vector<32x512xbf16>, vector<24x512xf32> -> vector<24x512xf32>
    %173 = arith.addf %169, %172 : vector<24x512xf32>
    %c0_151 = arith.constant 0 : index
    %c0_152 = arith.constant 0 : index
    %174 = vector.load %arg7[%c0_151, %c0_152] : memref<24x512xf32, #tpu.memory_space<vmem>>, vector<24x512xf32>
    tpu.vector_store %arg7[%c0_151, %c0_152], %173 {strides = array<i32>} : memref<24x512xf32, #tpu.memory_space<vmem>>, vector<24x512xf32>,
    %c14 = arith.constant 14 : index
    %c0_153 = arith.constant 0 : index
    %175 = vector.load %arg6[%c14, %c0_153] : memref<38x32xbf16, #tpu.memory_space<vmem>>, vector<24x32xbf16>
    %c0_154 = arith.constant 0 : index
    %c0_155 = arith.constant 0 : index
    %176 = vector.load %arg7[%c0_154, %c0_155] : memref<24x512xf32, #tpu.memory_space<vmem>>, vector<24x512xf32>
    %c8_156 = arith.constant 8 : index
    %c0_157 = arith.constant 0 : index
    %c0_158 = arith.constant 0 : index
    %177 = vector.load %arg3[%c8_156, %c0_157, %c0_158] : memref<9x32x512xbf16, #tpu.memory_space<vmem>>, vector<1x32x512xbf16>
    %178 = vector.shape_cast %177 : vector<1x32x512xbf16> to vector<32x512xbf16>
    %cst_159 = arith.constant dense<0.000000e+00> : vector<24x512xf32>
    %179 = tpu.matmul %175, %178, %cst_159 {dimension_numbers = #tpu.dot_dimension_numbers<[1], [0], [0], [1], [0, 0, 1, 1], [], []>} : vector<24x32xbf16>, vector<32x512xbf16>, vector<24x512xf32> -> vector<24x512xf32>
    %180 = arith.addf %176, %179 : vector<24x512xf32>
    %c0_160 = arith.constant 0 : index
    %c0_161 = arith.constant 0 : index
    %181 = vector.load %arg7[%c0_160, %c0_161] : memref<24x512xf32, #tpu.memory_space<vmem>>, vector<24x512xf32>
    tpu.vector_store %arg7[%c0_160, %c0_161], %180 {strides = array<i32>} : memref<24x512xf32, #tpu.memory_space<vmem>>, vector<24x512xf32>,
    %c0_162 = arith.constant 0 : index
    %c0_163 = arith.constant 0 : index
    %182 = vector.load %arg7[%c0_162, %c0_163] : memref<24x512xf32, #tpu.memory_space<vmem>>, vector<4x512xf32>
    %c0_164 = arith.constant 0 : index
    %c0_165 = arith.constant 0 : index
    %183 = vector.load %arg4[%c0_164, %c0_165] : memref<1x512xf32, #tpu.memory_space<vmem>>, vector<1x512xf32>
    %184 = vector.broadcast %183 : vector<1x512xf32> to vector<4x512xf32>
    %185 = arith.addf %182, %184 : vector<4x512xf32>
    %cst_166 = arith.constant 0.000000e+00 : f32
    %186 = vector.broadcast %cst_166 : f32 to vector<4x512xf32>
    %187 = arith.maximumf %185, %186 : vector<4x512xf32>
    %188 = arith.truncf %187 : vector<4x512xf32> to vector<4x512xbf16>
    %c0_167 = arith.constant 0 : index
    %c0_168 = arith.constant 0 : index
    %c0_169 = arith.constant 0 : index
    %c0_170 = arith.constant 0 : index
    %189 = vector.load %arg5[%c0_167, %c0_168, %c0_169, %c0_170] : memref<1x4x4x512xbf16, #tpu.memory_space<vmem>>, vector<1x1x4x512xbf16>
    %190 = vector.shape_cast %189 : vector<1x1x4x512xbf16> to vector<4x512xbf16>
    %191 = vector.shape_cast %188 : vector<4x512xbf16> to vector<1x1x4x512xbf16>
    tpu.vector_store %arg5[%c0_167, %c0_168, %c0_169, %c0_170], %191 {strides = array<i32>} : memref<1x4x4x512xbf16, #tpu.memory_space<vmem>>, vector<1x1x4x512xbf16>,
    %c6_171 = arith.constant 6 : index
    %c0_172 = arith.constant 0 : index
    %192 = vector.load %arg7[%c6_171, %c0_172] : memref<24x512xf32, #tpu.memory_space<vmem>>, vector<4x512xf32>
    %c0_173 = arith.constant 0 : index
    %c0_174 = arith.constant 0 : index
    %193 = vector.load %arg4[%c0_173, %c0_174] : memref<1x512xf32, #tpu.memory_space<vmem>>, vector<1x512xf32>
    %194 = vector.broadcast %193 : vector<1x512xf32> to vector<4x512xf32>
    %195 = arith.addf %192, %194 : vector<4x512xf32>
    %cst_175 = arith.constant 0.000000e+00 : f32
    %196 = vector.broadcast %cst_175 : f32 to vector<4x512xf32>
    %197 = arith.maximumf %195, %196 : vector<4x512xf32>
    %198 = arith.truncf %197 : vector<4x512xf32> to vector<4x512xbf16>
    %c0_176 = arith.constant 0 : index
    %c1_177 = arith.constant 1 : index
    %c0_178 = arith.constant 0 : index
    %c0_179 = arith.constant 0 : index
    %199 = vector.load %arg5[%c0_176, %c1_177, %c0_178, %c0_179] : memref<1x4x4x512xbf16, #tpu.memory_space<vmem>>, vector<1x1x4x512xbf16>
    %200 = vector.shape_cast %199 : vector<1x1x4x512xbf16> to vector<4x512xbf16>
    %201 = vector.shape_cast %198 : vector<4x512xbf16> to vector<1x1x4x512xbf16>
    tpu.vector_store %arg5[%c0_176, %c1_177, %c0_178, %c0_179], %201 {strides = array<i32>} : memref<1x4x4x512xbf16, #tpu.memory_space<vmem>>, vector<1x1x4x512xbf16>,
    %c12_180 = arith.constant 12 : index
    %c0_181 = arith.constant 0 : index
    %202 = vector.load %arg7[%c12_180, %c0_181] : memref<24x512xf32, #tpu.memory_space<vmem>>, vector<4x512xf32>
    %c0_182 = arith.constant 0 : index
    %c0_183 = arith.constant 0 : index
    %203 = vector.load %arg4[%c0_182, %c0_183] : memref<1x512xf32, #tpu.memory_space<vmem>>, vector<1x512xf32>
    %204 = vector.broadcast %203 : vector<1x512xf32> to vector<4x512xf32>
    %205 = arith.addf %202, %204 : vector<4x512xf32>
    %cst_184 = arith.constant 0.000000e+00 : f32
    %206 = vector.broadcast %cst_184 : f32 to vector<4x512xf32>
    %207 = arith.maximumf %205, %206 : vector<4x512xf32>
    %208 = arith.truncf %207 : vector<4x512xf32> to vector<4x512xbf16>
    %c0_185 = arith.constant 0 : index
    %c2_186 = arith.constant 2 : index
    %c0_187 = arith.constant 0 : index
    %c0_188 = arith.constant 0 : index
    %209 = vector.load %arg5[%c0_185, %c2_186, %c0_187, %c0_188] : memref<1x4x4x512xbf16, #tpu.memory_space<vmem>>, vector<1x1x4x512xbf16>
    %210 = vector.shape_cast %209 : vector<1x1x4x512xbf16> to vector<4x512xbf16>
    %211 = vector.shape_cast %208 : vector<4x512xbf16> to vector<1x1x4x512xbf16>
    tpu.vector_store %arg5[%c0_185, %c2_186, %c0_187, %c0_188], %211 {strides = array<i32>} : memref<1x4x4x512xbf16, #tpu.memory_space<vmem>>, vector<1x1x4x512xbf16>,
    %c18_189 = arith.constant 18 : index
    %c0_190 = arith.constant 0 : index
    %212 = vector.load %arg7[%c18_189, %c0_190] : memref<24x512xf32, #tpu.memory_space<vmem>>, vector<4x512xf32>
    %c0_191 = arith.constant 0 : index
    %c0_192 = arith.constant 0 : index
    %213 = vector.load %arg4[%c0_191, %c0_192] : memref<1x512xf32, #tpu.memory_space<vmem>>, vector<1x512xf32>
    %214 = vector.broadcast %213 : vector<1x512xf32> to vector<4x512xf32>
    %215 = arith.addf %212, %214 : vector<4x512xf32>
    %cst_193 = arith.constant 0.000000e+00 : f32
    %216 = vector.broadcast %cst_193 : f32 to vector<4x512xf32>
    %217 = arith.maximumf %215, %216 : vector<4x512xf32>
    %218 = arith.truncf %217 : vector<4x512xf32> to vector<4x512xbf16>
    %c0_194 = arith.constant 0 : index
    %c3_195 = arith.constant 3 : index
    %c0_196 = arith.constant 0 : index
    %c0_197 = arith.constant 0 : index
    %219 = vector.load %arg5[%c0_194, %c3_195, %c0_196, %c0_197] : memref<1x4x4x512xbf16, #tpu.memory_space<vmem>>, vector<1x1x4x512xbf16>
    %220 = vector.shape_cast %219 : vector<1x1x4x512xbf16> to vector<4x512xbf16>
    %221 = vector.shape_cast %218 : vector<4x512xbf16> to vector<1x1x4x512xbf16>
    tpu.vector_store %arg5[%c0_194, %c3_195, %c0_196, %c0_197], %221 {strides = array<i32>} : memref<1x4x4x512xbf16, #tpu.memory_space<vmem>>, vector<1x1x4x512xbf16>,
    return
  }
  func.func @transform_0(%arg0: i32, %arg1: i32) -> (i32, i32, i32, i32) {
    %c0_i32 = arith.constant 0 : i32
    %c0_i32_0 = arith.constant 0 : i32
    %c0_i32_1 = arith.constant 0 : i32
    %c0_i32_2 = arith.constant 0 : i32
    return %arg0, %c0_i32, %c0_i32_0, %c0_i32_1 : i32, i32, i32, i32
  }
  func.func @transform_1(%arg0: i32, %arg1: i32) -> (i32, i32, i32) {
    %c0_i32 = arith.constant 0 : i32
    %c0_i32_0 = arith.constant 0 : i32
    %c0_i32_1 = arith.constant 0 : i32
    %c0_i32_2 = arith.constant 0 : i32
    return %c0_i32, %c0_i32_0, %c0_i32_1 : i32, i32, i32
  }
  func.func @transform_2(%arg0: i32, %arg1: i32) -> (i32, i32) {
    %c0_i32 = arith.constant 0 : i32
    %c0_i32_0 = arith.constant 0 : i32
    %c0_i32_1 = arith.constant 0 : i32
    return %c0_i32, %c0_i32_0 : i32, i32
  }
  func.func @transform_3(%arg0: i32, %arg1: i32) -> (i32, i32, i32, i32) {
    %c0_i32 = arith.constant 0 : i32
    %c0_i32_0 = arith.constant 0 : i32
    %c0_i32_1 = arith.constant 0 : i32
    return %arg0, %arg1, %c0_i32, %c0_i32_0 : i32, i32, i32, i32
  }
}

</mosaic_0001>

<llo_original>
// kernel: tpu_custom_call.1
$region0: #{tpu_custom_call.1}
  #allocation0 [shape = 'u32[]', space=smem, size = 0x4, offset = 0x4, fixed_abs, tag = 'smem constant byte address 0x4 - core index']
  #allocation1 [shape = 'u32[144,128]{1,0:T(1,128)}', space=vmem, size = 0x12000, scoped, tag = 'internal scratch']
  #allocation2 [shape = 'bf16[38,32]{1,0:T(8,128)(2,1)}', space=vmem, size = 0x2800, scoped, tag = 'scratch operand']
  #allocation3 [shape = 'f32[24,512]{1,0:T(8,128)}', space=vmem, size = 0xc000, scoped, tag = 'scratch operand']
  %s0 = inlined_call_operand.hbm [shape: bf16[2,4,4,32], index: 0, kind: input, shape index: {}]
  %s1 = inlined_call_operand.hbm [shape: bf16[9,32,512], index: 1, kind: input, shape index: {}]
  %s2 = inlined_call_operand.hbm [shape: f32[1,512], index: 2, kind: input, shape index: {}]
  %s3 = inlined_call_operand.hbm [shape: bf16[2,4,4,512], index: 3, kind: output, shape index: {}]
  %s4 = sld [smem:[#allocation0]]
  $region57: #{tpu_custom_call.1} parent=0
    _
  %s6 = ssub.s32 1, %s4
  %s7 = scalar_select 0, %s6, %s4
  $region1: #{tpu_custom_call.1} parent=0
    #allocation4 [shape = 'u8[8192]{0}', space=vmem, size = 0x2000, scoped, tag = 'input window, operand 0']
    #allocation5 [shape = 's32[2]{0}', space=sflag, size = 0x8, scoped, tag = 'scoped memory for tpu_custom_call.1']
    #allocation6 [shape = 's32[2]{0}', space=sflag, size = 0x8, scoped, tag = 'scoped memory for tpu_custom_call.1']
    #allocation7 [shape = 'u8[294912]{0}', space=vmem, size = 0x48000, scoped, tag = 'input window, operand 1, single buffered']
    #allocation8 [shape = 's32[1]{0}', space=sflag, size = 0x4, scoped, tag = 'scoped memory for tpu_custom_call.1']
    #allocation9 [shape = 'u8[2048]{0}', space=vmem, size = 0x800, scoped, tag = 'input window, operand 2, single buffered']
    #allocation10 [shape = 'u8[32768]{0}', space=vmem, size = 0x8000, scoped, tag = 'output window, operand 0']
    %8 = vsyncpa [#allocation5], 0
    %s9 = scalar_lea.sflag [#allocation5], 1
    %10 = vsyncpa %s9, 0
    %11 = vsyncpa [#allocation8], 0
    %12 = vsyncpa [#allocation6], 0
    %s13 = scalar_lea.sflag [#allocation6], 1
    %14 = vsyncpa %s13, 0
    loop: start=0, step=1, limit=4
    $region2: #{tpu_custom_call.1} parent=1 // loop_pre_header
      _
    $region3: #{tpu_custom_call.1} parent=1 // loop_header
      %s16 = sphi 0, %s20
      %p17 = scmp.ge.s32.totalorder %s16, 4
      %s23 = sphi 0, %s35
      %s24 = sphi 0, %s31
      %s25 = sphi 0, %s23
      %s26 = sphi 0, %s24
      %s27 = sphi 0, %s25
      %s28 = sphi 0, %s26
      %s38 = sphi 0, %s40
      %s41 = sphi 0, %s38
      %s42 = sphi 0, %s41
      %s58 = sphi 0, %s42
      %s62 = sphi 0, %s62
      %s64 = sphi 0, %s62
      %s65 = sphi 0, %s64
      %s79 = sphi 0, %s65
      %s83 = sphi 0, %s83
      %s85 = sphi 0, %s83
      %s86 = sphi 0, %s85
      %s100 = sphi 0, %s86
      %s108 = sphi 0, %s110
      %s111 = sphi 0, %s108
      %s112 = sphi 0, %s111
      %s128 = sphi 0, %s112
    $region4: #{tpu_custom_call.1} parent=1 // loop_header_branch
      %19 = sbr.rel (%p17) target = $region8
    $region5: #{tpu_custom_call.1} parent=1 // loop_body
      %s21 = ssub.s32 %s16, 1
      %s22 = ssub.s32 %s16, 2
      %s29 = sadd.s32 1, %s24
      %p30 = scmp.ge.s32.totalorder %s29, 1
      %s31 = scalar_select %p30, 0, %s29
      %s32 = sadd.s32 1, %s23
      %s33 = scalar_select %p30, %s32, %s23
      %p34 = scmp.ge.s32.totalorder %s33, 2
      %s35 = scalar_select %p34, 0, %s33
      %s36 = ssub.s32 %s23, %s35
      %p37 = scmp.eq.s32.totalorder %s36, 0
      %s39 = sadd.s32 %s38, 1
      %s40 = scalar_select %p37, %s38, %s39
      %p43 = pneg %p37
      %p44 = scmp.eq.s32.totalorder %s16, 1
      %p45 = por %p43, %p44
      %p46 = scmp.ne.s32.totalorder %s38, %s41
      %p47 = scmp.eq.s32.totalorder %s16, 0
      %p48 = por %p46, %p47
      %p49 = scmp.ne.s32.totalorder %s38, %s41
      %p50 = scmp.eq.s32.totalorder %s21, 1
      %p51 = por %p49, %p50
      %p52 = scmp.ne.s32.totalorder %s41, %s42
      %p53 = scmp.eq.s32.totalorder %s21, 0
      %p54 = por %p52, %p53
      %p55 = scmp.ne.s32.totalorder %s41, %s42
      %p56 = scmp.eq.s32.totalorder %s22, 1
      %p57 = por %p55, %p56
      %p59 = scmp.ne.s32.totalorder %s42, %s58
      %p60 = scmp.eq.s32.totalorder %s22, 0
      %p61 = por %p59, %p60
      %s63 = sadd.s32 %s62, 1
      %p66 = scmp.eq.s32.totalorder %s16, 1
      %p67 = scmp.ne.s32.totalorder %s62, %s64
      %p68 = scmp.eq.s32.totalorder %s16, 0
      %p69 = por %p67, %p68
      %p70 = scmp.ne.s32.totalorder %s62, %s64
      %p71 = scmp.eq.s32.totalorder %s21, 1
      %p72 = por %p70, %p71
      %p73 = scmp.ne.s32.totalorder %s64, %s65
      %p74 = scmp.eq.s32.totalorder %s21, 0
      %p75 = por %p73, %p74
      %p76 = scmp.ne.s32.totalorder %s64, %s65
      %p77 = scmp.eq.s32.totalorder %s22, 1
      %p78 = por %p76, %p77
      %p80 = scmp.ne.s32.totalorder %s65, %s79
      %p81 = scmp.eq.s32.totalorder %s22, 0
      %p82 = por %p80, %p81
      %s84 = sadd.s32 %s83, 1
      %p87 = scmp.eq.s32.totalorder %s16, 1
      %p88 = scmp.ne.s32.totalorder %s83, %s85
      %p89 = scmp.eq.s32.totalorder %s16, 0
      %p90 = por %p88, %p89
      %p91 = scmp.ne.s32.totalorder %s83, %s85
      %p92 = scmp.eq.s32.totalorder %s21, 1
      %p93 = por %p91, %p92
      %p94 = scmp.ne.s32.totalorder %s85, %s86
      %p95 = scmp.eq.s32.totalorder %s21, 0
      %p96 = por %p94, %p95
      %p97 = scmp.ne.s32.totalorder %s85, %s86
      %p98 = scmp.eq.s32.totalorder %s22, 1
      %p99 = por %p97, %p98
      %p101 = scmp.ne.s32.totalorder %s86, %s100
      %p102 = scmp.eq.s32.totalorder %s22, 0
      %p103 = por %p101, %p102
      %s104 = ssub.s32 %s23, %s35
      %s105 = ssub.s32 %s24, %s31
      %s106 = sor.u32 %s104, %s105
      %p107 = scmp.eq.s32.totalorder %s106, 0
      %s109 = sadd.s32 %s108, 1
      %s110 = scalar_select %p107, %s108, %s109
      %p113 = pneg %p107
      %p114 = scmp.eq.s32.totalorder %s16, 1
      %p115 = por %p113, %p114
      %p116 = scmp.ne.s32.totalorder %s108, %s111
      %p117 = scmp.eq.s32.totalorder %s16, 0
      %p118 = por %p116, %p117
      %p119 = scmp.ne.s32.totalorder %s108, %s111
      %p120 = scmp.eq.s32.totalorder %s21, 1
      %p121 = por %p119, %p120
      %p122 = scmp.ne.s32.totalorder %s111, %s112
      %p123 = scmp.eq.s32.totalorder %s21, 0
      %p124 = por %p122, %p123
      %p125 = scmp.ne.s32.totalorder %s111, %s112
      %p126 = scmp.eq.s32.totalorder %s22, 1
      %p127 = por %p125, %p126
      %p129 = scmp.ne.s32.totalorder %s112, %s128
      %p130 = scmp.eq.s32.totalorder %s22, 0
      %p131 = por %p129, %p130
      %p132 = scmp.le.s32.totalorder 1, %s16
      %p133 = scmp.lt.s32.totalorder %s16, 3
      %p134 = pnand %p132, %p133
      %p135 = pneg %p134
      // Predicated region
      $region9: #{tpu_custom_call.1} parent=5 // pred_check
        _
      $region10: #{tpu_custom_call.1} parent=5 // pred_check_branch
        %137 = sbr.rel (%p134) target = $region12
      $region11: #{tpu_custom_call.1} parent=5 // pred_region
        %s138 = ssub.s32 %s16, 1
        // Predicated region
        $region13: #{tpu_custom_call.1} parent=11 // pred_check
          %p139 = pneg %p75
        $region14: #{tpu_custom_call.1} parent=11 // pred_check_branch
          %141 = sbr.rel (%p139) target = $region16
        $region15: #{tpu_custom_call.1} parent=11 // pred_region
          %s143 = ssub.s32 9216, 9216
          %144 = vsyncadd [#allocation8], %s143
          %s145 = sshll.u32 [#allocation7], 4
          %s146 = int_to_ptr.vmem [resolvable:$true] %s145
          %151 = dma.hbm_to_vmem [thread:$0]  %s1, 9216, %s146, [#allocation8], 256, 256, 16
        $region16: #{tpu_custom_call.1} parent=11 // pred_fallthru
          _
        // Predicated region
        $region17: #{tpu_custom_call.1} parent=11 // pred_check
          %p152 = pneg %p96
        $region18: #{tpu_custom_call.1} parent=11 // pred_check_branch
          %154 = sbr.rel (%p152) target = $region20
        $region19: #{tpu_custom_call.1} parent=11 // pred_region
          %s156 = ssub.s32 64, 64
          %157 = vsyncadd [#allocation8], %s156
          %s159 = sshll.u32 [#allocation9], 4
          %s160 = int_to_ptr.vmem [resolvable:$true] %s159
          %162 = dma.hbm_to_vmem [thread:$0]  %s2, 64, %s160, [#allocation8]
        $region20: #{tpu_custom_call.1} parent=11 // pred_fallthru
          _
      $region12: #{tpu_custom_call.1} parent=5 // pred_fallthru
        _
      %p163 = scmp.lt.s32.totalorder %s16, 2
      // Predicated region
      $region21: #{tpu_custom_call.1} parent=5 // pred_check
        %p164 = pneg %p163
      $region22: #{tpu_custom_call.1} parent=5 // pred_check_branch
        %166 = sbr.rel (%p164) target = $region24
      $region23: #{tpu_custom_call.1} parent=5 // pred_region
        // Predicated region
        $region25: #{tpu_custom_call.1} parent=23 // pred_check
          %p167 = pneg %p48
        $region26: #{tpu_custom_call.1} parent=23 // pred_check_branch
          %169 = sbr.rel (%p167) target = $region28
        $region27: #{tpu_custom_call.1} parent=23 // pred_region
          %s170 = sand.u32 %s38, 1
          %s171 = scalar_lea.sflag [#allocation5], %s170
          %s172 = sand.u32 %s38, 1
          %s173 = smul.addr %s172, 8
          %s174 = scalar_lea.vmem [#allocation4], %s173
          %s176 = ssub.s32 128, 128
          %177 = vsyncadd %s171, %s176
          %s178 = smul.addr %s23, 4
          %s179 = smul.addr %s178, 32
          %s180 = scalar_lea.hbm %s0, %s179
          %s181 = sshll.u32 %s174, 4
          %s182 = int_to_ptr.vmem [resolvable:$true] %s181
          %187 = dma.hbm_to_vmem [thread:$0]  %s180, 128, %s182, %s171, 32, 32, 2
        $region28: #{tpu_custom_call.1} parent=23 // pred_fallthru
          _
      $region24: #{tpu_custom_call.1} parent=5 // pred_fallthru
        _
      %p188 = scmp.le.s32.totalorder 1, %s16
      %p189 = scmp.lt.s32.totalorder %s16, 3
      %p190 = pnand %p188, %p189
      %p191 = pneg %p190
      // Predicated region
      $region29: #{tpu_custom_call.1} parent=5 // pred_check
        _
      $region30: #{tpu_custom_call.1} parent=5 // pred_check_branch
        %193 = sbr.rel (%p190) target = $region32
      $region31: #{tpu_custom_call.1} parent=5 // pred_region
        %s194 = ssub.s32 %s16, 1
        %s195 = sand.u32 %s41, 1
        %s196 = scalar_lea.sflag [#allocation5], %s195
        %s197 = sand.u32 %s41, 1
        %s198 = smul.addr %s197, 8
        %s199 = scalar_lea.vmem [#allocation4], %s198
        // Predicated region
        $region33: #{tpu_custom_call.1} parent=31 // pred_check
          %p200 = pneg %p54
        $region34: #{tpu_custom_call.1} parent=31 // pred_check_branch
          %202 = sbr.rel (%p200) target = $region36
        $region35: #{tpu_custom_call.1} parent=31 // pred_region
          %203 = dma.done %s196, 128
        $region36: #{tpu_custom_call.1} parent=31 // pred_fallthru
          _
        // Predicated region
        $region37: #{tpu_custom_call.1} parent=31 // pred_check
          %p204 = pneg %p75
        $region38: #{tpu_custom_call.1} parent=31 // pred_check_branch
          %206 = sbr.rel (%p204) target = $region40
        $region39: #{tpu_custom_call.1} parent=31 // pred_region
          %207 = dma.done [#allocation8], 9216
        $region40: #{tpu_custom_call.1} parent=31 // pred_fallthru
          _
        // Predicated region
        $region41: #{tpu_custom_call.1} parent=31 // pred_check
          %p208 = pneg %p96
        $region42: #{tpu_custom_call.1} parent=31 // pred_check_branch
          %210 = sbr.rel (%p208) target = $region44
        $region43: #{tpu_custom_call.1} parent=31 // pred_region
          %211 = dma.done [#allocation8], 64
        $region44: #{tpu_custom_call.1} parent=31 // pred_fallthru
          _
        %s212 = sand.u32 %s41, 1
        %s213 = scalar_lea.sflag [#allocation5], %s212
        %s214 = sand.u32 %s41, 1
        %s215 = smul.addr %s214, 8
        %s216 = scalar_lea.vmem [#allocation4], %s215
        %p217 = pneg %p54
        %p218 = pneg %p51
        %p219 = pneg %p75
        %p220 = pneg %p72
        %p221 = pneg %p96
        %p222 = pneg %p93
        %p223 = pneg %p124
        %p224 = pneg %p121
        %s225 = sand.u32 %s111, 1
        %s226 = scalar_lea.sflag [#allocation6], %s225
        %s227 = sand.u32 %s111, 1
        %s228 = smul.addr %s227, 32
        %s229 = scalar_lea.vmem [#allocation10], %s228
        %s230 = smul.u32 4, %s26
        %s232 = smul.u32 %s26, 4
        %s233 = sadd.s32 %s232, 4294967295
        %p234 = scmp.ge.s32.totalorder %s233, 0
        %p235 = scmp.lt.s32.totalorder %s233, 4
        %p236 = pnand %p234, %p235
        %p237 = pneg %p236
        %p238 = scmp.gt.s32.totalorder %s233, 0
        %s239 = scalar_select %p238, %s233, 0
        %p240 = scmp.lt.s32.totalorder %s239, 3
        %s241 = scalar_select %p240, %s239, 3
        %s242 = smul.addr %s241, 2
        %s243 = scalar_lea.vmem %s199, %s242 [#allocation4]
        %v244 = vld [vmem:[%s243] sm:$0x3]
        %s245 = scalar_select %p237, 1, 0
        %s246 = scvt.s32.f32 %s245
        %p248 = scmp.ne.f32.partialorder %s246, %s246
        %s249 = sshrl.u32 %s246, 16
        %s250 = sand.u32 %s249, 1
        %s251 = sadd.s32 32767, %s250
        %s252 = sadd.s32 %s246, %s251
        %s253 = sand.u32 %s252, 4294901760
        %s254 = scalar_select %p248, 2143289344, %s253
        %s256 = sshrl.u32 %s254, 16
        %s257 = sshll.u32 %s256, 16
        %s258 = sor.u32 %s256, %s257
        %v259 = vstv %s258
        %v261 = vmul.bf16 %v244, %v259
        %vm262 = vcmask 253952
        %vm263 = vsmask.f32 256
        %vm264 = vmand %vm262, %vm263
        %v265 = vld [vmem:[#allocation2] sm:$0x1]
        %v266 = vsel %vm264, 0, %v265
        %267 = vst [vmem:[#allocation2] sm:$0x1] %v266
        %vm268 = vcmask 256002
        %vm269 = vsmask.f32 7946
        %vm270 = vmand %vm268, %vm269
        %v271 = vld [vmem:[#allocation2] sm:$0x4]
        %v272 = vsel %vm270, 0, %v271
        %273 = vst [vmem:[#allocation2] sm:$0x4] %v272
        %v276 = vunpack.c.l.s4 1983009808
        %v277 = vunpack.c.0.s8 %v276
        %v278 = vlaneseq
        %v279 = vshrl.u32 %v278, 7
        %v280 = vsub.s32 %v277, %v279
        %v281 = vrot.slane %v261, %v280
        %v283 = vshrl.u32 %v281, 16
        %v285 = vrot.slane %v283, 7
        %v286 = vshll.u32 %v281, 16
        %v288 = vor.u32 %v285, %v286
        %vm290 = vcmask 256000
        %vm291 = vsmask.f32 2306
        %vm292 = vmand %vm290, %vm291
        %v293 = vld [vmem:[#allocation2] sm:$0x7]
        %v294 = vsel %vm292, %v288, %v293
        %295 = vst [vmem:[#allocation2] sm:$0x7] %v294
        %p296 = scmp.ge.s32.totalorder %s232, 0
        %p297 = scmp.lt.s32.totalorder %s232, 4
        %p298 = pnand %p296, %p297
        %p299 = pneg %p298
        %p300 = scmp.gt.s32.totalorder %s232, 0
        %s301 = scalar_select %p300, %s232, 0
        %p302 = scmp.lt.s32.totalorder %s301, 3
        %s303 = scalar_select %p302, %s301, 3
        %s304 = smul.addr %s303, 2
        %s305 = scalar_lea.vmem %s199, %s304 [#allocation4]
        %v306 = vld [vmem:[%s305] sm:$0x3]
        %s307 = scalar_select %p299, 1, 0
        %s308 = scvt.s32.f32 %s307
        %p310 = scmp.ne.f32.partialorder %s308, %s308
        %s311 = sshrl.u32 %s308, 16
        %s312 = sand.u32 %s311, 1
        %s313 = sadd.s32 32767, %s312
        %s314 = sadd.s32 %s308, %s313
        %s315 = sand.u32 %s314, 4294901760
        %s316 = scalar_select %p310, 2143289344, %s315
        %s318 = sshrl.u32 %s316, 16
        %s319 = sshll.u32 %s318, 16
        %s320 = sor.u32 %s318, %s319
        %v321 = vstv %s320
        %v323 = vmul.bf16 %v306, %v321
        %vm324 = vcmask 257027
        %vm325 = vsmask.f32 3328
        %vm326 = vmand %vm324, %vm325
        %v327 = vld [vmem:[#allocation2] sm:$0x8]
        %v328 = vsel %vm326, 0, %v327
        %329 = vst [vmem:[#allocation2] sm:$0x8] %v328
        %vm330 = vcmask 254977
        %vm331 = vsmask.f32 7942
        %vm332 = vmand %vm330, %vm331
        %v333 = vld [vmem:[#allocation2 + $0x4] sm:$0x2]
        %v334 = vsel %vm332, 0, %v333
        %335 = vst [vmem:[#allocation2 + $0x4] sm:$0x2] %v334
        %v338 = vunpack.c.l.s4 1983009808
        %v339 = vunpack.c.0.s8 %v338
        %v340 = vlaneseq
        %v341 = vshrl.u32 %v340, 7
        %v342 = vsub.s32 %v339, %v341
        %v343 = vrot.slane %v323, %v342
        %v345 = vshll.u32 %v343, 16
        %v347 = vrot.slane %v345, 5
        %v348 = vshrl.u32 %v343, 16
        %v350 = vrot.slane %v348, 4
        %v351 = vor.u32 %v350, %v347
        %v352 = vrot.slane %v351, 4
        %vm355 = vsmask.f32 7950
        %vm356 = vmand %vm324, %vm355
        %v357 = vld [vmem:[#allocation2] sm:$0x8]
        %v358 = vsel %vm356, %v347, %v357
        %359 = vst [vmem:[#allocation2] sm:$0x8] %v358
        %vm360 = vcmask 254976
        %vm361 = vsmask.f32 1280
        %vm362 = vmand %vm360, %vm361
        %v363 = vld [vmem:[#allocation2 + $0x4] sm:$0x3]
        %v364 = vsel %vm362, %v352, %v363
        %365 = vst [vmem:[#allocation2 + $0x4] sm:$0x3] %v364
        %s366 = sadd.s32 %s232, 1
        %p367 = scmp.ge.s32.totalorder %s366, 0
        %p368 = scmp.lt.s32.totalorder %s366, 4
        %p369 = pnand %p367, %p368
        %p370 = pneg %p369
        %p371 = scmp.gt.s32.totalorder %s366, 0
        %s372 = scalar_select %p371, %s366, 0
        %p373 = scmp.lt.s32.totalorder %s372, 3
        %s374 = scalar_select %p373, %s372, 3
        %s375 = smul.addr %s374, 2
        %s376 = scalar_lea.vmem %s199, %s375 [#allocation4]
        %v377 = vld [vmem:[%s376] sm:$0x3]
        %s378 = scalar_select %p370, 1, 0
        %s379 = scvt.s32.f32 %s378
        %p381 = scmp.ne.f32.partialorder %s379, %s379
        %s382 = sshrl.u32 %s379, 16
        %s383 = sand.u32 %s382, 1
        %s384 = sadd.s32 32767, %s383
        %s385 = sadd.s32 %s379, %s384
        %s386 = sand.u32 %s385, 4294901760
        %s387 = scalar_select %p381, 2143289344, %s386
        %s389 = sshrl.u32 %s387, 16
        %s390 = sshll.u32 %s389, 16
        %s391 = sor.u32 %s389, %s390
        %v392 = vstv %s391
        %v394 = vmul.bf16 %v377, %v392
        %vm395 = vsmask.f32 2304
        %vm396 = vmand %vm268, %vm395
        %v397 = vld [vmem:[#allocation2 + $0x4] sm:$0x4]
        %v398 = vsel %vm396, 0, %v397
        %399 = vst [vmem:[#allocation2 + $0x4] sm:$0x4] %v398
        %vm400 = vsmask.f32 7938
        %vm401 = vmand %vm262, %vm400
        %v402 = vld [vmem:[#allocation2 + $0x8] sm:$0x1]
        %v403 = vsel %vm401, 0, %v402
        %404 = vst [vmem:[#allocation2 + $0x8] sm:$0x1] %v403
        %v407 = vunpack.c.l.s4 1983009808
        %v408 = vunpack.c.0.s8 %v407
        %v409 = vlaneseq
        %v410 = vshrl.u32 %v409, 7
        %v411 = vsub.s32 %v408, %v410
        %v412 = vrot.slane %v394, %v411
        %v414 = vshrl.u32 %v412, 16
        %v416 = vrot.slane %v414, 5
        %v417 = vshll.u32 %v412, 16
        %v419 = vrot.slane %v417, 6
        %v420 = vor.u32 %v416, %v419
        %v421 = vrot.slane %v416, 4
        %vm424 = vcmask 257026
        %vm425 = vmand %vm424, %vm269
        %v426 = vld [vmem:[#allocation2 + $0x4] sm:$0xc]
        %v427 = vsel %vm425, %v420, %v426
        %428 = vst [vmem:[#allocation2 + $0x4] sm:$0xc] %v427
        %v429 = vld [vmem:[#allocation2 + $0x8] sm:$0x1]
        %v430 = vsel %vm264, %v421, %v429
        %431 = vst [vmem:[#allocation2 + $0x8] sm:$0x1] %v430
        %s432 = sadd.s32 %s232, 2
        %p433 = scmp.ge.s32.totalorder %s432, 0
        %p434 = scmp.lt.s32.totalorder %s432, 4
        %p435 = pnand %p433, %p434
        %p436 = pneg %p435
        %p437 = scmp.gt.s32.totalorder %s432, 0
        %s438 = scalar_select %p437, %s432, 0
        %p439 = scmp.lt.s32.totalorder %s438, 3
        %s440 = scalar_select %p439, %s438, 3
        %s441 = smul.addr %s440, 2
        %s442 = scalar_lea.vmem %s199, %s441 [#allocation4]
        %v443 = vld [vmem:[%s442] sm:$0x3]
        %s444 = scalar_select %p436, 1, 0
        %s445 = scvt.s32.f32 %s444
        %p447 = scmp.ne.f32.partialorder %s445, %s445
        %s448 = sshrl.u32 %s445, 16
        %s449 = sand.u32 %s448, 1
        %s450 = sadd.s32 32767, %s449
        %s451 = sadd.s32 %s445, %s450
        %s452 = sand.u32 %s451, 4294901760
        %s453 = scalar_select %p447, 2143289344, %s452
        %s455 = sshrl.u32 %s453, 16
        %s456 = sshll.u32 %s455, 16
        %s457 = sor.u32 %s455, %s456
        %v458 = vstv %s457
        %v460 = vmul.bf16 %v443, %v458
        %vm461 = vmand %vm330, %vm361
        %v462 = vld [vmem:[#allocation2 + $0x8] sm:$0x2]
        %v463 = vsel %vm461, 0, %v462
        %464 = vst [vmem:[#allocation2 + $0x8] sm:$0x2] %v463
        %v465 = vld [vmem:[#allocation2 + $0x8] sm:$0x8]
        %v466 = vsel %vm356, 0, %v465
        %467 = vst [vmem:[#allocation2 + $0x8] sm:$0x8] %v466
        %v470 = vunpack.c.l.s4 1983009808
        %v471 = vunpack.c.0.s8 %v470
        %v472 = vlaneseq
        %v473 = vshrl.u32 %v472, 7
        %v474 = vsub.s32 %v471, %v473
        %v475 = vrot.slane %v460, %v474
        %v477 = vshrl.u32 %v475, 16
        %v479 = vrot.slane %v477, 6
        %v480 = vshll.u32 %v475, 16
        %v482 = vrot.slane %v480, 7
        %v483 = vor.u32 %v479, %v482
        %vm485 = vcmask 257025
        %vm486 = vsmask.f32 3334
        %vm487 = vmand %vm485, %vm486
        %v488 = vld [vmem:[#allocation2 + $0x8] sm:$0xe]
        %v489 = vsel %vm487, %v483, %v488
        %490 = vst [vmem:[#allocation2 + $0x8] sm:$0xe] %v489
        %s491 = sadd.s32 %s232, 3
        %p492 = scmp.ge.s32.totalorder %s491, 0
        %p493 = scmp.lt.s32.totalorder %s491, 4
        %p494 = pnand %p492, %p493
        %p495 = pneg %p494
        %p496 = scmp.gt.s32.totalorder %s491, 0
        %s497 = scalar_select %p496, %s491, 0
        %p498 = scmp.lt.s32.totalorder %s497, 3
        %s499 = scalar_select %p498, %s497, 3
        %s500 = smul.addr %s499, 2
        %s501 = scalar_lea.vmem %s199, %s500 [#allocation4]
        %v502 = vld [vmem:[%s501] sm:$0x3]
        %s503 = scalar_select %p495, 1, 0
        %s504 = scvt.s32.f32 %s503
        %p506 = scmp.ne.f32.partialorder %s504, %s504
        %s507 = sshrl.u32 %s504, 16
        %s508 = sand.u32 %s507, 1
        %s509 = sadd.s32 32767, %s508
        %s510 = sadd.s32 %s504, %s509
        %s511 = sand.u32 %s510, 4294901760
        %s512 = scalar_select %p506, 2143289344, %s511
        %s514 = sshrl.u32 %s512, 16
        %s515 = sshll.u32 %s514, 16
        %s516 = sor.u32 %s514, %s515
        %v517 = vstv %s516
        %v519 = vmul.bf16 %v502, %v517
        %v520 = vld [vmem:[#allocation2 + $0xc] sm:$0x1]
        %v521 = vsel %vm264, 0, %v520
        %522 = vst [vmem:[#allocation2 + $0xc] sm:$0x1] %v521
        %v523 = vld [vmem:[#allocation2 + $0xc] sm:$0x4]
        %v524 = vsel %vm270, 0, %v523
        %525 = vst [vmem:[#allocation2 + $0xc] sm:$0x4] %v524
        %v528 = vunpack.c.l.s4 1983009808
        %v529 = vunpack.c.0.s8 %v528
        %v530 = vlaneseq
        %v531 = vshrl.u32 %v530, 7
        %v532 = vsub.s32 %v529, %v531
        %v533 = vrot.slane %v519, %v532
        %v535 = vshrl.u32 %v533, 16
        %v537 = vrot.slane %v535, 7
        %v538 = vshll.u32 %v533, 16
        %v540 = vor.u32 %v537, %v538
        %v542 = vld [vmem:[#allocation2 + $0xc] sm:$0x7]
        %v543 = vsel %vm292, %v540, %v542
        %544 = vst [vmem:[#allocation2 + $0xc] sm:$0x7] %v543
        %s545 = sadd.s32 %s232, 4
        %p546 = scmp.ge.s32.totalorder %s545, 0
        %p547 = scmp.lt.s32.totalorder %s545, 4
        %p548 = pnand %p546, %p547
        %p549 = pneg %p548
        %p550 = scmp.gt.s32.totalorder %s545, 0
        %s551 = scalar_select %p550, %s545, 0
        %p552 = scmp.lt.s32.totalorder %s551, 3
        %s553 = scalar_select %p552, %s551, 3
        %s554 = smul.addr %s553, 2
        %s555 = scalar_lea.vmem %s199, %s554 [#allocation4]
        %v556 = vld [vmem:[%s555] sm:$0x3]
        %s557 = scalar_select %p549, 1, 0
        %s558 = scvt.s32.f32 %s557
        %p560 = scmp.ne.f32.partialorder %s558, %s558
        %s561 = sshrl.u32 %s558, 16
        %s562 = sand.u32 %s561, 1
        %s563 = sadd.s32 32767, %s562
        %s564 = sadd.s32 %s558, %s563
        %s565 = sand.u32 %s564, 4294901760
        %s566 = scalar_select %p560, 2143289344, %s565
        %s568 = sshrl.u32 %s566, 16
        %s569 = sshll.u32 %s568, 16
        %s570 = sor.u32 %s568, %s569
        %v571 = vstv %s570
        %v573 = vmul.bf16 %v556, %v571
        %v574 = vld [vmem:[#allocation2 + $0xc] sm:$0x8]
        %v575 = vsel %vm326, 0, %v574
        %576 = vst [vmem:[#allocation2 + $0xc] sm:$0x8] %v575
        %v577 = vld [vmem:[#allocation2 + $0x10] sm:$0x2]
        %v578 = vsel %vm332, 0, %v577
        %579 = vst [vmem:[#allocation2 + $0x10] sm:$0x2] %v578
        %v582 = vunpack.c.l.s4 1983009808
        %v583 = vunpack.c.0.s8 %v582
        %v584 = vlaneseq
        %v585 = vshrl.u32 %v584, 7
        %v586 = vsub.s32 %v583, %v585
        %v587 = vrot.slane %v573, %v586
        %v589 = vshll.u32 %v587, 16
        %v591 = vrot.slane %v589, 5
        %v592 = vshrl.u32 %v587, 16
        %v594 = vrot.slane %v592, 4
        %v595 = vor.u32 %v594, %v591
        %v596 = vrot.slane %v595, 4
        %v599 = vld [vmem:[#allocation2 + $0xc] sm:$0x8]
        %v600 = vsel %vm356, %v591, %v599
        %601 = vst [vmem:[#allocation2 + $0xc] sm:$0x8] %v600
        %v602 = vld [vmem:[#allocation2 + $0x10] sm:$0x3]
        %v603 = vsel %vm362, %v596, %v602
        %604 = vst [vmem:[#allocation2 + $0x10] sm:$0x3] %v603
        %vm605 = vcmask 256002
        %606 = vst.msk [vmem:[#allocation2 + $0x10] sm:$0x4] %vm605, 0
        %607 = vst [vmem:[#allocation3] sm:$0xff] 0.0
        %608 = vst [vmem:[#allocation3 + $0x8] sm:$0xff] 0.0
        %609 = vst [vmem:[#allocation3 + $0x10] sm:$0xff] 0.0
        %610 = vst [vmem:[#allocation3 + $0x18] sm:$0xff] 0.0
        %611 = vst [vmem:[#allocation3 + $0x20] sm:$0xff] 0.0
        %612 = vst [vmem:[#allocation3 + $0x28] sm:$0xff] 0.0
        %613 = vst [vmem:[#allocation3 + $0x30] sm:$0xff] 0.0
        %614 = vst [vmem:[#allocation3 + $0x38] sm:$0xff] 0.0
        %615 = vst [vmem:[#allocation3 + $0x40] sm:$0xff] 0.0
        %616 = vst [vmem:[#allocation3 + $0x48] sm:$0xff] 0.0
        %617 = vst [vmem:[#allocation3 + $0x50] sm:$0xff] 0.0
        %618 = vst [vmem:[#allocation3 + $0x58] sm:$0xff] 0.0
        %v619 = vld [vmem:[#allocation2] sm:$0xf]
        %v620 = vld [vmem:[#allocation2 + $0x4] sm:$0xf]
        %v621 = vld [vmem:[#allocation2 + $0x8] sm:$0xf]
        %v622 = vld [vmem:[#allocation3] sm:$0xff]
        %v623 = vld [vmem:[#allocation3 + $0x8] sm:$0xff]
        %v624 = vld [vmem:[#allocation3 + $0x10] sm:$0xff]
        %v625 = vld [vmem:[#allocation3 + $0x18] sm:$0xff]
        %v626 = vld [vmem:[#allocation3 + $0x20] sm:$0xff]
        %v627 = vld [vmem:[#allocation3 + $0x28] sm:$0xff]
        %v628 = vld [vmem:[#allocation3 + $0x30] sm:$0xff]
        %v629 = vld [vmem:[#allocation3 + $0x38] sm:$0xff]
        %v630 = vld [vmem:[#allocation3 + $0x40] sm:$0xff]
        %v631 = vld [vmem:[#allocation3 + $0x48] sm:$0xff]
        %v632 = vld [vmem:[#allocation3 + $0x50] sm:$0xff]
        %v633 = vld [vmem:[#allocation3 + $0x58] sm:$0xff]
        %v634 = vld [vmem:[#allocation7] sm:$0xff]
        %v635 = vld [vmem:[#allocation7 + $0x8] sm:$0xff]
        %v636 = vld [vmem:[#allocation7 + $0x10] sm:$0xff]
        %v637 = vld [vmem:[#allocation7 + $0x18] sm:$0xff]
        %v638 = vld [vmem:[#allocation7 + $0x20] sm:$0xff]
        %v639 = vld [vmem:[#allocation7 + $0x28] sm:$0xff]
        %v640 = vld [vmem:[#allocation7 + $0x30] sm:$0xff]
        %v641 = vld [vmem:[#allocation7 + $0x38] sm:$0xff]
        %v645 = vunpack.c.l.b16 %v619
        %v646 = vunpack.c.l.b16 %v620
        %v647 = vunpack.c.l.b16 %v621
        %v648 = vpack.c.b16 %v646, %v645
        %v649 = vpack.c.b16 %v647, %v647
        %v658 = vunpack.c.l.b16 %v634
        %v659 = vunpack.c.h.b16 %v634
        %v660 = vunpack.c.l.b16 %v635
        %v661 = vunpack.c.h.b16 %v635
        %v662 = vunpack.c.l.b16 %v636
        %v663 = vunpack.c.h.b16 %v636
        %v664 = vunpack.c.l.b16 %v637
        %v665 = vunpack.c.h.b16 %v637
        %v666 = vunpack.c.l.b16 %v638
        %v667 = vunpack.c.h.b16 %v638
        %v668 = vunpack.c.l.b16 %v639
        %v669 = vunpack.c.h.b16 %v639
        %v670 = vunpack.c.l.b16 %v640
        %v671 = vunpack.c.h.b16 %v640
        %v672 = vunpack.c.l.b16 %v641
        %v673 = vunpack.c.h.b16 %v641
        %v674 = vpack.c.b16 %v662, %v658
        %v675 = vpack.c.b16 %v663, %v659
        %v676 = vpack.c.b16 %v664, %v660
        %v677 = vpack.c.b16 %v665, %v661
        %v678 = vpack.c.b16 %v670, %v666
        %v679 = vpack.c.b16 %v671, %v667
        %v680 = vpack.c.b16 %v672, %v668
        %v681 = vpack.c.b16 %v673, %v669
        %vm690 = vcmask 261120
        %v692 = vsel %vm690, %v648, 0
        %v695 = vsel %vm690, %v649, 0
        %697 = vmatprep.subr.bf16.mxu0 0
        %698 = vmatpush1.bf16.msra.mxu0 0
        %699 = vmatprep.subr.bf16.mxu0 0
        %700 = vmatpush1.bf16.msra.mxu0 0
        %701 = vmatprep.subr.bf16.mxu0 0
        %702 = vmatpush1.bf16.msra.mxu0 0
        %703 = vmatprep.subr.bf16.mxu0 0
        %704 = vmatpush1.bf16.msra.mxu0 0
        %705 = vmatprep.subr.bf16.mxu0 0
        %706 = vmatpush1.bf16.msra.mxu0 0
        %707 = vmatprep.subr.bf16.mxu0 0
        %708 = vmatpush1.bf16.msra.mxu0 0
        %709 = vmatprep.subr.bf16.mxu0 %v679
        %710 = vmatpush1.bf16.msra.mxu0 %v678
        %711 = vmatprep.subr.bf16.mxu0 %v675
        %712 = vmatpush1.bf16.msra.mxu0 %v674
        %713 = vmatprep.subr.bf16.mxu0 0
        %714 = vmatpush2.bf16.msra.mxu0 0
        %715 = vmatprep.subr.bf16.mxu0 0
        %716 = vmatpush2.bf16.msra.mxu0 0
        %717 = vmatprep.subr.bf16.mxu0 0
        %718 = vmatpush2.bf16.msra.mxu0 0
        %719 = vmatprep.subr.bf16.mxu0 0
        %720 = vmatpush2.bf16.msra.mxu0 0
        %721 = vmatprep.subr.bf16.mxu0 0
        %722 = vmatpush2.bf16.msra.mxu0 0
        %723 = vmatprep.subr.bf16.mxu0 0
        %724 = vmatpush2.bf16.msra.mxu0 0
        %725 = vmatprep.subr.bf16.mxu0 0
        %726 = vmatpush2.bf16.msra.mxu0 0
        %727 = vmatprep.subr.bf16.mxu0 0
        %728 = vmatpush2.bf16.msra.mxu0 0
        %729 = vmatprep.mubr.bf16.mxu0 0
        %730 = vmatmul.mubr.bf16.gmra.mxu0 %v692
        %v731 = vpop.f32.mrf.mxu0
        %v732 = vadd.f32 0.0, %v731
        %v733 = vpop.f32.mrf.mxu0
        %v734 = vadd.f32 0.0, %v733
        %v735 = vpop.f32.mrf.mxu0
        %v736 = vadd.f32 0.0, %v735
        %v737 = vpop.f32.mrf.mxu0
        %v738 = vadd.f32 0.0, %v737
        %739 = vmatprep.mubr.bf16.mxu0 0
        %740 = vmatmul.mubr.bf16.gmra.mxu0 %v695
        %v741 = vpop.f32.mrf.mxu0
        %v742 = vadd.f32 0.0, %v741
        %v743 = vpop.f32.mrf.mxu0
        %v744 = vadd.f32 0.0, %v743
        %v745 = vpop.f32.mrf.mxu0
        %v746 = vpop.f32.mrf.mxu0
        %747 = vdwg.mxu0
        %748 = vmatprep.subr.bf16.mxu0 0
        %749 = vmatpush1.bf16.msra.mxu0 0
        %750 = vmatprep.subr.bf16.mxu0 0
        %751 = vmatpush1.bf16.msra.mxu0 0
        %752 = vmatprep.subr.bf16.mxu0 0
        %753 = vmatpush1.bf16.msra.mxu0 0
        %754 = vmatprep.subr.bf16.mxu0 0
        %755 = vmatpush1.bf16.msra.mxu0 0
        %756 = vmatprep.subr.bf16.mxu0 0
        %757 = vmatpush1.bf16.msra.mxu0 0
        %758 = vmatprep.subr.bf16.mxu0 0
        %759 = vmatpush1.bf16.msra.mxu0 0
        %760 = vmatprep.subr.bf16.mxu0 %v681
        %761 = vmatpush1.bf16.msra.mxu0 %v680
        %762 = vmatprep.subr.bf16.mxu0 %v677
        %763 = vmatpush1.bf16.msra.mxu0 %v676
        %764 = vmatprep.subr.bf16.mxu0 0
        %765 = vmatpush2.bf16.msra.mxu0 0
        %766 = vmatprep.subr.bf16.mxu0 0
        %767 = vmatpush2.bf16.msra.mxu0 0
        %768 = vmatprep.subr.bf16.mxu0 0
        %769 = vmatpush2.bf16.msra.mxu0 0
        %770 = vmatprep.subr.bf16.mxu0 0
        %771 = vmatpush2.bf16.msra.mxu0 0
        %772 = vmatprep.subr.bf16.mxu0 0
        %773 = vmatpush2.bf16.msra.mxu0 0
        %774 = vmatprep.subr.bf16.mxu0 0
        %775 = vmatpush2.bf16.msra.mxu0 0
        %776 = vmatprep.subr.bf16.mxu0 0
        %777 = vmatpush2.bf16.msra.mxu0 0
        %778 = vmatprep.subr.bf16.mxu0 0
        %779 = vmatpush2.bf16.msra.mxu0 0
        %780 = vmatprep.mubr.bf16.mxu0 0
        %781 = vmatmul.mubr.bf16.gmra.mxu0 %v692
        %v782 = vpop.f32.mrf.mxu0
        %v783 = vadd.f32 0.0, %v782
        %v784 = vpop.f32.mrf.mxu0
        %v785 = vadd.f32 0.0, %v784
        %v786 = vpop.f32.mrf.mxu0
        %v787 = vadd.f32 0.0, %v786
        %v788 = vpop.f32.mrf.mxu0
        %v789 = vadd.f32 0.0, %v788
        %790 = vmatprep.mubr.bf16.mxu0 0
        %791 = vmatmul.mubr.bf16.gmra.mxu0 %v695
        %v792 = vpop.f32.mrf.mxu0
        %v793 = vadd.f32 0.0, %v792
        %v794 = vpop.f32.mrf.mxu0
        %v795 = vadd.f32 0.0, %v794
        %v796 = vpop.f32.mrf.mxu0
        %v797 = vpop.f32.mrf.mxu0
        %798 = vdwg.mxu0
        %v799 = vadd.f32 %v622, %v732
        %v800 = vadd.f32 %v623, %v734
        %v801 = vadd.f32 %v624, %v783
        %v802 = vadd.f32 %v625, %v785
        %v803 = vadd.f32 %v626, %v736
        %v804 = vadd.f32 %v627, %v738
        %v805 = vadd.f32 %v628, %v787
        %v806 = vadd.f32 %v629, %v789
        %v807 = vadd.f32 %v630, %v742
        %v808 = vadd.f32 %v631, %v744
        %v809 = vadd.f32 %v632, %v793
        %v810 = vadd.f32 %v633, %v795
        %811 = vst [vmem:[#allocation3] sm:$0xff] %v799
        %812 = vst [vmem:[#allocation3 + $0x8] sm:$0xff] %v800
        %813 = vst [vmem:[#allocation3 + $0x10] sm:$0xff] %v801
        %814 = vst [vmem:[#allocation3 + $0x18] sm:$0xff] %v802
        %815 = vst [vmem:[#allocation3 + $0x20] sm:$0xff] %v803
        %816 = vst [vmem:[#allocation3 + $0x28] sm:$0xff] %v804
        %817 = vst [vmem:[#allocation3 + $0x30] sm:$0xff] %v805
        %818 = vst [vmem:[#allocation3 + $0x38] sm:$0xff] %v806
        %819 = vst [vmem:[#allocation3 + $0x40] sm:$0xff] %v807
        %820 = vst [vmem:[#allocation3 + $0x48] sm:$0xff] %v808
        %821 = vst [vmem:[#allocation3 + $0x50] sm:$0xff] %v809
        %822 = vst [vmem:[#allocation3 + $0x58] sm:$0xff] %v810
        %v823 = vld [vmem:[#allocation2] sm:$0xf]
        %v824 = vld [vmem:[#allocation2 + $0x4] sm:$0xf]
        %v825 = vld [vmem:[#allocation2 + $0x8] sm:$0xf]
        %v826 = vld [vmem:[#allocation2 + $0xc] sm:$0x1]
        %v827 = vld [vmem:[#allocation3] sm:$0xff]
        %v828 = vld [vmem:[#allocation3 + $0x8] sm:$0xff]
        %v829 = vld [vmem:[#allocation3 + $0x10] sm:$0xff]
        %v830 = vld [vmem:[#allocation3 + $0x18] sm:$0xff]
        %v831 = vld [vmem:[#allocation3 + $0x20] sm:$0xff]
        %v832 = vld [vmem:[#allocation3 + $0x28] sm:$0xff]
        %v833 = vld [vmem:[#allocation3 + $0x30] sm:$0xff]
        %v834 = vld [vmem:[#allocation3 + $0x38] sm:$0xff]
        %v835 = vld [vmem:[#allocation3 + $0x40] sm:$0xff]
        %v836 = vld [vmem:[#allocation3 + $0x48] sm:$0xff]
        %v837 = vld [vmem:[#allocation3 + $0x50] sm:$0xff]
        %v838 = vld [vmem:[#allocation3 + $0x58] sm:$0xff]
        %s839 = scalar_lea.vmem [#allocation7], 64
        %v840 = vld [vmem:[%s839] sm:$0xff]
        %v841 = vld [vmem:[%s839 + $0x8] sm:$0xff]
        %v842 = vld [vmem:[%s839 + $0x10] sm:$0xff]
        %v843 = vld [vmem:[%s839 + $0x18] sm:$0xff]
        %v844 = vld [vmem:[%s839 + $0x20] sm:$0xff]
        %v845 = vld [vmem:[%s839 + $0x28] sm:$0xff]
        %v846 = vld [vmem:[%s839 + $0x30] sm:$0xff]
        %v847 = vld [vmem:[%s839 + $0x38] sm:$0xff]
        %v852 = vunpack.c.l.b16 %v823
        %v853 = vunpack.c.l.b16 %v824
        %v854 = vunpack.c.l.b16 %v825
        %v855 = vunpack.c.l.b16 %v826
        %v856 = vpack.c.b16 %v853, %v852
        %v857 = vpack.c.b16 %v855, %v854
        %vm858 = vsmask.f32 7424
        %v860 = vshrl.u32 %v856, 16
        %v862 = vshll.u32 %v856, 16
        %v864 = vrot.slane %v862, 1
        %v865 = vor.u32 %v860, %v864
        %v867 = vshll.u32 %v857, 16
        %v869 = vrot.slane %v867, 1
        %v870 = vsel %vm858, %v865, %v869
        %v871 = vshrl.u32 %v857, 16
        %v873 = vor.u32 %v871, %v869
        %v882 = vunpack.c.l.b16 %v840
        %v883 = vunpack.c.h.b16 %v840
        %v884 = vunpack.c.l.b16 %v841
        %v885 = vunpack.c.h.b16 %v841
        %v886 = vunpack.c.l.b16 %v842
        %v887 = vunpack.c.h.b16 %v842
        %v888 = vunpack.c.l.b16 %v843
        %v889 = vunpack.c.h.b16 %v843
        %v890 = vunpack.c.l.b16 %v844
        %v891 = vunpack.c.h.b16 %v844
        %v892 = vunpack.c.l.b16 %v845
        %v893 = vunpack.c.h.b16 %v845
        %v894 = vunpack.c.l.b16 %v846
        %v895 = vunpack.c.h.b16 %v846
        %v896 = vunpack.c.l.b16 %v847
        %v897 = vunpack.c.h.b16 %v847
        %v898 = vpack.c.b16 %v886, %v882
        %v899 = vpack.c.b16 %v887, %v883
        %v900 = vpack.c.b16 %v888, %v884
        %v901 = vpack.c.b16 %v889, %v885
        %v902 = vpack.c.b16 %v894, %v890
        %v903 = vpack.c.b16 %v895, %v891
        %v904 = vpack.c.b16 %v896, %v892
        %v905 = vpack.c.b16 %v897, %v893
        %v915 = vsel %vm690, %v870, 0
        %v918 = vsel %vm690, %v873, 0
        %920 = vmatprep.subr.bf16.mxu0 0
        %921 = vmatpush1.bf16.msra.mxu0 0
        %922 = vmatprep.subr.bf16.mxu0 0
        %923 = vmatpush1.bf16.msra.mxu0 0
        %924 = vmatprep.subr.bf16.mxu0 0
        %925 = vmatpush1.bf16.msra.mxu0 0
        %926 = vmatprep.subr.bf16.mxu0 0
        %927 = vmatpush1.bf16.msra.mxu0 0
        %928 = vmatprep.subr.bf16.mxu0 0
        %929 = vmatpush1.bf16.msra.mxu0 0
        %930 = vmatprep.subr.bf16.mxu0 0
        %931 = vmatpush1.bf16.msra.mxu0 0
        %932 = vmatprep.subr.bf16.mxu0 %v903
        %933 = vmatpush1.bf16.msra.mxu0 %v902
        %934 = vmatprep.subr.bf16.mxu0 %v899
        %935 = vmatpush1.bf16.msra.mxu0 %v898
        %936 = vmatprep.subr.bf16.mxu0 0
        %937 = vmatpush2.bf16.msra.mxu0 0
        %938 = vmatprep.subr.bf16.mxu0 0
        %939 = vmatpush2.bf16.msra.mxu0 0
        %940 = vmatprep.subr.bf16.mxu0 0
        %941 = vmatpush2.bf16.msra.mxu0 0
        %942 = vmatprep.subr.bf16.mxu0 0
        %943 = vmatpush2.bf16.msra.mxu0 0
        %944 = vmatprep.subr.bf16.mxu0 0
        %945 = vmatpush2.bf16.msra.mxu0 0
        %946 = vmatprep.subr.bf16.mxu0 0
        %947 = vmatpush2.bf16.msra.mxu0 0
        %948 = vmatprep.subr.bf16.mxu0 0
        %949 = vmatpush2.bf16.msra.mxu0 0
        %950 = vmatprep.subr.bf16.mxu0 0
        %951 = vmatpush2.bf16.msra.mxu0 0
        %952 = vmatprep.mubr.bf16.mxu0 0
        %953 = vmatmul.mubr.bf16.gmra.mxu0 %v915
        %v954 = vpop.f32.mrf.mxu0
        %v955 = vadd.f32 0.0, %v954
        %v956 = vpop.f32.mrf.mxu0
        %v957 = vadd.f32 0.0, %v956
        %v958 = vpop.f32.mrf.mxu0
        %v959 = vadd.f32 0.0, %v958
        %v960 = vpop.f32.mrf.mxu0
        %v961 = vadd.f32 0.0, %v960
        %962 = vmatprep.mubr.bf16.mxu0 0
        %963 = vmatmul.mubr.bf16.gmra.mxu0 %v918
        %v964 = vpop.f32.mrf.mxu0
        %v965 = vadd.f32 0.0, %v964
        %v966 = vpop.f32.mrf.mxu0
        %v967 = vadd.f32 0.0, %v966
        %v968 = vpop.f32.mrf.mxu0
        %v969 = vpop.f32.mrf.mxu0
        %970 = vdwg.mxu0
        %971 = vmatprep.subr.bf16.mxu0 0
        %972 = vmatpush1.bf16.msra.mxu0 0
        %973 = vmatprep.subr.bf16.mxu0 0
        %974 = vmatpush1.bf16.msra.mxu0 0
        %975 = vmatprep.subr.bf16.mxu0 0
        %976 = vmatpush1.bf16.msra.mxu0 0
        %977 = vmatprep.subr.bf16.mxu0 0
        %978 = vmatpush1.bf16.msra.mxu0 0
        %979 = vmatprep.subr.bf16.mxu0 0
        %980 = vmatpush1.bf16.msra.mxu0 0
        %981 = vmatprep.subr.bf16.mxu0 0
        %982 = vmatpush1.bf16.msra.mxu0 0
        %983 = vmatprep.subr.bf16.mxu0 %v905
        %984 = vmatpush1.bf16.msra.mxu0 %v904
        %985 = vmatprep.subr.bf16.mxu0 %v901
        %986 = vmatpush1.bf16.msra.mxu0 %v900
        %987 = vmatprep.subr.bf16.mxu0 0
        %988 = vmatpush2.bf16.msra.mxu0 0
        %989 = vmatprep.subr.bf16.mxu0 0
        %990 = vmatpush2.bf16.msra.mxu0 0
        %991 = vmatprep.subr.bf16.mxu0 0
        %992 = vmatpush2.bf16.msra.mxu0 0
        %993 = vmatprep.subr.bf16.mxu0 0
        %994 = vmatpush2.bf16.msra.mxu0 0
        %995 = vmatprep.subr.bf16.mxu0 0
        %996 = vmatpush2.bf16.msra.mxu0 0
        %997 = vmatprep.subr.bf16.mxu0 0
        %998 = vmatpush2.bf16.msra.mxu0 0
        %999 = vmatprep.subr.bf16.mxu0 0
        %1000 = vmatpush2.bf16.msra.mxu0 0
        %1001 = vmatprep.subr.bf16.mxu0 0
        %1002 = vmatpush2.bf16.msra.mxu0 0
        %1003 = vmatprep.mubr.bf16.mxu0 0
        %1004 = vmatmul.mubr.bf16.gmra.mxu0 %v915
        %v1005 = vpop.f32.mrf.mxu0
        %v1006 = vadd.f32 0.0, %v1005
        %v1007 = vpop.f32.mrf.mxu0
        %v1008 = vadd.f32 0.0, %v1007
        %v1009 = vpop.f32.mrf.mxu0
        %v1010 = vadd.f32 0.0, %v1009
        %v1011 = vpop.f32.mrf.mxu0
        %v1012 = vadd.f32 0.0, %v1011
        %1013 = vmatprep.mubr.bf16.mxu0 0
        %1014 = vmatmul.mubr.bf16.gmra.mxu0 %v918
        %v1015 = vpop.f32.mrf.mxu0
        %v1016 = vadd.f32 0.0, %v1015
        %v1017 = vpop.f32.mrf.mxu0
        %v1018 = vadd.f32 0.0, %v1017
        %v1019 = vpop.f32.mrf.mxu0
        %v1020 = vpop.f32.mrf.mxu0
        %1021 = vdwg.mxu0
        %v1022 = vadd.f32 %v827, %v955
        %v1023 = vadd.f32 %v828, %v957
        %v1024 = vadd.f32 %v829, %v1006
        %v1025 = vadd.f32 %v830, %v1008
        %v1026 = vadd.f32 %v831, %v959
        %v1027 = vadd.f32 %v832, %v961
        %v1028 = vadd.f32 %v833, %v1010
        %v1029 = vadd.f32 %v834, %v1012
        %v1030 = vadd.f32 %v835, %v965
        %v1031 = vadd.f32 %v836, %v967
        %v1032 = vadd.f32 %v837, %v1016
        %v1033 = vadd.f32 %v838, %v1018
        %1034 = vst [vmem:[#allocation3] sm:$0xff] %v1022
        %1035 = vst [vmem:[#allocation3 + $0x8] sm:$0xff] %v1023
        %1036 = vst [vmem:[#allocation3 + $0x10] sm:$0xff] %v1024
        %1037 = vst [vmem:[#allocation3 + $0x18] sm:$0xff] %v1025
        %1038 = vst [vmem:[#allocation3 + $0x20] sm:$0xff] %v1026
        %1039 = vst [vmem:[#allocation3 + $0x28] sm:$0xff] %v1027
        %1040 = vst [vmem:[#allocation3 + $0x30] sm:$0xff] %v1028
        %1041 = vst [vmem:[#allocation3 + $0x38] sm:$0xff] %v1029
        %1042 = vst [vmem:[#allocation3 + $0x40] sm:$0xff] %v1030
        %1043 = vst [vmem:[#allocation3 + $0x48] sm:$0xff] %v1031
        %1044 = vst [vmem:[#allocation3 + $0x50] sm:$0xff] %v1032
        %1045 = vst [vmem:[#allocation3 + $0x58] sm:$0xff] %v1033
        %v1046 = vld [vmem:[#allocation2] sm:$0xe]
        %v1047 = vld [vmem:[#allocation2 + $0x4] sm:$0xf]
        %v1048 = vld [vmem:[#allocation2 + $0x8] sm:$0xf]
        %v1049 = vld [vmem:[#allocation2 + $0xc] sm:$0x1]
        %v1050 = vld [vmem:[#allocation3] sm:$0xff]
        %v1051 = vld [vmem:[#allocation3 + $0x8] sm:$0xff]
        %v1052 = vld [vmem:[#allocation3 + $0x10] sm:$0xff]
        %v1053 = vld [vmem:[#allocation3 + $0x18] sm:$0xff]
        %v1054 = vld [vmem:[#allocation3 + $0x20] sm:$0xff]
        %v1055 = vld [vmem:[#allocation3 + $0x28] sm:$0xff]
        %v1056 = vld [vmem:[#allocation3 + $0x30] sm:$0xff]
        %v1057 = vld [vmem:[#allocation3 + $0x38] sm:$0xff]
        %v1058 = vld [vmem:[#allocation3 + $0x40] sm:$0xff]
        %v1059 = vld [vmem:[#allocation3 + $0x48] sm:$0xff]
        %v1060 = vld [vmem:[#allocation3 + $0x50] sm:$0xff]
        %v1061 = vld [vmem:[#allocation3 + $0x58] sm:$0xff]
        %s1062 = scalar_lea.vmem [#allocation7], 128
        %v1063 = vld [vmem:[%s1062] sm:$0xff]
        %v1064 = vld [vmem:[%s1062 + $0x8] sm:$0xff]
        %v1065 = vld [vmem:[%s1062 + $0x10] sm:$0xff]
        %v1066 = vld [vmem:[%s1062 + $0x18] sm:$0xff]
        %v1067 = vld [vmem:[%s1062 + $0x20] sm:$0xff]
        %v1068 = vld [vmem:[%s1062 + $0x28] sm:$0xff]
        %v1069 = vld [vmem:[%s1062 + $0x30] sm:$0xff]
        %v1070 = vld [vmem:[%s1062 + $0x38] sm:$0xff]
        %v1075 = vunpack.c.l.b16 %v1046
        %v1076 = vunpack.c.l.b16 %v1047
        %v1077 = vunpack.c.l.b16 %v1048
        %v1078 = vunpack.c.l.b16 %v1049
        %v1079 = vpack.c.b16 %v1076, %v1075
        %v1080 = vpack.c.b16 %v1078, %v1077
        %vm1081 = vcmask 1046528
        %v1082 = vrot.slane %v1079, 1
        %v1083 = vrot.slane %v1080, 1
        %v1084 = vsel %vm1081, %v1082, %v1083
        %v1093 = vunpack.c.l.b16 %v1063
        %v1094 = vunpack.c.h.b16 %v1063
        %v1095 = vunpack.c.l.b16 %v1064
        %v1096 = vunpack.c.h.b16 %v1064
        %v1097 = vunpack.c.l.b16 %v1065
        %v1098 = vunpack.c.h.b16 %v1065
        %v1099 = vunpack.c.l.b16 %v1066
        %v1100 = vunpack.c.h.b16 %v1066
        %v1101 = vunpack.c.l.b16 %v1067
        %v1102 = vunpack.c.h.b16 %v1067
        %v1103 = vunpack.c.l.b16 %v1068
        %v1104 = vunpack.c.h.b16 %v1068
        %v1105 = vunpack.c.l.b16 %v1069
        %v1106 = vunpack.c.h.b16 %v1069
        %v1107 = vunpack.c.l.b16 %v1070
        %v1108 = vunpack.c.h.b16 %v1070
        %v1109 = vpack.c.b16 %v1097, %v1093
        %v1110 = vpack.c.b16 %v1098, %v1094
        %v1111 = vpack.c.b16 %v1099, %v1095
        %v1112 = vpack.c.b16 %v1100, %v1096
        %v1113 = vpack.c.b16 %v1105, %v1101
        %v1114 = vpack.c.b16 %v1106, %v1102
        %v1115 = vpack.c.b16 %v1107, %v1103
        %v1116 = vpack.c.b16 %v1108, %v1104
        %v1126 = vsel %vm690, %v1084, 0
        %v1129 = vsel %vm690, %v1083, 0
        %1131 = vmatprep.subr.bf16.mxu0 0
        %1132 = vmatpush1.bf16.msra.mxu0 0
        %1133 = vmatprep.subr.bf16.mxu0 0
        %1134 = vmatpush1.bf16.msra.mxu0 0
        %1135 = vmatprep.subr.bf16.mxu0 0
        %1136 = vmatpush1.bf16.msra.mxu0 0
        %1137 = vmatprep.subr.bf16.mxu0 0
        %1138 = vmatpush1.bf16.msra.mxu0 0
        %1139 = vmatprep.subr.bf16.mxu0 0
        %1140 = vmatpush1.bf16.msra.mxu0 0
        %1141 = vmatprep.subr.bf16.mxu0 0
        %1142 = vmatpush1.bf16.msra.mxu0 0
        %1143 = vmatprep.subr.bf16.mxu0 %v1114
        %1144 = vmatpush1.bf16.msra.mxu0 %v1113
        %1145 = vmatprep.subr.bf16.mxu0 %v1110
        %1146 = vmatpush1.bf16.msra.mxu0 %v1109
        %1147 = vmatprep.subr.bf16.mxu0 0
        %1148 = vmatpush2.bf16.msra.mxu0 0
        %1149 = vmatprep.subr.bf16.mxu0 0
        %1150 = vmatpush2.bf16.msra.mxu0 0
        %1151 = vmatprep.subr.bf16.mxu0 0
        %1152 = vmatpush2.bf16.msra.mxu0 0
        %1153 = vmatprep.subr.bf16.mxu0 0
        %1154 = vmatpush2.bf16.msra.mxu0 0
        %1155 = vmatprep.subr.bf16.mxu0 0
        %1156 = vmatpush2.bf16.msra.mxu0 0
        %1157 = vmatprep.subr.bf16.mxu0 0
        %1158 = vmatpush2.bf16.msra.mxu0 0
        %1159 = vmatprep.subr.bf16.mxu0 0
        %1160 = vmatpush2.bf16.msra.mxu0 0
        %1161 = vmatprep.subr.bf16.mxu0 0
        %1162 = vmatpush2.bf16.msra.mxu0 0
        %1163 = vmatprep.mubr.bf16.mxu0 0
        %1164 = vmatmul.mubr.bf16.gmra.mxu0 %v1126
        %v1165 = vpop.f32.mrf.mxu0
        %v1166 = vadd.f32 0.0, %v1165
        %v1167 = vpop.f32.mrf.mxu0
        %v1168 = vadd.f32 0.0, %v1167
        %v1169 = vpop.f32.mrf.mxu0
        %v1170 = vadd.f32 0.0, %v1169
        %v1171 = vpop.f32.mrf.mxu0
        %v1172 = vadd.f32 0.0, %v1171
        %1173 = vmatprep.mubr.bf16.mxu0 0
        %1174 = vmatmul.mubr.bf16.gmra.mxu0 %v1129
        %v1175 = vpop.f32.mrf.mxu0
        %v1176 = vadd.f32 0.0, %v1175
        %v1177 = vpop.f32.mrf.mxu0
        %v1178 = vadd.f32 0.0, %v1177
        %v1179 = vpop.f32.mrf.mxu0
        %v1180 = vpop.f32.mrf.mxu0
        %1181 = vdwg.mxu0
        %1182 = vmatprep.subr.bf16.mxu0 0
        %1183 = vmatpush1.bf16.msra.mxu0 0
        %1184 = vmatprep.subr.bf16.mxu0 0
        %1185 = vmatpush1.bf16.msra.mxu0 0
        %1186 = vmatprep.subr.bf16.mxu0 0
        %1187 = vmatpush1.bf16.msra.mxu0 0
        %1188 = vmatprep.subr.bf16.mxu0 0
        %1189 = vmatpush1.bf16.msra.mxu0 0
        %1190 = vmatprep.subr.bf16.mxu0 0
        %1191 = vmatpush1.bf16.msra.mxu0 0
        %1192 = vmatprep.subr.bf16.mxu0 0
        %1193 = vmatpush1.bf16.msra.mxu0 0
        %1194 = vmatprep.subr.bf16.mxu0 %v1116
        %1195 = vmatpush1.bf16.msra.mxu0 %v1115
        %1196 = vmatprep.subr.bf16.mxu0 %v1112
        %1197 = vmatpush1.bf16.msra.mxu0 %v1111
        %1198 = vmatprep.subr.bf16.mxu0 0
        %1199 = vmatpush2.bf16.msra.mxu0 0
        %1200 = vmatprep.subr.bf16.mxu0 0
        %1201 = vmatpush2.bf16.msra.mxu0 0
        %1202 = vmatprep.subr.bf16.mxu0 0
        %1203 = vmatpush2.bf16.msra.mxu0 0
        %1204 = vmatprep.subr.bf16.mxu0 0
        %1205 = vmatpush2.bf16.msra.mxu0 0
        %1206 = vmatprep.subr.bf16.mxu0 0
        %1207 = vmatpush2.bf16.msra.mxu0 0
        %1208 = vmatprep.subr.bf16.mxu0 0
        %1209 = vmatpush2.bf16.msra.mxu0 0
        %1210 = vmatprep.subr.bf16.mxu0 0
        %1211 = vmatpush2.bf16.msra.mxu0 0
        %1212 = vmatprep.subr.bf16.mxu0 0
        %1213 = vmatpush2.bf16.msra.mxu0 0
        %1214 = vmatprep.mubr.bf16.mxu0 0
        %1215 = vmatmul.mubr.bf16.gmra.mxu0 %v1126
        %v1216 = vpop.f32.mrf.mxu0
        %v1217 = vadd.f32 0.0, %v1216
        %v1218 = vpop.f32.mrf.mxu0
        %v1219 = vadd.f32 0.0, %v1218
        %v1220 = vpop.f32.mrf.mxu0
        %v1221 = vadd.f32 0.0, %v1220
        %v1222 = vpop.f32.mrf.mxu0
        %v1223 = vadd.f32 0.0, %v1222
        %1224 = vmatprep.mubr.bf16.mxu0 0
        %1225 = vmatmul.mubr.bf16.gmra.mxu0 %v1129
        %v1226 = vpop.f32.mrf.mxu0
        %v1227 = vadd.f32 0.0, %v1226
        %v1228 = vpop.f32.mrf.mxu0
        %v1229 = vadd.f32 0.0, %v1228
        %v1230 = vpop.f32.mrf.mxu0
        %v1231 = vpop.f32.mrf.mxu0
        %1232 = vdwg.mxu0
        %v1233 = vadd.f32 %v1050, %v1166
        %v1234 = vadd.f32 %v1051, %v1168
        %v1235 = vadd.f32 %v1052, %v1217
        %v1236 = vadd.f32 %v1053, %v1219
        %v1237 = vadd.f32 %v1054, %v1170
        %v1238 = vadd.f32 %v1055, %v1172
        %v1239 = vadd.f32 %v1056, %v1221
        %v1240 = vadd.f32 %v1057, %v1223
        %v1241 = vadd.f32 %v1058, %v1176
        %v1242 = vadd.f32 %v1059, %v1178
        %v1243 = vadd.f32 %v1060, %v1227
        %v1244 = vadd.f32 %v1061, %v1229
        %1245 = vst [vmem:[#allocation3] sm:$0xff] %v1233
        %1246 = vst [vmem:[#allocation3 + $0x8] sm:$0xff] %v1234
        %1247 = vst [vmem:[#allocation3 + $0x10] sm:$0xff] %v1235
        %1248 = vst [vmem:[#allocation3 + $0x18] sm:$0xff] %v1236
        %1249 = vst [vmem:[#allocation3 + $0x20] sm:$0xff] %v1237
        %1250 = vst [vmem:[#allocation3 + $0x28] sm:$0xff] %v1238
        %1251 = vst [vmem:[#allocation3 + $0x30] sm:$0xff] %v1239
        %1252 = vst [vmem:[#allocation3 + $0x38] sm:$0xff] %v1240
        %1253 = vst [vmem:[#allocation3 + $0x40] sm:$0xff] %v1241
        %1254 = vst [vmem:[#allocation3 + $0x48] sm:$0xff] %v1242
        %1255 = vst [vmem:[#allocation3 + $0x50] sm:$0xff] %v1243
        %1256 = vst [vmem:[#allocation3 + $0x58] sm:$0xff] %v1244
        %v1257 = vld [vmem:[#allocation2] sm:$0x8]
        %v1258 = vld [vmem:[#allocation2 + $0x4] sm:$0xf]
        %v1259 = vld [vmem:[#allocation2 + $0x8] sm:$0xf]
        %v1260 = vld [vmem:[#allocation2 + $0xc] sm:$0x7]
        %v1261 = vld [vmem:[#allocation3] sm:$0xff]
        %v1262 = vld [vmem:[#allocation3 + $0x8] sm:$0xff]
        %v1263 = vld [vmem:[#allocation3 + $0x10] sm:$0xff]
        %v1264 = vld [vmem:[#allocation3 + $0x18] sm:$0xff]
        %v1265 = vld [vmem:[#allocation3 + $0x20] sm:$0xff]
        %v1266 = vld [vmem:[#allocation3 + $0x28] sm:$0xff]
        %v1267 = vld [vmem:[#allocation3 + $0x30] sm:$0xff]
        %v1268 = vld [vmem:[#allocation3 + $0x38] sm:$0xff]
        %v1269 = vld [vmem:[#allocation3 + $0x40] sm:$0xff]
        %v1270 = vld [vmem:[#allocation3 + $0x48] sm:$0xff]
        %v1271 = vld [vmem:[#allocation3 + $0x50] sm:$0xff]
        %v1272 = vld [vmem:[#allocation3 + $0x58] sm:$0xff]
        %s1273 = scalar_lea.vmem [#allocation7], 192
        %v1274 = vld [vmem:[%s1273] sm:$0xff]
        %v1275 = vld [vmem:[%s1273 + $0x8] sm:$0xff]
        %v1276 = vld [vmem:[%s1273 + $0x10] sm:$0xff]
        %v1277 = vld [vmem:[%s1273 + $0x18] sm:$0xff]
        %v1278 = vld [vmem:[%s1273 + $0x20] sm:$0xff]
        %v1279 = vld [vmem:[%s1273 + $0x28] sm:$0xff]
        %v1280 = vld [vmem:[%s1273 + $0x30] sm:$0xff]
        %v1281 = vld [vmem:[%s1273 + $0x38] sm:$0xff]
        %v1286 = vunpack.c.l.b16 %v1257
        %v1287 = vunpack.c.l.b16 %v1258
        %v1288 = vunpack.c.l.b16 %v1259
        %v1289 = vunpack.c.l.b16 %v1260
        %v1290 = vpack.c.b16 %v1287, %v1286
        %v1291 = vpack.c.b16 %v1289, %v1288
        %vm1292 = vcmask 1044480
        %v1293 = vrot.slane %v1290, 3
        %v1294 = vrot.slane %v1291, 3
        %v1295 = vsel %vm1292, %v1293, %v1294
        %v1304 = vunpack.c.l.b16 %v1274
        %v1305 = vunpack.c.h.b16 %v1274
        %v1306 = vunpack.c.l.b16 %v1275
        %v1307 = vunpack.c.h.b16 %v1275
        %v1308 = vunpack.c.l.b16 %v1276
        %v1309 = vunpack.c.h.b16 %v1276
        %v1310 = vunpack.c.l.b16 %v1277
        %v1311 = vunpack.c.h.b16 %v1277
        %v1312 = vunpack.c.l.b16 %v1278
        %v1313 = vunpack.c.h.b16 %v1278
        %v1314 = vunpack.c.l.b16 %v1279
        %v1315 = vunpack.c.h.b16 %v1279
        %v1316 = vunpack.c.l.b16 %v1280
        %v1317 = vunpack.c.h.b16 %v1280
        %v1318 = vunpack.c.l.b16 %v1281
        %v1319 = vunpack.c.h.b16 %v1281
        %v1320 = vpack.c.b16 %v1308, %v1304
        %v1321 = vpack.c.b16 %v1309, %v1305
        %v1322 = vpack.c.b16 %v1310, %v1306
        %v1323 = vpack.c.b16 %v1311, %v1307
        %v1324 = vpack.c.b16 %v1316, %v1312
        %v1325 = vpack.c.b16 %v1317, %v1313
        %v1326 = vpack.c.b16 %v1318, %v1314
        %v1327 = vpack.c.b16 %v1319, %v1315
        %v1337 = vsel %vm690, %v1295, 0
        %v1340 = vsel %vm690, %v1294, 0
        %1342 = vmatprep.subr.bf16.mxu0 0
        %1343 = vmatpush1.bf16.msra.mxu0 0
        %1344 = vmatprep.subr.bf16.mxu0 0
        %1345 = vmatpush1.bf16.msra.mxu0 0
        %1346 = vmatprep.subr.bf16.mxu0 0
        %1347 = vmatpush1.bf16.msra.mxu0 0
        %1348 = vmatprep.subr.bf16.mxu0 0
        %1349 = vmatpush1.bf16.msra.mxu0 0
        %1350 = vmatprep.subr.bf16.mxu0 0
        %1351 = vmatpush1.bf16.msra.mxu0 0
        %1352 = vmatprep.subr.bf16.mxu0 0
        %1353 = vmatpush1.bf16.msra.mxu0 0
        %1354 = vmatprep.subr.bf16.mxu0 %v1325
        %1355 = vmatpush1.bf16.msra.mxu0 %v1324
        %1356 = vmatprep.subr.bf16.mxu0 %v1321
        %1357 = vmatpush1.bf16.msra.mxu0 %v1320
        %1358 = vmatprep.subr.bf16.mxu0 0
        %1359 = vmatpush2.bf16.msra.mxu0 0
        %1360 = vmatprep.subr.bf16.mxu0 0
        %1361 = vmatpush2.bf16.msra.mxu0 0
        %1362 = vmatprep.subr.bf16.mxu0 0
        %1363 = vmatpush2.bf16.msra.mxu0 0
        %1364 = vmatprep.subr.bf16.mxu0 0
        %1365 = vmatpush2.bf16.msra.mxu0 0
        %1366 = vmatprep.subr.bf16.mxu0 0
        %1367 = vmatpush2.bf16.msra.mxu0 0
        %1368 = vmatprep.subr.bf16.mxu0 0
        %1369 = vmatpush2.bf16.msra.mxu0 0
        %1370 = vmatprep.subr.bf16.mxu0 0
        %1371 = vmatpush2.bf16.msra.mxu0 0
        %1372 = vmatprep.subr.bf16.mxu0 0
        %1373 = vmatpush2.bf16.msra.mxu0 0
        %1374 = vmatprep.mubr.bf16.mxu0 0
        %1375 = vmatmul.mubr.bf16.gmra.mxu0 %v1337
        %v1376 = vpop.f32.mrf.mxu0
        %v1377 = vadd.f32 0.0, %v1376
        %v1378 = vpop.f32.mrf.mxu0
        %v1379 = vadd.f32 0.0, %v1378
        %v1380 = vpop.f32.mrf.mxu0
        %v1381 = vadd.f32 0.0, %v1380
        %v1382 = vpop.f32.mrf.mxu0
        %v1383 = vadd.f32 0.0, %v1382
        %1384 = vmatprep.mubr.bf16.mxu0 0
        %1385 = vmatmul.mubr.bf16.gmra.mxu0 %v1340
        %v1386 = vpop.f32.mrf.mxu0
        %v1387 = vadd.f32 0.0, %v1386
        %v1388 = vpop.f32.mrf.mxu0
        %v1389 = vadd.f32 0.0, %v1388
        %v1390 = vpop.f32.mrf.mxu0
        %v1391 = vpop.f32.mrf.mxu0
        %1392 = vdwg.mxu0
        %1393 = vmatprep.subr.bf16.mxu0 0
        %1394 = vmatpush1.bf16.msra.mxu0 0
        %1395 = vmatprep.subr.bf16.mxu0 0
        %1396 = vmatpush1.bf16.msra.mxu0 0
        %1397 = vmatprep.subr.bf16.mxu0 0
        %1398 = vmatpush1.bf16.msra.mxu0 0
        %1399 = vmatprep.subr.bf16.mxu0 0
        %1400 = vmatpush1.bf16.msra.mxu0 0
        %1401 = vmatprep.subr.bf16.mxu0 0
        %1402 = vmatpush1.bf16.msra.mxu0 0
        %1403 = vmatprep.subr.bf16.mxu0 0
        %1404 = vmatpush1.bf16.msra.mxu0 0
        %1405 = vmatprep.subr.bf16.mxu0 %v1327
        %1406 = vmatpush1.bf16.msra.mxu0 %v1326
        %1407 = vmatprep.subr.bf16.mxu0 %v1323
        %1408 = vmatpush1.bf16.msra.mxu0 %v1322
        %1409 = vmatprep.subr.bf16.mxu0 0
        %1410 = vmatpush2.bf16.msra.mxu0 0
        %1411 = vmatprep.subr.bf16.mxu0 0
        %1412 = vmatpush2.bf16.msra.mxu0 0
        %1413 = vmatprep.subr.bf16.mxu0 0
        %1414 = vmatpush2.bf16.msra.mxu0 0
        %1415 = vmatprep.subr.bf16.mxu0 0
        %1416 = vmatpush2.bf16.msra.mxu0 0
        %1417 = vmatprep.subr.bf16.mxu0 0
        %1418 = vmatpush2.bf16.msra.mxu0 0
        %1419 = vmatprep.subr.bf16.mxu0 0
        %1420 = vmatpush2.bf16.msra.mxu0 0
        %1421 = vmatprep.subr.bf16.mxu0 0
        %1422 = vmatpush2.bf16.msra.mxu0 0
        %1423 = vmatprep.subr.bf16.mxu0 0
        %1424 = vmatpush2.bf16.msra.mxu0 0
        %1425 = vmatprep.mubr.bf16.mxu0 0
        %1426 = vmatmul.mubr.bf16.gmra.mxu0 %v1337
        %v1427 = vpop.f32.mrf.mxu0
        %v1428 = vadd.f32 0.0, %v1427
        %v1429 = vpop.f32.mrf.mxu0
        %v1430 = vadd.f32 0.0, %v1429
        %v1431 = vpop.f32.mrf.mxu0
        %v1432 = vadd.f32 0.0, %v1431
        %v1433 = vpop.f32.mrf.mxu0
        %v1434 = vadd.f32 0.0, %v1433
        %1435 = vmatprep.mubr.bf16.mxu0 0
        %1436 = vmatmul.mubr.bf16.gmra.mxu0 %v1340
        %v1437 = vpop.f32.mrf.mxu0
        %v1438 = vadd.f32 0.0, %v1437
        %v1439 = vpop.f32.mrf.mxu0
        %v1440 = vadd.f32 0.0, %v1439
        %v1441 = vpop.f32.mrf.mxu0
        %v1442 = vpop.f32.mrf.mxu0
        %1443 = vdwg.mxu0
        %v1444 = vadd.f32 %v1261, %v1377
        %v1445 = vadd.f32 %v1262, %v1379
        %v1446 = vadd.f32 %v1263, %v1428
        %v1447 = vadd.f32 %v1264, %v1430
        %v1448 = vadd.f32 %v1265, %v1381
        %v1449 = vadd.f32 %v1266, %v1383
        %v1450 = vadd.f32 %v1267, %v1432
        %v1451 = vadd.f32 %v1268, %v1434
        %v1452 = vadd.f32 %v1269, %v1387
        %v1453 = vadd.f32 %v1270, %v1389
        %v1454 = vadd.f32 %v1271, %v1438
        %v1455 = vadd.f32 %v1272, %v1440
        %1456 = vst [vmem:[#allocation3] sm:$0xff] %v1444
        %1457 = vst [vmem:[#allocation3 + $0x8] sm:$0xff] %v1445
        %1458 = vst [vmem:[#allocation3 + $0x10] sm:$0xff] %v1446
        %1459 = vst [vmem:[#allocation3 + $0x18] sm:$0xff] %v1447
        %1460 = vst [vmem:[#allocation3 + $0x20] sm:$0xff] %v1448
        %1461 = vst [vmem:[#allocation3 + $0x28] sm:$0xff] %v1449
        %1462 = vst [vmem:[#allocation3 + $0x30] sm:$0xff] %v1450
        %1463 = vst [vmem:[#allocation3 + $0x38] sm:$0xff] %v1451
        %1464 = vst [vmem:[#allocation3 + $0x40] sm:$0xff] %v1452
        %1465 = vst [vmem:[#allocation3 + $0x48] sm:$0xff] %v1453
        %1466 = vst [vmem:[#allocation3 + $0x50] sm:$0xff] %v1454
        %1467 = vst [vmem:[#allocation3 + $0x58] sm:$0xff] %v1455
        %v1468 = vld [vmem:[#allocation2] sm:$0x8]
        %v1469 = vld [vmem:[#allocation2 + $0x4] sm:$0xf]
        %v1470 = vld [vmem:[#allocation2 + $0x8] sm:$0xf]
        %v1471 = vld [vmem:[#allocation2 + $0xc] sm:$0xf]
        %v1472 = vld [vmem:[#allocation3] sm:$0xff]
        %v1473 = vld [vmem:[#allocation3 + $0x8] sm:$0xff]
        %v1474 = vld [vmem:[#allocation3 + $0x10] sm:$0xff]
        %v1475 = vld [vmem:[#allocation3 + $0x18] sm:$0xff]
        %v1476 = vld [vmem:[#allocation3 + $0x20] sm:$0xff]
        %v1477 = vld [vmem:[#allocation3 + $0x28] sm:$0xff]
        %v1478 = vld [vmem:[#allocation3 + $0x30] sm:$0xff]
        %v1479 = vld [vmem:[#allocation3 + $0x38] sm:$0xff]
        %v1480 = vld [vmem:[#allocation3 + $0x40] sm:$0xff]
        %v1481 = vld [vmem:[#allocation3 + $0x48] sm:$0xff]
        %v1482 = vld [vmem:[#allocation3 + $0x50] sm:$0xff]
        %v1483 = vld [vmem:[#allocation3 + $0x58] sm:$0xff]
        %s1484 = scalar_lea.vmem [#allocation7], 256
        %v1485 = vld [vmem:[%s1484] sm:$0xff]
        %v1486 = vld [vmem:[%s1484 + $0x8] sm:$0xff]
        %v1487 = vld [vmem:[%s1484 + $0x10] sm:$0xff]
        %v1488 = vld [vmem:[%s1484 + $0x18] sm:$0xff]
        %v1489 = vld [vmem:[%s1484 + $0x20] sm:$0xff]
        %v1490 = vld [vmem:[%s1484 + $0x28] sm:$0xff]
        %v1491 = vld [vmem:[%s1484 + $0x30] sm:$0xff]
        %v1492 = vld [vmem:[%s1484 + $0x38] sm:$0xff]
        %v1497 = vunpack.c.l.b16 %v1468
        %v1498 = vunpack.c.l.b16 %v1469
        %v1499 = vunpack.c.l.b16 %v1470
        %v1500 = vunpack.c.l.b16 %v1471
        %v1501 = vpack.c.b16 %v1498, %v1497
        %v1502 = vpack.c.b16 %v1500, %v1499
        %vm1503 = vsmask.f32 4352
        %v1505 = vshrl.u32 %v1501, 16
        %v1507 = vrot.slane %v1505, 3
        %v1508 = vshll.u32 %v1501, 16
        %v1510 = vrot.slane %v1508, 4
        %v1511 = vor.u32 %v1507, %v1510
        %v1513 = vshrl.u32 %v1502, 16
        %v1515 = vrot.slane %v1513, 3
        %v1516 = vshll.u32 %v1502, 16
        %v1518 = vrot.slane %v1516, 4
        %v1519 = vor.u32 %v1515, %v1518
        %v1520 = vsel %vm1503, %v1511, %v1519
        %v1529 = vunpack.c.l.b16 %v1485
        %v1530 = vunpack.c.h.b16 %v1485
        %v1531 = vunpack.c.l.b16 %v1486
        %v1532 = vunpack.c.h.b16 %v1486
        %v1533 = vunpack.c.l.b16 %v1487
        %v1534 = vunpack.c.h.b16 %v1487
        %v1535 = vunpack.c.l.b16 %v1488
        %v1536 = vunpack.c.h.b16 %v1488
        %v1537 = vunpack.c.l.b16 %v1489
        %v1538 = vunpack.c.h.b16 %v1489
        %v1539 = vunpack.c.l.b16 %v1490
        %v1540 = vunpack.c.h.b16 %v1490
        %v1541 = vunpack.c.l.b16 %v1491
        %v1542 = vunpack.c.h.b16 %v1491
        %v1543 = vunpack.c.l.b16 %v1492
        %v1544 = vunpack.c.h.b16 %v1492
        %v1545 = vpack.c.b16 %v1533, %v1529
        %v1546 = vpack.c.b16 %v1534, %v1530
        %v1547 = vpack.c.b16 %v1535, %v1531
        %v1548 = vpack.c.b16 %v1536, %v1532
        %v1549 = vpack.c.b16 %v1541, %v1537
        %v1550 = vpack.c.b16 %v1542, %v1538
        %v1551 = vpack.c.b16 %v1543, %v1539
        %v1552 = vpack.c.b16 %v1544, %v1540
        %v1562 = vsel %vm690, %v1520, 0
        %v1565 = vsel %vm690, %v1519, 0
        %1567 = vmatprep.subr.bf16.mxu0 0
        %1568 = vmatpush1.bf16.msra.mxu0 0
        %1569 = vmatprep.subr.bf16.mxu0 0
        %1570 = vmatpush1.bf16.msra.mxu0 0
        %1571 = vmatprep.subr.bf16.mxu0 0
        %1572 = vmatpush1.bf16.msra.mxu0 0
        %1573 = vmatprep.subr.bf16.mxu0 0
        %1574 = vmatpush1.bf16.msra.mxu0 0
        %1575 = vmatprep.subr.bf16.mxu0 0
        %1576 = vmatpush1.bf16.msra.mxu0 0
        %1577 = vmatprep.subr.bf16.mxu0 0
        %1578 = vmatpush1.bf16.msra.mxu0 0
        %1579 = vmatprep.subr.bf16.mxu0 %v1550
        %1580 = vmatpush1.bf16.msra.mxu0 %v1549
        %1581 = vmatprep.subr.bf16.mxu0 %v1546
        %1582 = vmatpush1.bf16.msra.mxu0 %v1545
        %1583 = vmatprep.subr.bf16.mxu0 0
        %1584 = vmatpush2.bf16.msra.mxu0 0
        %1585 = vmatprep.subr.bf16.mxu0 0
        %1586 = vmatpush2.bf16.msra.mxu0 0
        %1587 = vmatprep.subr.bf16.mxu0 0
        %1588 = vmatpush2.bf16.msra.mxu0 0
        %1589 = vmatprep.subr.bf16.mxu0 0
        %1590 = vmatpush2.bf16.msra.mxu0 0
        %1591 = vmatprep.subr.bf16.mxu0 0
        %1592 = vmatpush2.bf16.msra.mxu0 0
        %1593 = vmatprep.subr.bf16.mxu0 0
        %1594 = vmatpush2.bf16.msra.mxu0 0
        %1595 = vmatprep.subr.bf16.mxu0 0
        %1596 = vmatpush2.bf16.msra.mxu0 0
        %1597 = vmatprep.subr.bf16.mxu0 0
        %1598 = vmatpush2.bf16.msra.mxu0 0
        %1599 = vmatprep.mubr.bf16.mxu0 0
        %1600 = vmatmul.mubr.bf16.gmra.mxu0 %v1562
        %v1601 = vpop.f32.mrf.mxu0
        %v1602 = vadd.f32 0.0, %v1601
        %v1603 = vpop.f32.mrf.mxu0
        %v1604 = vadd.f32 0.0, %v1603
        %v1605 = vpop.f32.mrf.mxu0
        %v1606 = vadd.f32 0.0, %v1605
        %v1607 = vpop.f32.mrf.mxu0
        %v1608 = vadd.f32 0.0, %v1607
        %1609 = vmatprep.mubr.bf16.mxu0 0
        %1610 = vmatmul.mubr.bf16.gmra.mxu0 %v1565
        %v1611 = vpop.f32.mrf.mxu0
        %v1612 = vadd.f32 0.0, %v1611
        %v1613 = vpop.f32.mrf.mxu0
        %v1614 = vadd.f32 0.0, %v1613
        %v1615 = vpop.f32.mrf.mxu0
        %v1616 = vpop.f32.mrf.mxu0
        %1617 = vdwg.mxu0
        %1618 = vmatprep.subr.bf16.mxu0 0
        %1619 = vmatpush1.bf16.msra.mxu0 0
        %1620 = vmatprep.subr.bf16.mxu0 0
        %1621 = vmatpush1.bf16.msra.mxu0 0
        %1622 = vmatprep.subr.bf16.mxu0 0
        %1623 = vmatpush1.bf16.msra.mxu0 0
        %1624 = vmatprep.subr.bf16.mxu0 0
        %1625 = vmatpush1.bf16.msra.mxu0 0
        %1626 = vmatprep.subr.bf16.mxu0 0
        %1627 = vmatpush1.bf16.msra.mxu0 0
        %1628 = vmatprep.subr.bf16.mxu0 0
        %1629 = vmatpush1.bf16.msra.mxu0 0
        %1630 = vmatprep.subr.bf16.mxu0 %v1552
        %1631 = vmatpush1.bf16.msra.mxu0 %v1551
        %1632 = vmatprep.subr.bf16.mxu0 %v1548
        %1633 = vmatpush1.bf16.msra.mxu0 %v1547
        %1634 = vmatprep.subr.bf16.mxu0 0
        %1635 = vmatpush2.bf16.msra.mxu0 0
        %1636 = vmatprep.subr.bf16.mxu0 0
        %1637 = vmatpush2.bf16.msra.mxu0 0
        %1638 = vmatprep.subr.bf16.mxu0 0
        %1639 = vmatpush2.bf16.msra.mxu0 0
        %1640 = vmatprep.subr.bf16.mxu0 0
        %1641 = vmatpush2.bf16.msra.mxu0 0
        %1642 = vmatprep.subr.bf16.mxu0 0
        %1643 = vmatpush2.bf16.msra.mxu0 0
        %1644 = vmatprep.subr.bf16.mxu0 0
        %1645 = vmatpush2.bf16.msra.mxu0 0
        %1646 = vmatprep.subr.bf16.mxu0 0
        %1647 = vmatpush2.bf16.msra.mxu0 0
        %1648 = vmatprep.subr.bf16.mxu0 0
        %1649 = vmatpush2.bf16.msra.mxu0 0
        %1650 = vmatprep.mubr.bf16.mxu0 0
        %1651 = vmatmul.mubr.bf16.gmra.mxu0 %v1562
        %v1652 = vpop.f32.mrf.mxu0
        %v1653 = vadd.f32 0.0, %v1652
        %v1654 = vpop.f32.mrf.mxu0
        %v1655 = vadd.f32 0.0, %v1654
        %v1656 = vpop.f32.mrf.mxu0
        %v1657 = vadd.f32 0.0, %v1656
        %v1658 = vpop.f32.mrf.mxu0
        %v1659 = vadd.f32 0.0, %v1658
        %1660 = vmatprep.mubr.bf16.mxu0 0
        %1661 = vmatmul.mubr.bf16.gmra.mxu0 %v1565
        %v1662 = vpop.f32.mrf.mxu0
        %v1663 = vadd.f32 0.0, %v1662
        %v1664 = vpop.f32.mrf.mxu0
        %v1665 = vadd.f32 0.0, %v1664
        %v1666 = vpop.f32.mrf.mxu0
        %v1667 = vpop.f32.mrf.mxu0
        %1668 = vdwg.mxu0
        %v1669 = vadd.f32 %v1472, %v1602
        %v1670 = vadd.f32 %v1473, %v1604
        %v1671 = vadd.f32 %v1474, %v1653
        %v1672 = vadd.f32 %v1475, %v1655
        %v1673 = vadd.f32 %v1476, %v1606
        %v1674 = vadd.f32 %v1477, %v1608
        %v1675 = vadd.f32 %v1478, %v1657
        %v1676 = vadd.f32 %v1479, %v1659
        %v1677 = vadd.f32 %v1480, %v1612
        %v1678 = vadd.f32 %v1481, %v1614
        %v1679 = vadd.f32 %v1482, %v1663
        %v1680 = vadd.f32 %v1483, %v1665
        %1681 = vst [vmem:[#allocation3] sm:$0xff] %v1669
        %1682 = vst [vmem:[#allocation3 + $0x8] sm:$0xff] %v1670
        %1683 = vst [vmem:[#allocation3 + $0x10] sm:$0xff] %v1671
        %1684 = vst [vmem:[#allocation3 + $0x18] sm:$0xff] %v1672
        %1685 = vst [vmem:[#allocation3 + $0x20] sm:$0xff] %v1673
        %1686 = vst [vmem:[#allocation3 + $0x28] sm:$0xff] %v1674
        %1687 = vst [vmem:[#allocation3 + $0x30] sm:$0xff] %v1675
        %1688 = vst [vmem:[#allocation3 + $0x38] sm:$0xff] %v1676
        %1689 = vst [vmem:[#allocation3 + $0x40] sm:$0xff] %v1677
        %1690 = vst [vmem:[#allocation3 + $0x48] sm:$0xff] %v1678
        %1691 = vst [vmem:[#allocation3 + $0x50] sm:$0xff] %v1679
        %1692 = vst [vmem:[#allocation3 + $0x58] sm:$0xff] %v1680
        %v1693 = vld [vmem:[#allocation2 + $0x4] sm:$0xf]
        %v1694 = vld [vmem:[#allocation2 + $0x8] sm:$0xf]
        %v1695 = vld [vmem:[#allocation2 + $0xc] sm:$0xf]
        %v1696 = vld [vmem:[#allocation3] sm:$0xff]
        %v1697 = vld [vmem:[#allocation3 + $0x8] sm:$0xff]
        %v1698 = vld [vmem:[#allocation3 + $0x10] sm:$0xff]
        %v1699 = vld [vmem:[#allocation3 + $0x18] sm:$0xff]
        %v1700 = vld [vmem:[#allocation3 + $0x20] sm:$0xff]
        %v1701 = vld [vmem:[#allocation3 + $0x28] sm:$0xff]
        %v1702 = vld [vmem:[#allocation3 + $0x30] sm:$0xff]
        %v1703 = vld [vmem:[#allocation3 + $0x38] sm:$0xff]
        %v1704 = vld [vmem:[#allocation3 + $0x40] sm:$0xff]
        %v1705 = vld [vmem:[#allocation3 + $0x48] sm:$0xff]
        %v1706 = vld [vmem:[#allocation3 + $0x50] sm:$0xff]
        %v1707 = vld [vmem:[#allocation3 + $0x58] sm:$0xff]
        %s1708 = scalar_lea.vmem [#allocation7], 320
        %v1709 = vld [vmem:[%s1708] sm:$0xff]
        %v1710 = vld [vmem:[%s1708 + $0x8] sm:$0xff]
        %v1711 = vld [vmem:[%s1708 + $0x10] sm:$0xff]
        %v1712 = vld [vmem:[%s1708 + $0x18] sm:$0xff]
        %v1713 = vld [vmem:[%s1708 + $0x20] sm:$0xff]
        %v1714 = vld [vmem:[%s1708 + $0x28] sm:$0xff]
        %v1715 = vld [vmem:[%s1708 + $0x30] sm:$0xff]
        %v1716 = vld [vmem:[%s1708 + $0x38] sm:$0xff]
        %v1720 = vunpack.c.l.b16 %v1693
        %v1721 = vunpack.c.l.b16 %v1694
        %v1722 = vunpack.c.l.b16 %v1695
        %v1723 = vpack.c.b16 %v1721, %v1720
        %v1724 = vpack.c.b16 %v1722, %v1722
        %v1733 = vunpack.c.l.b16 %v1709
        %v1734 = vunpack.c.h.b16 %v1709
        %v1735 = vunpack.c.l.b16 %v1710
        %v1736 = vunpack.c.h.b16 %v1710
        %v1737 = vunpack.c.l.b16 %v1711
        %v1738 = vunpack.c.h.b16 %v1711
        %v1739 = vunpack.c.l.b16 %v1712
        %v1740 = vunpack.c.h.b16 %v1712
        %v1741 = vunpack.c.l.b16 %v1713
        %v1742 = vunpack.c.h.b16 %v1713
        %v1743 = vunpack.c.l.b16 %v1714
        %v1744 = vunpack.c.h.b16 %v1714
        %v1745 = vunpack.c.l.b16 %v1715
        %v1746 = vunpack.c.h.b16 %v1715
        %v1747 = vunpack.c.l.b16 %v1716
        %v1748 = vunpack.c.h.b16 %v1716
        %v1749 = vpack.c.b16 %v1737, %v1733
        %v1750 = vpack.c.b16 %v1738, %v1734
        %v1751 = vpack.c.b16 %v1739, %v1735
        %v1752 = vpack.c.b16 %v1740, %v1736
        %v1753 = vpack.c.b16 %v1745, %v1741
        %v1754 = vpack.c.b16 %v1746, %v1742
        %v1755 = vpack.c.b16 %v1747, %v1743
        %v1756 = vpack.c.b16 %v1748, %v1744
        %v1766 = vsel %vm690, %v1723, 0
        %v1769 = vsel %vm690, %v1724, 0
        %1771 = vmatprep.subr.bf16.mxu0 0
        %1772 = vmatpush1.bf16.msra.mxu0 0
        %1773 = vmatprep.subr.bf16.mxu0 0
        %1774 = vmatpush1.bf16.msra.mxu0 0
        %1775 = vmatprep.subr.bf16.mxu0 0
        %1776 = vmatpush1.bf16.msra.mxu0 0
        %1777 = vmatprep.subr.bf16.mxu0 0
        %1778 = vmatpush1.bf16.msra.mxu0 0
        %1779 = vmatprep.subr.bf16.mxu0 0
        %1780 = vmatpush1.bf16.msra.mxu0 0
        %1781 = vmatprep.subr.bf16.mxu0 0
        %1782 = vmatpush1.bf16.msra.mxu0 0
        %1783 = vmatprep.subr.bf16.mxu0 %v1754
        %1784 = vmatpush1.bf16.msra.mxu0 %v1753
        %1785 = vmatprep.subr.bf16.mxu0 %v1750
        %1786 = vmatpush1.bf16.msra.mxu0 %v1749
        %1787 = vmatprep.subr.bf16.mxu0 0
        %1788 = vmatpush2.bf16.msra.mxu0 0
        %1789 = vmatprep.subr.bf16.mxu0 0
        %1790 = vmatpush2.bf16.msra.mxu0 0
        %1791 = vmatprep.subr.bf16.mxu0 0
        %1792 = vmatpush2.bf16.msra.mxu0 0
        %1793 = vmatprep.subr.bf16.mxu0 0
        %1794 = vmatpush2.bf16.msra.mxu0 0
        %1795 = vmatprep.subr.bf16.mxu0 0
        %1796 = vmatpush2.bf16.msra.mxu0 0
        %1797 = vmatprep.subr.bf16.mxu0 0
        %1798 = vmatpush2.bf16.msra.mxu0 0
        %1799 = vmatprep.subr.bf16.mxu0 0
        %1800 = vmatpush2.bf16.msra.mxu0 0
        %1801 = vmatprep.subr.bf16.mxu0 0
        %1802 = vmatpush2.bf16.msra.mxu0 0
        %1803 = vmatprep.mubr.bf16.mxu0 0
        %1804 = vmatmul.mubr.bf16.gmra.mxu0 %v1766
        %v1805 = vpop.f32.mrf.mxu0
        %v1806 = vadd.f32 0.0, %v1805
        %v1807 = vpop.f32.mrf.mxu0
        %v1808 = vadd.f32 0.0, %v1807
        %v1809 = vpop.f32.mrf.mxu0
        %v1810 = vadd.f32 0.0, %v1809
        %v1811 = vpop.f32.mrf.mxu0
        %v1812 = vadd.f32 0.0, %v1811
        %1813 = vmatprep.mubr.bf16.mxu0 0
        %1814 = vmatmul.mubr.bf16.gmra.mxu0 %v1769
        %v1815 = vpop.f32.mrf.mxu0
        %v1816 = vadd.f32 0.0, %v1815
        %v1817 = vpop.f32.mrf.mxu0
        %v1818 = vadd.f32 0.0, %v1817
        %v1819 = vpop.f32.mrf.mxu0
        %v1820 = vpop.f32.mrf.mxu0
        %1821 = vdwg.mxu0
        %1822 = vmatprep.subr.bf16.mxu0 0
        %1823 = vmatpush1.bf16.msra.mxu0 0
        %1824 = vmatprep.subr.bf16.mxu0 0
        %1825 = vmatpush1.bf16.msra.mxu0 0
        %1826 = vmatprep.subr.bf16.mxu0 0
        %1827 = vmatpush1.bf16.msra.mxu0 0
        %1828 = vmatprep.subr.bf16.mxu0 0
        %1829 = vmatpush1.bf16.msra.mxu0 0
        %1830 = vmatprep.subr.bf16.mxu0 0
        %1831 = vmatpush1.bf16.msra.mxu0 0
        %1832 = vmatprep.subr.bf16.mxu0 0
        %1833 = vmatpush1.bf16.msra.mxu0 0
        %1834 = vmatprep.subr.bf16.mxu0 %v1756
        %1835 = vmatpush1.bf16.msra.mxu0 %v1755
        %1836 = vmatprep.subr.bf16.mxu0 %v1752
        %1837 = vmatpush1.bf16.msra.mxu0 %v1751
        %1838 = vmatprep.subr.bf16.mxu0 0
        %1839 = vmatpush2.bf16.msra.mxu0 0
        %1840 = vmatprep.subr.bf16.mxu0 0
        %1841 = vmatpush2.bf16.msra.mxu0 0
        %1842 = vmatprep.subr.bf16.mxu0 0
        %1843 = vmatpush2.bf16.msra.mxu0 0
        %1844 = vmatprep.subr.bf16.mxu0 0
        %1845 = vmatpush2.bf16.msra.mxu0 0
        %1846 = vmatprep.subr.bf16.mxu0 0
        %1847 = vmatpush2.bf16.msra.mxu0 0
        %1848 = vmatprep.subr.bf16.mxu0 0
        %1849 = vmatpush2.bf16.msra.mxu0 0
        %1850 = vmatprep.subr.bf16.mxu0 0
        %1851 = vmatpush2.bf16.msra.mxu0 0
        %1852 = vmatprep.subr.bf16.mxu0 0
        %1853 = vmatpush2.bf16.msra.mxu0 0
        %1854 = vmatprep.mubr.bf16.mxu0 0
        %1855 = vmatmul.mubr.bf16.gmra.mxu0 %v1766
        %v1856 = vpop.f32.mrf.mxu0
        %v1857 = vadd.f32 0.0, %v1856
        %v1858 = vpop.f32.mrf.mxu0
        %v1859 = vadd.f32 0.0, %v1858
        %v1860 = vpop.f32.mrf.mxu0
        %v1861 = vadd.f32 0.0, %v1860
        %v1862 = vpop.f32.mrf.mxu0
        %v1863 = vadd.f32 0.0, %v1862
        %1864 = vmatprep.mubr.bf16.mxu0 0
        %1865 = vmatmul.mubr.bf16.gmra.mxu0 %v1769
        %v1866 = vpop.f32.mrf.mxu0
        %v1867 = vadd.f32 0.0, %v1866
        %v1868 = vpop.f32.mrf.mxu0
        %v1869 = vadd.f32 0.0, %v1868
        %v1870 = vpop.f32.mrf.mxu0
        %v1871 = vpop.f32.mrf.mxu0
        %1872 = vdwg.mxu0
        %v1873 = vadd.f32 %v1696, %v1806
        %v1874 = vadd.f32 %v1697, %v1808
        %v1875 = vadd.f32 %v1698, %v1857
        %v1876 = vadd.f32 %v1699, %v1859
        %v1877 = vadd.f32 %v1700, %v1810
        %v1878 = vadd.f32 %v1701, %v1812
        %v1879 = vadd.f32 %v1702, %v1861
        %v1880 = vadd.f32 %v1703, %v1863
        %v1881 = vadd.f32 %v1704, %v1816
        %v1882 = vadd.f32 %v1705, %v1818
        %v1883 = vadd.f32 %v1706, %v1867
        %v1884 = vadd.f32 %v1707, %v1869
        %1885 = vst [vmem:[#allocation3] sm:$0xff] %v1873
        %1886 = vst [vmem:[#allocation3 + $0x8] sm:$0xff] %v1874
        %1887 = vst [vmem:[#allocation3 + $0x10] sm:$0xff] %v1875
        %1888 = vst [vmem:[#allocation3 + $0x18] sm:$0xff] %v1876
        %1889 = vst [vmem:[#allocation3 + $0x20] sm:$0xff] %v1877
        %1890 = vst [vmem:[#allocation3 + $0x28] sm:$0xff] %v1878
        %1891 = vst [vmem:[#allocation3 + $0x30] sm:$0xff] %v1879
        %1892 = vst [vmem:[#allocation3 + $0x38] sm:$0xff] %v1880
        %1893 = vst [vmem:[#allocation3 + $0x40] sm:$0xff] %v1881
        %1894 = vst [vmem:[#allocation3 + $0x48] sm:$0xff] %v1882
        %1895 = vst [vmem:[#allocation3 + $0x50] sm:$0xff] %v1883
        %1896 = vst [vmem:[#allocation3 + $0x58] sm:$0xff] %v1884
        %v1897 = vld [vmem:[#allocation2 + $0x4] sm:$0xc]
        %v1898 = vld [vmem:[#allocation2 + $0x8] sm:$0xf]
        %v1899 = vld [vmem:[#allocation2 + $0xc] sm:$0xf]
        %v1900 = vld [vmem:[#allocation2 + $0x10] sm:$0x3]
        %v1901 = vld [vmem:[#allocation3] sm:$0xff]
        %v1902 = vld [vmem:[#allocation3 + $0x8] sm:$0xff]
        %v1903 = vld [vmem:[#allocation3 + $0x10] sm:$0xff]
        %v1904 = vld [vmem:[#allocation3 + $0x18] sm:$0xff]
        %v1905 = vld [vmem:[#allocation3 + $0x20] sm:$0xff]
        %v1906 = vld [vmem:[#allocation3 + $0x28] sm:$0xff]
        %v1907 = vld [vmem:[#allocation3 + $0x30] sm:$0xff]
        %v1908 = vld [vmem:[#allocation3 + $0x38] sm:$0xff]
        %v1909 = vld [vmem:[#allocation3 + $0x40] sm:$0xff]
        %v1910 = vld [vmem:[#allocation3 + $0x48] sm:$0xff]
        %v1911 = vld [vmem:[#allocation3 + $0x50] sm:$0xff]
        %v1912 = vld [vmem:[#allocation3 + $0x58] sm:$0xff]
        %s1913 = scalar_lea.vmem [#allocation7], 384
        %v1914 = vld [vmem:[%s1913] sm:$0xff]
        %v1915 = vld [vmem:[%s1913 + $0x8] sm:$0xff]
        %v1916 = vld [vmem:[%s1913 + $0x10] sm:$0xff]
        %v1917 = vld [vmem:[%s1913 + $0x18] sm:$0xff]
        %v1918 = vld [vmem:[%s1913 + $0x20] sm:$0xff]
        %v1919 = vld [vmem:[%s1913 + $0x28] sm:$0xff]
        %v1920 = vld [vmem:[%s1913 + $0x30] sm:$0xff]
        %v1921 = vld [vmem:[%s1913 + $0x38] sm:$0xff]
        %v1926 = vunpack.c.l.b16 %v1897
        %v1927 = vunpack.c.l.b16 %v1898
        %v1928 = vunpack.c.l.b16 %v1899
        %v1929 = vunpack.c.l.b16 %v1900
        %v1930 = vpack.c.b16 %v1927, %v1926
        %v1931 = vpack.c.b16 %v1929, %v1928
        %vm1932 = vcmask 1045504
        %v1933 = vrot.slane %v1930, 2
        %v1934 = vrot.slane %v1931, 2
        %v1935 = vsel %vm1932, %v1933, %v1934
        %v1944 = vunpack.c.l.b16 %v1914
        %v1945 = vunpack.c.h.b16 %v1914
        %v1946 = vunpack.c.l.b16 %v1915
        %v1947 = vunpack.c.h.b16 %v1915
        %v1948 = vunpack.c.l.b16 %v1916
        %v1949 = vunpack.c.h.b16 %v1916
        %v1950 = vunpack.c.l.b16 %v1917
        %v1951 = vunpack.c.h.b16 %v1917
        %v1952 = vunpack.c.l.b16 %v1918
        %v1953 = vunpack.c.h.b16 %v1918
        %v1954 = vunpack.c.l.b16 %v1919
        %v1955 = vunpack.c.h.b16 %v1919
        %v1956 = vunpack.c.l.b16 %v1920
        %v1957 = vunpack.c.h.b16 %v1920
        %v1958 = vunpack.c.l.b16 %v1921
        %v1959 = vunpack.c.h.b16 %v1921
        %v1960 = vpack.c.b16 %v1948, %v1944
        %v1961 = vpack.c.b16 %v1949, %v1945
        %v1962 = vpack.c.b16 %v1950, %v1946
        %v1963 = vpack.c.b16 %v1951, %v1947
        %v1964 = vpack.c.b16 %v1956, %v1952
        %v1965 = vpack.c.b16 %v1957, %v1953
        %v1966 = vpack.c.b16 %v1958, %v1954
        %v1967 = vpack.c.b16 %v1959, %v1955
        %v1977 = vsel %vm690, %v1935, 0
        %v1980 = vsel %vm690, %v1934, 0
        %1982 = vmatprep.subr.bf16.mxu0 0
        %1983 = vmatpush1.bf16.msra.mxu0 0
        %1984 = vmatprep.subr.bf16.mxu0 0
        %1985 = vmatpush1.bf16.msra.mxu0 0
        %1986 = vmatprep.subr.bf16.mxu0 0
        %1987 = vmatpush1.bf16.msra.mxu0 0
        %1988 = vmatprep.subr.bf16.mxu0 0
        %1989 = vmatpush1.bf16.msra.mxu0 0
        %1990 = vmatprep.subr.bf16.mxu0 0
        %1991 = vmatpush1.bf16.msra.mxu0 0
        %1992 = vmatprep.subr.bf16.mxu0 0
        %1993 = vmatpush1.bf16.msra.mxu0 0
        %1994 = vmatprep.subr.bf16.mxu0 %v1965
        %1995 = vmatpush1.bf16.msra.mxu0 %v1964
        %1996 = vmatprep.subr.bf16.mxu0 %v1961
        %1997 = vmatpush1.bf16.msra.mxu0 %v1960
        %1998 = vmatprep.subr.bf16.mxu0 0
        %1999 = vmatpush2.bf16.msra.mxu0 0
        %2000 = vmatprep.subr.bf16.mxu0 0
        %2001 = vmatpush2.bf16.msra.mxu0 0
        %2002 = vmatprep.subr.bf16.mxu0 0
        %2003 = vmatpush2.bf16.msra.mxu0 0
        %2004 = vmatprep.subr.bf16.mxu0 0
        %2005 = vmatpush2.bf16.msra.mxu0 0
        %2006 = vmatprep.subr.bf16.mxu0 0
        %2007 = vmatpush2.bf16.msra.mxu0 0
        %2008 = vmatprep.subr.bf16.mxu0 0
        %2009 = vmatpush2.bf16.msra.mxu0 0
        %2010 = vmatprep.subr.bf16.mxu0 0
        %2011 = vmatpush2.bf16.msra.mxu0 0
        %2012 = vmatprep.subr.bf16.mxu0 0
        %2013 = vmatpush2.bf16.msra.mxu0 0
        %2014 = vmatprep.mubr.bf16.mxu0 0
        %2015 = vmatmul.mubr.bf16.gmra.mxu0 %v1977
        %v2016 = vpop.f32.mrf.mxu0
        %v2017 = vadd.f32 0.0, %v2016
        %v2018 = vpop.f32.mrf.mxu0
        %v2019 = vadd.f32 0.0, %v2018
        %v2020 = vpop.f32.mrf.mxu0
        %v2021 = vadd.f32 0.0, %v2020
        %v2022 = vpop.f32.mrf.mxu0
        %v2023 = vadd.f32 0.0, %v2022
        %2024 = vmatprep.mubr.bf16.mxu0 0
        %2025 = vmatmul.mubr.bf16.gmra.mxu0 %v1980
        %v2026 = vpop.f32.mrf.mxu0
        %v2027 = vadd.f32 0.0, %v2026
        %v2028 = vpop.f32.mrf.mxu0
        %v2029 = vadd.f32 0.0, %v2028
        %v2030 = vpop.f32.mrf.mxu0
        %v2031 = vpop.f32.mrf.mxu0
        %2032 = vdwg.mxu0
        %2033 = vmatprep.subr.bf16.mxu0 0
        %2034 = vmatpush1.bf16.msra.mxu0 0
        %2035 = vmatprep.subr.bf16.mxu0 0
        %2036 = vmatpush1.bf16.msra.mxu0 0
        %2037 = vmatprep.subr.bf16.mxu0 0
        %2038 = vmatpush1.bf16.msra.mxu0 0
        %2039 = vmatprep.subr.bf16.mxu0 0
        %2040 = vmatpush1.bf16.msra.mxu0 0
        %2041 = vmatprep.subr.bf16.mxu0 0
        %2042 = vmatpush1.bf16.msra.mxu0 0
        %2043 = vmatprep.subr.bf16.mxu0 0
        %2044 = vmatpush1.bf16.msra.mxu0 0
        %2045 = vmatprep.subr.bf16.mxu0 %v1967
        %2046 = vmatpush1.bf16.msra.mxu0 %v1966
        %2047 = vmatprep.subr.bf16.mxu0 %v1963
        %2048 = vmatpush1.bf16.msra.mxu0 %v1962
        %2049 = vmatprep.subr.bf16.mxu0 0
        %2050 = vmatpush2.bf16.msra.mxu0 0
        %2051 = vmatprep.subr.bf16.mxu0 0
        %2052 = vmatpush2.bf16.msra.mxu0 0
        %2053 = vmatprep.subr.bf16.mxu0 0
        %2054 = vmatpush2.bf16.msra.mxu0 0
        %2055 = vmatprep.subr.bf16.mxu0 0
        %2056 = vmatpush2.bf16.msra.mxu0 0
        %2057 = vmatprep.subr.bf16.mxu0 0
        %2058 = vmatpush2.bf16.msra.mxu0 0
        %2059 = vmatprep.subr.bf16.mxu0 0
        %2060 = vmatpush2.bf16.msra.mxu0 0
        %2061 = vmatprep.subr.bf16.mxu0 0
        %2062 = vmatpush2.bf16.msra.mxu0 0
        %2063 = vmatprep.subr.bf16.mxu0 0
        %2064 = vmatpush2.bf16.msra.mxu0 0
        %2065 = vmatprep.mubr.bf16.mxu0 0
        %2066 = vmatmul.mubr.bf16.gmra.mxu0 %v1977
        %v2067 = vpop.f32.mrf.mxu0
        %v2068 = vadd.f32 0.0, %v2067
        %v2069 = vpop.f32.mrf.mxu0
        %v2070 = vadd.f32 0.0, %v2069
        %v2071 = vpop.f32.mrf.mxu0
        %v2072 = vadd.f32 0.0, %v2071
        %v2073 = vpop.f32.mrf.mxu0
        %v2074 = vadd.f32 0.0, %v2073
        %2075 = vmatprep.mubr.bf16.mxu0 0
        %2076 = vmatmul.mubr.bf16.gmra.mxu0 %v1980
        %v2077 = vpop.f32.mrf.mxu0
        %v2078 = vadd.f32 0.0, %v2077
        %v2079 = vpop.f32.mrf.mxu0
        %v2080 = vadd.f32 0.0, %v2079
        %v2081 = vpop.f32.mrf.mxu0
        %v2082 = vpop.f32.mrf.mxu0
        %2083 = vdwg.mxu0
        %v2084 = vadd.f32 %v1901, %v2017
        %v2085 = vadd.f32 %v1902, %v2019
        %v2086 = vadd.f32 %v1903, %v2068
        %v2087 = vadd.f32 %v1904, %v2070
        %v2088 = vadd.f32 %v1905, %v2021
        %v2089 = vadd.f32 %v1906, %v2023
        %v2090 = vadd.f32 %v1907, %v2072
        %v2091 = vadd.f32 %v1908, %v2074
        %v2092 = vadd.f32 %v1909, %v2027
        %v2093 = vadd.f32 %v1910, %v2029
        %v2094 = vadd.f32 %v1911, %v2078
        %v2095 = vadd.f32 %v1912, %v2080
        %2096 = vst [vmem:[#allocation3] sm:$0xff] %v2084
        %2097 = vst [vmem:[#allocation3 + $0x8] sm:$0xff] %v2085
        %2098 = vst [vmem:[#allocation3 + $0x10] sm:$0xff] %v2086
        %2099 = vst [vmem:[#allocation3 + $0x18] sm:$0xff] %v2087
        %2100 = vst [vmem:[#allocation3 + $0x20] sm:$0xff] %v2088
        %2101 = vst [vmem:[#allocation3 + $0x28] sm:$0xff] %v2089
        %2102 = vst [vmem:[#allocation3 + $0x30] sm:$0xff] %v2090
        %2103 = vst [vmem:[#allocation3 + $0x38] sm:$0xff] %v2091
        %2104 = vst [vmem:[#allocation3 + $0x40] sm:$0xff] %v2092
        %2105 = vst [vmem:[#allocation3 + $0x48] sm:$0xff] %v2093
        %2106 = vst [vmem:[#allocation3 + $0x50] sm:$0xff] %v2094
        %2107 = vst [vmem:[#allocation3 + $0x58] sm:$0xff] %v2095
        %v2108 = vld [vmem:[#allocation2 + $0x4] sm:$0xc]
        %v2109 = vld [vmem:[#allocation2 + $0x8] sm:$0xf]
        %v2110 = vld [vmem:[#allocation2 + $0xc] sm:$0xf]
        %v2111 = vld [vmem:[#allocation2 + $0x10] sm:$0x7]
        %v2112 = vld [vmem:[#allocation3] sm:$0xff]
        %v2113 = vld [vmem:[#allocation3 + $0x8] sm:$0xff]
        %v2114 = vld [vmem:[#allocation3 + $0x10] sm:$0xff]
        %v2115 = vld [vmem:[#allocation3 + $0x18] sm:$0xff]
        %v2116 = vld [vmem:[#allocation3 + $0x20] sm:$0xff]
        %v2117 = vld [vmem:[#allocation3 + $0x28] sm:$0xff]
        %v2118 = vld [vmem:[#allocation3 + $0x30] sm:$0xff]
        %v2119 = vld [vmem:[#allocation3 + $0x38] sm:$0xff]
        %v2120 = vld [vmem:[#allocation3 + $0x40] sm:$0xff]
        %v2121 = vld [vmem:[#allocation3 + $0x48] sm:$0xff]
        %v2122 = vld [vmem:[#allocation3 + $0x50] sm:$0xff]
        %v2123 = vld [vmem:[#allocation3 + $0x58] sm:$0xff]
        %s2124 = scalar_lea.vmem [#allocation7], 448
        %v2125 = vld [vmem:[%s2124] sm:$0xff]
        %v2126 = vld [vmem:[%s2124 + $0x8] sm:$0xff]
        %v2127 = vld [vmem:[%s2124 + $0x10] sm:$0xff]
        %v2128 = vld [vmem:[%s2124 + $0x18] sm:$0xff]
        %v2129 = vld [vmem:[%s2124 + $0x20] sm:$0xff]
        %v2130 = vld [vmem:[%s2124 + $0x28] sm:$0xff]
        %v2131 = vld [vmem:[%s2124 + $0x30] sm:$0xff]
        %v2132 = vld [vmem:[%s2124 + $0x38] sm:$0xff]
        %v2137 = vunpack.c.l.b16 %v2108
        %v2138 = vunpack.c.l.b16 %v2109
        %v2139 = vunpack.c.l.b16 %v2110
        %v2140 = vunpack.c.l.b16 %v2111
        %v2141 = vpack.c.b16 %v2138, %v2137
        %v2142 = vpack.c.b16 %v2140, %v2139
        %vm2143 = vsmask.f32 5376
        %v2145 = vshrl.u32 %v2141, 16
        %v2147 = vrot.slane %v2145, 2
        %v2148 = vshll.u32 %v2141, 16
        %v2150 = vrot.slane %v2148, 3
        %v2151 = vor.u32 %v2147, %v2150
        %v2153 = vshrl.u32 %v2142, 16
        %v2155 = vrot.slane %v2153, 2
        %v2156 = vshll.u32 %v2142, 16
        %v2158 = vrot.slane %v2156, 3
        %v2159 = vor.u32 %v2155, %v2158
        %v2160 = vsel %vm2143, %v2151, %v2159
        %v2169 = vunpack.c.l.b16 %v2125
        %v2170 = vunpack.c.h.b16 %v2125
        %v2171 = vunpack.c.l.b16 %v2126
        %v2172 = vunpack.c.h.b16 %v2126
        %v2173 = vunpack.c.l.b16 %v2127
        %v2174 = vunpack.c.h.b16 %v2127
        %v2175 = vunpack.c.l.b16 %v2128
        %v2176 = vunpack.c.h.b16 %v2128
        %v2177 = vunpack.c.l.b16 %v2129
        %v2178 = vunpack.c.h.b16 %v2129
        %v2179 = vunpack.c.l.b16 %v2130
        %v2180 = vunpack.c.h.b16 %v2130
        %v2181 = vunpack.c.l.b16 %v2131
        %v2182 = vunpack.c.h.b16 %v2131
        %v2183 = vunpack.c.l.b16 %v2132
        %v2184 = vunpack.c.h.b16 %v2132
        %v2185 = vpack.c.b16 %v2173, %v2169
        %v2186 = vpack.c.b16 %v2174, %v2170
        %v2187 = vpack.c.b16 %v2175, %v2171
        %v2188 = vpack.c.b16 %v2176, %v2172
        %v2189 = vpack.c.b16 %v2181, %v2177
        %v2190 = vpack.c.b16 %v2182, %v2178
        %v2191 = vpack.c.b16 %v2183, %v2179
        %v2192 = vpack.c.b16 %v2184, %v2180
        %v2202 = vsel %vm690, %v2160, 0
        %v2205 = vsel %vm690, %v2159, 0
        %2207 = vmatprep.subr.bf16.mxu0 0
        %2208 = vmatpush1.bf16.msra.mxu0 0
        %2209 = vmatprep.subr.bf16.mxu0 0
        %2210 = vmatpush1.bf16.msra.mxu0 0
        %2211 = vmatprep.subr.bf16.mxu0 0
        %2212 = vmatpush1.bf16.msra.mxu0 0
        %2213 = vmatprep.subr.bf16.mxu0 0
        %2214 = vmatpush1.bf16.msra.mxu0 0
        %2215 = vmatprep.subr.bf16.mxu0 0
        %2216 = vmatpush1.bf16.msra.mxu0 0
        %2217 = vmatprep.subr.bf16.mxu0 0
        %2218 = vmatpush1.bf16.msra.mxu0 0
        %2219 = vmatprep.subr.bf16.mxu0 %v2190
        %2220 = vmatpush1.bf16.msra.mxu0 %v2189
        %2221 = vmatprep.subr.bf16.mxu0 %v2186
        %2222 = vmatpush1.bf16.msra.mxu0 %v2185
        %2223 = vmatprep.subr.bf16.mxu0 0
        %2224 = vmatpush2.bf16.msra.mxu0 0
        %2225 = vmatprep.subr.bf16.mxu0 0
        %2226 = vmatpush2.bf16.msra.mxu0 0
        %2227 = vmatprep.subr.bf16.mxu0 0
        %2228 = vmatpush2.bf16.msra.mxu0 0
        %2229 = vmatprep.subr.bf16.mxu0 0
        %2230 = vmatpush2.bf16.msra.mxu0 0
        %2231 = vmatprep.subr.bf16.mxu0 0
        %2232 = vmatpush2.bf16.msra.mxu0 0
        %2233 = vmatprep.subr.bf16.mxu0 0
        %2234 = vmatpush2.bf16.msra.mxu0 0
        %2235 = vmatprep.subr.bf16.mxu0 0
        %2236 = vmatpush2.bf16.msra.mxu0 0
        %2237 = vmatprep.subr.bf16.mxu0 0
        %2238 = vmatpush2.bf16.msra.mxu0 0
        %2239 = vmatprep.mubr.bf16.mxu0 0
        %2240 = vmatmul.mubr.bf16.gmra.mxu0 %v2202
        %v2241 = vpop.f32.mrf.mxu0
        %v2242 = vadd.f32 0.0, %v2241
        %v2243 = vpop.f32.mrf.mxu0
        %v2244 = vadd.f32 0.0, %v2243
        %v2245 = vpop.f32.mrf.mxu0
        %v2246 = vadd.f32 0.0, %v2245
        %v2247 = vpop.f32.mrf.mxu0
        %v2248 = vadd.f32 0.0, %v2247
        %2249 = vmatprep.mubr.bf16.mxu0 0
        %2250 = vmatmul.mubr.bf16.gmra.mxu0 %v2205
        %v2251 = vpop.f32.mrf.mxu0
        %v2252 = vadd.f32 0.0, %v2251
        %v2253 = vpop.f32.mrf.mxu0
        %v2254 = vadd.f32 0.0, %v2253
        %v2255 = vpop.f32.mrf.mxu0
        %v2256 = vpop.f32.mrf.mxu0
        %2257 = vdwg.mxu0
        %2258 = vmatprep.subr.bf16.mxu0 0
        %2259 = vmatpush1.bf16.msra.mxu0 0
        %2260 = vmatprep.subr.bf16.mxu0 0
        %2261 = vmatpush1.bf16.msra.mxu0 0
        %2262 = vmatprep.subr.bf16.mxu0 0
        %2263 = vmatpush1.bf16.msra.mxu0 0
        %2264 = vmatprep.subr.bf16.mxu0 0
        %2265 = vmatpush1.bf16.msra.mxu0 0
        %2266 = vmatprep.subr.bf16.mxu0 0
        %2267 = vmatpush1.bf16.msra.mxu0 0
        %2268 = vmatprep.subr.bf16.mxu0 0
        %2269 = vmatpush1.bf16.msra.mxu0 0
        %2270 = vmatprep.subr.bf16.mxu0 %v2192
        %2271 = vmatpush1.bf16.msra.mxu0 %v2191
        %2272 = vmatprep.subr.bf16.mxu0 %v2188
        %2273 = vmatpush1.bf16.msra.mxu0 %v2187
        %2274 = vmatprep.subr.bf16.mxu0 0
        %2275 = vmatpush2.bf16.msra.mxu0 0
        %2276 = vmatprep.subr.bf16.mxu0 0
        %2277 = vmatpush2.bf16.msra.mxu0 0
        %2278 = vmatprep.subr.bf16.mxu0 0
        %2279 = vmatpush2.bf16.msra.mxu0 0
        %2280 = vmatprep.subr.bf16.mxu0 0
        %2281 = vmatpush2.bf16.msra.mxu0 0
        %2282 = vmatprep.subr.bf16.mxu0 0
        %2283 = vmatpush2.bf16.msra.mxu0 0
        %2284 = vmatprep.subr.bf16.mxu0 0
        %2285 = vmatpush2.bf16.msra.mxu0 0
        %2286 = vmatprep.subr.bf16.mxu0 0
        %2287 = vmatpush2.bf16.msra.mxu0 0
        %2288 = vmatprep.subr.bf16.mxu0 0
        %2289 = vmatpush2.bf16.msra.mxu0 0
        %2290 = vmatprep.mubr.bf16.mxu0 0
        %2291 = vmatmul.mubr.bf16.gmra.mxu0 %v2202
        %v2292 = vpop.f32.mrf.mxu0
        %v2293 = vadd.f32 0.0, %v2292
        %v2294 = vpop.f32.mrf.mxu0
        %v2295 = vadd.f32 0.0, %v2294
        %v2296 = vpop.f32.mrf.mxu0
        %v2297 = vadd.f32 0.0, %v2296
        %v2298 = vpop.f32.mrf.mxu0
        %v2299 = vadd.f32 0.0, %v2298
        %2300 = vmatprep.mubr.bf16.mxu0 0
        %2301 = vmatmul.mubr.bf16.gmra.mxu0 %v2205
        %v2302 = vpop.f32.mrf.mxu0
        %v2303 = vadd.f32 0.0, %v2302
        %v2304 = vpop.f32.mrf.mxu0
        %v2305 = vadd.f32 0.0, %v2304
        %v2306 = vpop.f32.mrf.mxu0
        %v2307 = vpop.f32.mrf.mxu0
        %2308 = vdwg.mxu0
        %v2309 = vadd.f32 %v2112, %v2242
        %v2310 = vadd.f32 %v2113, %v2244
        %v2311 = vadd.f32 %v2114, %v2293
        %v2312 = vadd.f32 %v2115, %v2295
        %v2313 = vadd.f32 %v2116, %v2246
        %v2314 = vadd.f32 %v2117, %v2248
        %v2315 = vadd.f32 %v2118, %v2297
        %v2316 = vadd.f32 %v2119, %v2299
        %v2317 = vadd.f32 %v2120, %v2252
        %v2318 = vadd.f32 %v2121, %v2254
        %v2319 = vadd.f32 %v2122, %v2303
        %v2320 = vadd.f32 %v2123, %v2305
        %2321 = vst [vmem:[#allocation3] sm:$0xff] %v2309
        %2322 = vst [vmem:[#allocation3 + $0x8] sm:$0xff] %v2310
        %2323 = vst [vmem:[#allocation3 + $0x10] sm:$0xff] %v2311
        %2324 = vst [vmem:[#allocation3 + $0x18] sm:$0xff] %v2312
        %2325 = vst [vmem:[#allocation3 + $0x20] sm:$0xff] %v2313
        %2326 = vst [vmem:[#allocation3 + $0x28] sm:$0xff] %v2314
        %2327 = vst [vmem:[#allocation3 + $0x30] sm:$0xff] %v2315
        %2328 = vst [vmem:[#allocation3 + $0x38] sm:$0xff] %v2316
        %2329 = vst [vmem:[#allocation3 + $0x40] sm:$0xff] %v2317
        %2330 = vst [vmem:[#allocation3 + $0x48] sm:$0xff] %v2318
        %2331 = vst [vmem:[#allocation3 + $0x50] sm:$0xff] %v2319
        %2332 = vst [vmem:[#allocation3 + $0x58] sm:$0xff] %v2320
        %v2333 = vld [vmem:[#allocation2 + $0x4] sm:$0x8]
        %v2334 = vld [vmem:[#allocation2 + $0x8] sm:$0xf]
        %v2335 = vld [vmem:[#allocation2 + $0xc] sm:$0xf]
        %v2336 = vld [vmem:[#allocation2 + $0x10] sm:$0x7]
        %v2337 = vld [vmem:[#allocation3] sm:$0xff]
        %v2338 = vld [vmem:[#allocation3 + $0x8] sm:$0xff]
        %v2339 = vld [vmem:[#allocation3 + $0x10] sm:$0xff]
        %v2340 = vld [vmem:[#allocation3 + $0x18] sm:$0xff]
        %v2341 = vld [vmem:[#allocation3 + $0x20] sm:$0xff]
        %v2342 = vld [vmem:[#allocation3 + $0x28] sm:$0xff]
        %v2343 = vld [vmem:[#allocation3 + $0x30] sm:$0xff]
        %v2344 = vld [vmem:[#allocation3 + $0x38] sm:$0xff]
        %v2345 = vld [vmem:[#allocation3 + $0x40] sm:$0xff]
        %v2346 = vld [vmem:[#allocation3 + $0x48] sm:$0xff]
        %v2347 = vld [vmem:[#allocation3 + $0x50] sm:$0xff]
        %v2348 = vld [vmem:[#allocation3 + $0x58] sm:$0xff]
        %s2349 = scalar_lea.vmem [#allocation7], 512
        %v2350 = vld [vmem:[%s2349] sm:$0xff]
        %v2351 = vld [vmem:[%s2349 + $0x8] sm:$0xff]
        %v2352 = vld [vmem:[%s2349 + $0x10] sm:$0xff]
        %v2353 = vld [vmem:[%s2349 + $0x18] sm:$0xff]
        %v2354 = vld [vmem:[%s2349 + $0x20] sm:$0xff]
        %v2355 = vld [vmem:[%s2349 + $0x28] sm:$0xff]
        %v2356 = vld [vmem:[%s2349 + $0x30] sm:$0xff]
        %v2357 = vld [vmem:[%s2349 + $0x38] sm:$0xff]
        %v2362 = vunpack.c.l.b16 %v2333
        %v2363 = vunpack.c.l.b16 %v2334
        %v2364 = vunpack.c.l.b16 %v2335
        %v2365 = vunpack.c.l.b16 %v2336
        %v2366 = vpack.c.b16 %v2363, %v2362
        %v2367 = vpack.c.b16 %v2365, %v2364
        %v2368 = vrot.slane %v2366, 3
        %v2369 = vrot.slane %v2367, 3
        %v2370 = vsel %vm1292, %v2368, %v2369
        %v2379 = vunpack.c.l.b16 %v2350
        %v2380 = vunpack.c.h.b16 %v2350
        %v2381 = vunpack.c.l.b16 %v2351
        %v2382 = vunpack.c.h.b16 %v2351
        %v2383 = vunpack.c.l.b16 %v2352
        %v2384 = vunpack.c.h.b16 %v2352
        %v2385 = vunpack.c.l.b16 %v2353
        %v2386 = vunpack.c.h.b16 %v2353
        %v2387 = vunpack.c.l.b16 %v2354
        %v2388 = vunpack.c.h.b16 %v2354
        %v2389 = vunpack.c.l.b16 %v2355
        %v2390 = vunpack.c.h.b16 %v2355
        %v2391 = vunpack.c.l.b16 %v2356
        %v2392 = vunpack.c.h.b16 %v2356
        %v2393 = vunpack.c.l.b16 %v2357
        %v2394 = vunpack.c.h.b16 %v2357
        %v2395 = vpack.c.b16 %v2383, %v2379
        %v2396 = vpack.c.b16 %v2384, %v2380
        %v2397 = vpack.c.b16 %v2385, %v2381
        %v2398 = vpack.c.b16 %v2386, %v2382
        %v2399 = vpack.c.b16 %v2391, %v2387
        %v2400 = vpack.c.b16 %v2392, %v2388
        %v2401 = vpack.c.b16 %v2393, %v2389
        %v2402 = vpack.c.b16 %v2394, %v2390
        %v2412 = vsel %vm690, %v2370, 0
        %v2415 = vsel %vm690, %v2369, 0
        %2417 = vmatprep.subr.bf16.mxu0 0
        %2418 = vmatpush1.bf16.msra.mxu0 0
        %2419 = vmatprep.subr.bf16.mxu0 0
        %2420 = vmatpush1.bf16.msra.mxu0 0
        %2421 = vmatprep.subr.bf16.mxu0 0
        %2422 = vmatpush1.bf16.msra.mxu0 0
        %2423 = vmatprep.subr.bf16.mxu0 0
        %2424 = vmatpush1.bf16.msra.mxu0 0
        %2425 = vmatprep.subr.bf16.mxu0 0
        %2426 = vmatpush1.bf16.msra.mxu0 0
        %2427 = vmatprep.subr.bf16.mxu0 0
        %2428 = vmatpush1.bf16.msra.mxu0 0
        %2429 = vmatprep.subr.bf16.mxu0 %v2400
        %2430 = vmatpush1.bf16.msra.mxu0 %v2399
        %2431 = vmatprep.subr.bf16.mxu0 %v2396
        %2432 = vmatpush1.bf16.msra.mxu0 %v2395
        %2433 = vmatprep.subr.bf16.mxu0 0
        %2434 = vmatpush2.bf16.msra.mxu0 0
        %2435 = vmatprep.subr.bf16.mxu0 0
        %2436 = vmatpush2.bf16.msra.mxu0 0
        %2437 = vmatprep.subr.bf16.mxu0 0
        %2438 = vmatpush2.bf16.msra.mxu0 0
        %2439 = vmatprep.subr.bf16.mxu0 0
        %2440 = vmatpush2.bf16.msra.mxu0 0
        %2441 = vmatprep.subr.bf16.mxu0 0
        %2442 = vmatpush2.bf16.msra.mxu0 0
        %2443 = vmatprep.subr.bf16.mxu0 0
        %2444 = vmatpush2.bf16.msra.mxu0 0
        %2445 = vmatprep.subr.bf16.mxu0 0
        %2446 = vmatpush2.bf16.msra.mxu0 0
        %2447 = vmatprep.subr.bf16.mxu0 0
        %2448 = vmatpush2.bf16.msra.mxu0 0
        %2449 = vmatprep.mubr.bf16.mxu0 0
        %2450 = vmatmul.mubr.bf16.gmra.mxu0 %v2412
        %v2451 = vpop.f32.mrf.mxu0
        %v2452 = vadd.f32 0.0, %v2451
        %v2453 = vpop.f32.mrf.mxu0
        %v2454 = vadd.f32 0.0, %v2453
        %v2455 = vpop.f32.mrf.mxu0
        %v2456 = vadd.f32 0.0, %v2455
        %v2457 = vpop.f32.mrf.mxu0
        %v2458 = vadd.f32 0.0, %v2457
        %2459 = vmatprep.mubr.bf16.mxu0 0
        %2460 = vmatmul.mubr.bf16.gmra.mxu0 %v2415
        %v2461 = vpop.f32.mrf.mxu0
        %v2462 = vadd.f32 0.0, %v2461
        %v2463 = vpop.f32.mrf.mxu0
        %v2464 = vadd.f32 0.0, %v2463
        %v2465 = vpop.f32.mrf.mxu0
        %v2466 = vpop.f32.mrf.mxu0
        %2467 = vdwg.mxu0
        %2468 = vmatprep.subr.bf16.mxu0 0
        %2469 = vmatpush1.bf16.msra.mxu0 0
        %2470 = vmatprep.subr.bf16.mxu0 0
        %2471 = vmatpush1.bf16.msra.mxu0 0
        %2472 = vmatprep.subr.bf16.mxu0 0
        %2473 = vmatpush1.bf16.msra.mxu0 0
        %2474 = vmatprep.subr.bf16.mxu0 0
        %2475 = vmatpush1.bf16.msra.mxu0 0
        %2476 = vmatprep.subr.bf16.mxu0 0
        %2477 = vmatpush1.bf16.msra.mxu0 0
        %2478 = vmatprep.subr.bf16.mxu0 0
        %2479 = vmatpush1.bf16.msra.mxu0 0
        %2480 = vmatprep.subr.bf16.mxu0 %v2402
        %2481 = vmatpush1.bf16.msra.mxu0 %v2401
        %2482 = vmatprep.subr.bf16.mxu0 %v2398
        %2483 = vmatpush1.bf16.msra.mxu0 %v2397
        %2484 = vmatprep.subr.bf16.mxu0 0
        %2485 = vmatpush2.bf16.msra.mxu0 0
        %2486 = vmatprep.subr.bf16.mxu0 0
        %2487 = vmatpush2.bf16.msra.mxu0 0
        %2488 = vmatprep.subr.bf16.mxu0 0
        %2489 = vmatpush2.bf16.msra.mxu0 0
        %2490 = vmatprep.subr.bf16.mxu0 0
        %2491 = vmatpush2.bf16.msra.mxu0 0
        %2492 = vmatprep.subr.bf16.mxu0 0
        %2493 = vmatpush2.bf16.msra.mxu0 0
        %2494 = vmatprep.subr.bf16.mxu0 0
        %2495 = vmatpush2.bf16.msra.mxu0 0
        %2496 = vmatprep.subr.bf16.mxu0 0
        %2497 = vmatpush2.bf16.msra.mxu0 0
        %2498 = vmatprep.subr.bf16.mxu0 0
        %2499 = vmatpush2.bf16.msra.mxu0 0
        %2500 = vmatprep.mubr.bf16.mxu0 0
        %2501 = vmatmul.mubr.bf16.gmra.mxu0 %v2412
        %v2502 = vpop.f32.mrf.mxu0
        %v2503 = vadd.f32 0.0, %v2502
        %v2504 = vpop.f32.mrf.mxu0
        %v2505 = vadd.f32 0.0, %v2504
        %v2506 = vpop.f32.mrf.mxu0
        %v2507 = vadd.f32 0.0, %v2506
        %v2508 = vpop.f32.mrf.mxu0
        %v2509 = vadd.f32 0.0, %v2508
        %2510 = vmatprep.mubr.bf16.mxu0 0
        %2511 = vmatmul.mubr.bf16.gmra.mxu0 %v2415
        %v2512 = vpop.f32.mrf.mxu0
        %v2513 = vadd.f32 0.0, %v2512
        %v2514 = vpop.f32.mrf.mxu0
        %v2515 = vadd.f32 0.0, %v2514
        %v2516 = vpop.f32.mrf.mxu0
        %v2517 = vpop.f32.mrf.mxu0
        %2518 = vdwg.mxu0
        %v2519 = vadd.f32 %v2337, %v2452
        %v2520 = vadd.f32 %v2338, %v2454
        %v2521 = vadd.f32 %v2339, %v2503
        %v2522 = vadd.f32 %v2340, %v2505
        %v2523 = vadd.f32 %v2341, %v2456
        %v2524 = vadd.f32 %v2342, %v2458
        %v2525 = vadd.f32 %v2343, %v2507
        %v2526 = vadd.f32 %v2344, %v2509
        %v2527 = vadd.f32 %v2345, %v2462
        %v2528 = vadd.f32 %v2346, %v2464
        %v2529 = vadd.f32 %v2347, %v2513
        %v2530 = vadd.f32 %v2348, %v2515
        %2531 = vst [vmem:[#allocation3] sm:$0xff] %v2519
        %2532 = vst [vmem:[#allocation3 + $0x8] sm:$0xff] %v2520
        %2533 = vst [vmem:[#allocation3 + $0x10] sm:$0xff] %v2521
        %2534 = vst [vmem:[#allocation3 + $0x18] sm:$0xff] %v2522
        %2535 = vst [vmem:[#allocation3 + $0x20] sm:$0xff] %v2523
        %2536 = vst [vmem:[#allocation3 + $0x28] sm:$0xff] %v2524
        %2537 = vst [vmem:[#allocation3 + $0x30] sm:$0xff] %v2525
        %2538 = vst [vmem:[#allocation3 + $0x38] sm:$0xff] %v2526
        %2539 = vst [vmem:[#allocation3 + $0x40] sm:$0xff] %v2527
        %2540 = vst [vmem:[#allocation3 + $0x48] sm:$0xff] %v2528
        %2541 = vst [vmem:[#allocation3 + $0x50] sm:$0xff] %v2529
        %2542 = vst [vmem:[#allocation3 + $0x58] sm:$0xff] %v2530
        %v2543 = vld [vmem:[#allocation3] sm:$0xf]
        %v2544 = vld [vmem:[#allocation3 + $0x8] sm:$0xf]
        %v2545 = vld [vmem:[#allocation3 + $0x10] sm:$0xf]
        %v2546 = vld [vmem:[#allocation3 + $0x18] sm:$0xf]
        %v2547 = vld [vmem:[#allocation9] sm:$0xf]
        %v2549 = vlaneseq
        %v2550 = vshrl.u32 %v2549, 7
        %v2551 = vsub.s32 0, %v2550
        %v2552 = vrot.slane %v2547, %v2551
        %v2553 = vlaneseq
        %v2554 = vshrl.u32 %v2553, 7
        %v2555 = vsub.s32 1, %v2554
        %v2556 = vrot.slane %v2547, %v2555
        %v2557 = vlaneseq
        %v2558 = vshrl.u32 %v2557, 7
        %v2559 = vsub.s32 2, %v2558
        %v2560 = vrot.slane %v2547, %v2559
        %v2561 = vlaneseq
        %v2562 = vshrl.u32 %v2561, 7
        %v2563 = vsub.s32 3, %v2562
        %v2564 = vrot.slane %v2547, %v2563
        %v2569 = vadd.f32 %v2543, %v2552
        %v2570 = vadd.f32 %v2544, %v2556
        %v2571 = vadd.f32 %v2545, %v2560
        %v2572 = vadd.f32 %v2546, %v2564
        %v2573 = vmax.f32 %v2569, 0.0
        %v2574 = vmax.f32 %v2570, 0.0
        %v2575 = vmax.f32 %v2571, 0.0
        %v2576 = vmax.f32 %v2572, 0.0
        %v2577 = vpack.c.bf16 %v2573, %v2573
        %v2578 = vpack.c.bf16 %v2574, %v2574
        %v2579 = vpack.c.bf16 %v2575, %v2575
        %v2580 = vpack.c.bf16 %v2576, %v2576
        %v2585 = vcombine.low %v2577, %v2578
        %v2586 = vcombine.low %v2579, %v2580
        %v2588 = vunpack.c.l.s4 1983009808
        %v2589 = vunpack.c.0.s8 %v2588
        %v2590 = vlaneseq
        %v2591 = vshrl.u32 %v2590, 7
        %v2592 = vsub.s32 %v2589, %v2591
        %v2593 = vrot.slane %v2585, %v2592
        %v2595 = vunpack.c.l.s4 1983009808
        %v2596 = vunpack.c.0.s8 %v2595
        %v2597 = vlaneseq
        %v2598 = vshrl.u32 %v2597, 7
        %v2599 = vsub.s32 %v2596, %v2598
        %v2600 = vrot.slane %v2586, %v2599
        %v2601 = vcombine.low %v2593, %v2600
        %2603 = vst [vmem:[%s229] sm:$0xff] %v2601
        %v2604 = vld [vmem:[#allocation3] sm:$0xc0]
        %v2605 = vld [vmem:[#allocation3 + $0x8] sm:$0xc0]
        %v2606 = vld [vmem:[#allocation3 + $0x10] sm:$0xc0]
        %v2607 = vld [vmem:[#allocation3 + $0x18] sm:$0xc0]
        %v2608 = vld [vmem:[#allocation3 + $0x20] sm:$0x3]
        %v2609 = vld [vmem:[#allocation3 + $0x28] sm:$0x3]
        %v2610 = vld [vmem:[#allocation3 + $0x30] sm:$0x3]
        %v2611 = vld [vmem:[#allocation3 + $0x38] sm:$0x3]
        %v2612 = vld [vmem:[#allocation9] sm:$0xf]
        %v2614 = vlaneseq
        %v2615 = vshrl.u32 %v2614, 7
        %v2616 = vsub.s32 0, %v2615
        %v2617 = vrot.slane %v2612, %v2616
        %v2618 = vlaneseq
        %v2619 = vshrl.u32 %v2618, 7
        %v2620 = vsub.s32 1, %v2619
        %v2621 = vrot.slane %v2612, %v2620
        %v2622 = vlaneseq
        %v2623 = vshrl.u32 %v2622, 7
        %v2624 = vsub.s32 2, %v2623
        %v2625 = vrot.slane %v2612, %v2624
        %v2626 = vlaneseq
        %v2627 = vshrl.u32 %v2626, 7
        %v2628 = vsub.s32 3, %v2627
        %v2629 = vrot.slane %v2612, %v2628
        %v2634 = vadd.f32 %v2604, %v2617
        %v2635 = vadd.f32 %v2605, %v2621
        %v2636 = vadd.f32 %v2606, %v2625
        %v2637 = vadd.f32 %v2607, %v2629
        %v2638 = vadd.f32 %v2608, %v2617
        %v2639 = vadd.f32 %v2609, %v2621
        %v2640 = vadd.f32 %v2610, %v2625
        %v2641 = vadd.f32 %v2611, %v2629
        %v2642 = vmax.f32 %v2634, 0.0
        %v2643 = vmax.f32 %v2635, 0.0
        %v2644 = vmax.f32 %v2636, 0.0
        %v2645 = vmax.f32 %v2637, 0.0
        %v2646 = vmax.f32 %v2638, 0.0
        %v2647 = vmax.f32 %v2639, 0.0
        %v2648 = vmax.f32 %v2640, 0.0
        %v2649 = vmax.f32 %v2641, 0.0
        %v2650 = vpack.c.bf16 %v2646, %v2642
        %v2651 = vpack.c.bf16 %v2647, %v2643
        %v2652 = vpack.c.bf16 %v2648, %v2644
        %v2653 = vpack.c.bf16 %v2649, %v2645
        %v2658 = vcombine.low %v2650, %v2651
        %v2659 = vcombine.high %v2650, %v2651
        %v2660 = vcombine.low %v2652, %v2653
        %v2661 = vcombine.high %v2652, %v2653
        %v2663 = vunpack.c.l.s4 1983009808
        %v2664 = vunpack.c.0.s8 %v2663
        %v2665 = vlaneseq
        %v2666 = vshrl.u32 %v2665, 7
        %v2667 = vsub.s32 %v2664, %v2666
        %v2668 = vrot.slane %v2658, %v2667
        %v2670 = vunpack.c.l.s4 1983009808
        %v2671 = vunpack.c.0.s8 %v2670
        %v2672 = vlaneseq
        %v2673 = vshrl.u32 %v2672, 7
        %v2674 = vsub.s32 %v2671, %v2673
        %v2675 = vrot.slane %v2659, %v2674
        %v2677 = vunpack.c.l.s4 1983009808
        %v2678 = vunpack.c.0.s8 %v2677
        %v2679 = vlaneseq
        %v2680 = vshrl.u32 %v2679, 7
        %v2681 = vsub.s32 %v2678, %v2680
        %v2682 = vrot.slane %v2660, %v2681
        %v2684 = vunpack.c.l.s4 1983009808
        %v2685 = vunpack.c.0.s8 %v2684
        %v2686 = vlaneseq
        %v2687 = vshrl.u32 %v2686, 7
        %v2688 = vsub.s32 %v2685, %v2687
        %v2689 = vrot.slane %v2661, %v2688
        %v2690 = vcombine.high %v2668, %v2682
        %v2691 = vcombine.low %v2675, %v2689
        %vm2692 = vcmask 1040384
        %vm2693 = vcmask 1042434
        %vm2694 = vmor %vm2692, %vm2693
        %vm2695 = vcmask 1044484
        %vm2696 = vmor %vm2694, %vm2695
        %vm2697 = vcmask 1046534
        %vm2698 = vmor %vm2696, %vm2697
        %v2699 = vrot.slane %v2690, 7
        %v2700 = vrot.slane %v2699, 2
        %v2701 = vrot.slane %v2691, 7
        %v2702 = vsel %vm2698, %v2700, %v2701
        %s2704 = scalar_lea.vmem %s229, 8 [#allocation10]
        %2705 = vst [vmem:[%s2704] sm:$0xff] %v2702
        %v2706 = vld [vmem:[#allocation3 + $0x20] sm:$0xf0]
        %v2707 = vld [vmem:[#allocation3 + $0x28] sm:$0xf0]
        %v2708 = vld [vmem:[#allocation3 + $0x30] sm:$0xf0]
        %v2709 = vld [vmem:[#allocation3 + $0x38] sm:$0xf0]
        %v2710 = vld [vmem:[#allocation9] sm:$0xf]
        %v2712 = vlaneseq
        %v2713 = vshrl.u32 %v2712, 7
        %v2714 = vsub.s32 0, %v2713
        %v2715 = vrot.slane %v2710, %v2714
        %v2716 = vlaneseq
        %v2717 = vshrl.u32 %v2716, 7
        %v2718 = vsub.s32 1, %v2717
        %v2719 = vrot.slane %v2710, %v2718
        %v2720 = vlaneseq
        %v2721 = vshrl.u32 %v2720, 7
        %v2722 = vsub.s32 2, %v2721
        %v2723 = vrot.slane %v2710, %v2722
        %v2724 = vlaneseq
        %v2725 = vshrl.u32 %v2724, 7
        %v2726 = vsub.s32 3, %v2725
        %v2727 = vrot.slane %v2710, %v2726
        %v2732 = vadd.f32 %v2706, %v2715
        %v2733 = vadd.f32 %v2707, %v2719
        %v2734 = vadd.f32 %v2708, %v2723
        %v2735 = vadd.f32 %v2709, %v2727
        %v2736 = vmax.f32 %v2732, 0.0
        %v2737 = vmax.f32 %v2733, 0.0
        %v2738 = vmax.f32 %v2734, 0.0
        %v2739 = vmax.f32 %v2735, 0.0
        %v2740 = vpack.c.bf16 %v2736, %v2736
        %v2741 = vpack.c.bf16 %v2737, %v2737
        %v2742 = vpack.c.bf16 %v2738, %v2738
        %v2743 = vpack.c.bf16 %v2739, %v2739
        %v2748 = vcombine.low %v2740, %v2741
        %v2749 = vcombine.low %v2742, %v2743
        %v2751 = vunpack.c.l.s4 1983009808
        %v2752 = vunpack.c.0.s8 %v2751
        %v2753 = vlaneseq
        %v2754 = vshrl.u32 %v2753, 7
        %v2755 = vsub.s32 %v2752, %v2754
        %v2756 = vrot.slane %v2748, %v2755
        %v2758 = vunpack.c.l.s4 1983009808
        %v2759 = vunpack.c.0.s8 %v2758
        %v2760 = vlaneseq
        %v2761 = vshrl.u32 %v2760, 7
        %v2762 = vsub.s32 %v2759, %v2761
        %v2763 = vrot.slane %v2749, %v2762
        %v2764 = vcombine.high %v2756, %v2763
        %s2766 = scalar_lea.vmem %s229, 16 [#allocation10]
        %2767 = vst [vmem:[%s2766] sm:$0xff] %v2764
        %v2768 = vld [vmem:[#allocation3 + $0x40] sm:$0x3c]
        %v2769 = vld [vmem:[#allocation3 + $0x48] sm:$0x3c]
        %v2770 = vld [vmem:[#allocation3 + $0x50] sm:$0x3c]
        %v2771 = vld [vmem:[#allocation3 + $0x58] sm:$0x3c]
        %v2772 = vld [vmem:[#allocation9] sm:$0xf]
        %v2774 = vlaneseq
        %v2775 = vshrl.u32 %v2774, 7
        %v2776 = vsub.s32 0, %v2775
        %v2777 = vrot.slane %v2772, %v2776
        %v2778 = vlaneseq
        %v2779 = vshrl.u32 %v2778, 7
        %v2780 = vsub.s32 1, %v2779
        %v2781 = vrot.slane %v2772, %v2780
        %v2782 = vlaneseq
        %v2783 = vshrl.u32 %v2782, 7
        %v2784 = vsub.s32 2, %v2783
        %v2785 = vrot.slane %v2772, %v2784
        %v2786 = vlaneseq
        %v2787 = vshrl.u32 %v2786, 7
        %v2788 = vsub.s32 3, %v2787
        %v2789 = vrot.slane %v2772, %v2788
        %v2794 = vadd.f32 %v2768, %v2777
        %v2795 = vadd.f32 %v2769, %v2781
        %v2796 = vadd.f32 %v2770, %v2785
        %v2797 = vadd.f32 %v2771, %v2789
        %v2798 = vmax.f32 %v2794, 0.0
        %v2799 = vmax.f32 %v2795, 0.0
        %v2800 = vmax.f32 %v2796, 0.0
        %v2801 = vmax.f32 %v2797, 0.0
        %v2802 = vpack.c.bf16 %v2798, %v2798
        %v2803 = vpack.c.bf16 %v2799, %v2799
        %v2804 = vpack.c.bf16 %v2800, %v2800
        %v2805 = vpack.c.bf16 %v2801, %v2801
        %v2810 = vcombine.low %v2802, %v2803
        %v2811 = vcombine.low %v2804, %v2805
        %v2813 = vunpack.c.l.s4 1983009808
        %v2814 = vunpack.c.0.s8 %v2813
        %v2815 = vlaneseq
        %v2816 = vshrl.u32 %v2815, 7
        %v2817 = vsub.s32 %v2814, %v2816
        %v2818 = vrot.slane %v2810, %v2817
        %v2820 = vunpack.c.l.s4 1983009808
        %v2821 = vunpack.c.0.s8 %v2820
        %v2822 = vlaneseq
        %v2823 = vshrl.u32 %v2822, 7
        %v2824 = vsub.s32 %v2821, %v2823
        %v2825 = vrot.slane %v2811, %v2824
        %v2826 = vcombine.low %v2818, %v2825
        %v2827 = vcombine.high %v2818, %v2825
        %v2828 = vrot.slane %v2826, 7
        %v2829 = vrot.slane %v2828, 2
        %v2830 = vrot.slane %v2827, 7
        %v2831 = vsel %vm2698, %v2829, %v2830
        %s2833 = scalar_lea.vmem %s229, 24 [#allocation10]
        %2834 = vst [vmem:[%s2833] sm:$0xff] %v2831
        %s2835 = sand.u32 %s111, 1
        %s2836 = scalar_lea.sflag [#allocation6], %s2835
        %s2837 = sand.u32 %s111, 1
        %s2838 = smul.addr %s2837, 32
        %s2839 = scalar_lea.vmem [#allocation10], %s2838
        // Predicated region
        $region45: #{tpu_custom_call.1} parent=31 // pred_check
          %p2840 = pneg %p121
        $region46: #{tpu_custom_call.1} parent=31 // pred_check_branch
          %2842 = sbr.rel (%p2840) target = $region48
        $region47: #{tpu_custom_call.1} parent=31 // pred_region
          %s2843 = smul.u32 4, %s26
          %s2845 = ssub.s32 512, 512
          %2846 = vsyncadd %s2836, %s2845
          %s2847 = smul.addr %s2843, 4
          %s2848 = smul.addr %s25, 16
          %s2849 = sadd.s32 %s2847, %s2848
          %s2850 = smul.addr %s2849, 32
          %s2851 = scalar_lea.hbm %s3, %s2850
          %s2852 = sshll.u32 %s2839, 4
          %s2853 = int_to_ptr.vmem [resolvable:$true] %s2852
          %2858 = dma.vmem_to_hbm [thread:$0]  %s2853, 512, %s2851, %s2836, 128, 128, 8
        $region48: #{tpu_custom_call.1} parent=31 // pred_fallthru
          _
      $region32: #{tpu_custom_call.1} parent=5 // pred_fallthru
        _
      %p2859 = scmp.le.s32.totalorder 2, %s16
      // Predicated region
      $region49: #{tpu_custom_call.1} parent=5 // pred_check
        %p2860 = pneg %p2859
      $region50: #{tpu_custom_call.1} parent=5 // pred_check_branch
        %2862 = sbr.rel (%p2860) target = $region52
      $region51: #{tpu_custom_call.1} parent=5 // pred_region
        %s2863 = ssub.s32 %s16, 2
        // Predicated region
        $region53: #{tpu_custom_call.1} parent=51 // pred_check
          %p2864 = pneg %p127
        $region54: #{tpu_custom_call.1} parent=51 // pred_check_branch
          %2866 = sbr.rel (%p2864) target = $region56
        $region55: #{tpu_custom_call.1} parent=51 // pred_region
          %s2867 = sand.u32 %s112, 1
          %s2868 = scalar_lea.sflag [#allocation6], %s2867
          %s2869 = sand.u32 %s112, 1
          %s2870 = smul.addr %s2869, 32
          %s2871 = scalar_lea.vmem [#allocation10], %s2870
          %2872 = dma.done %s2868, 512
        $region56: #{tpu_custom_call.1} parent=51 // pred_fallthru
          _
      $region52: #{tpu_custom_call.1} parent=5 // pred_fallthru
        _
    $region6: #{tpu_custom_call.1} parent=1 // loop_footer
      %s20 = sadd.s32 1, %s16
    $region7: #{tpu_custom_call.1} parent=1 // loop_footer_branch
      %15 = sbr.rel target = $region3
    $region8: #{tpu_custom_call.1} parent=1 // loop_exit
      _
    %2873 = vsyncpa [#allocation5], 1
    %s2874 = scalar_lea.sflag [#allocation5], 1
    %2875 = vsyncpa %s2874, 1
    %2876 = vsyncpa [#allocation8], 1
    %2877 = vsyncpa [#allocation6], 1
    %s2878 = scalar_lea.sflag [#allocation6], 1
    %2879 = vsyncpa %s2878, 1

</llo_original>
